<compile_context>
chip_gen: v7x
topology: tpu7x:2x2x1
jax: 0.10.0
libtpu: 0.0.40
codegen_flags: <defaults>
</compile_context>

<pallas_src>
import functools

import numpy as np
import jax
import jax.numpy as jnp
from jax import lax
from jax.experimental import pallas as pl
from jax.experimental.pallas import tpu as pltpu

_SLOPE = 0.01  # nn.LeakyReLU(inplace=True) default negative_slope, as in the reference.


# ----------------------------------------------------------------------------
# Fused kernel: whole NetD forward for one sample per grid step.
# ----------------------------------------------------------------------------
def _netd_kernel(x1_ref, x2_ref, b1_ref, b2_ref, b3_ref, b4_ref,
                 wlin_ref, blin_ref, we_ref, whbd_ref, wfin_ref,
                 o_ref, lhs2_ref, lhs3_ref, lhs4_ref,
                 *, slope, H, W, C0, ndf):
    del C0  # layer-1 input layout is fully described by x1_ref's shape
    sl = jnp.float32(slope)

    def lrelu(v):
        return jnp.where(v >= 0, v, sl * v)

    C1, C2, C3, C8 = ndf, 2 * ndf, 4 * ndf, 8 * ndf
    H1, W1 = H // 2, W // 2
    H2, W2 = H // 4, W // 4
    H3, W3 = H // 8, W // 8
    H4, W4 = H // 16, W // 16

    # Zero the row-pair lhs scratches (only two half-rows per buffer actually need it,
    # but a full zero is tiny and megacore-safe since it runs every grid step).
    lhs2_ref[...] = jnp.zeros_like(lhs2_ref)
    lhs3_ref[...] = jnp.zeros_like(lhs3_ref)
    lhs4_ref[...] = jnp.zeros_like(lhs4_ref)

    def down(top, bot, b_ref):
        # Conv2d(4x4, stride 2, pad 1, bias=False) + LeakyReLU as two whole-image
        # matmuls against the banded weights; bf16 operands, f32 accumulation.
        acc = jnp.dot(top, b_ref[0], preferred_element_type=jnp.float32)
        acc = acc + jnp.dot(bot, b_ref[1], preferred_element_type=jnp.float32)
        return lrelu(acc)

    def scatter(y_f32, dst_ref, woc):
        # Output row i (lane-dense, length woc) becomes image row i of the next layer.
        # Row-pair lhs layout: super-row s = [img[2s-1] , img[2s]] (zeros outside).
        # -> odd rows go to half 0 of super-row (i+1)//2, even rows to half 1 of i//2.
        y = y_f32.astype(jnp.bfloat16)
        for i in range(y.shape[0]):          # static unroll (<= 32 rows)
            if i % 2 == 0:
                s, off = i // 2, woc
            else:
                s, off = (i + 1) // 2, 0
            dst_ref[s:s + 1, off:off + woc] = y[i:i + 1, :]

    # ---- 4x (Conv2d 4x4 / stride 2 / pad 1, no bias) + LeakyReLU ----
    y1 = down(x1_ref[0, 0:H1, :], x1_ref[0, 1:H1 + 1, :], b1_ref)    # (H1, W1*C1)
    scatter(y1, lhs2_ref, W1 * C1)
    y2 = down(lhs2_ref[0:H2, :], lhs2_ref[1:H2 + 1, :], b2_ref)      # (H2, W2*C2)
    scatter(y2, lhs3_ref, W2 * C2)
    y3 = down(lhs3_ref[0:H3, :], lhs3_ref[1:H3 + 1, :], b3_ref)      # (H3, W3*C3)
    scatter(y3, lhs4_ref, W3 * C3)
    y4 = down(lhs4_ref[0:H4, :], lhs4_ref[1:H4 + 1, :], b4_ref)      # (H4, W4*C8) f32

    # ---- embed Linear + LeakyReLU (once per sample, not once per pixel) ----
    e = jnp.dot(x2_ref[0].astype(jnp.bfloat16), wlin_ref[...],
                preferred_element_type=jnp.float32) + blin_ref[...]          # (1, 4ndf)
    e = lrelu(e).astype(jnp.bfloat16)
    bias_e = jnp.dot(e, we_ref[...], preferred_element_type=jnp.float32)     # (1, 8ndf)
    bias_t = jnp.concatenate([bias_e] * W4, axis=-1)                         # (1, W4*C8)

    # ---- combined 1x1 conv (tile + concat folded into a K-split) + LeakyReLU ----
    yc = jnp.dot(y4.astype(jnp.bfloat16), whbd_ref[...],
                 preferred_element_type=jnp.float32) + bias_t
    yc = lrelu(yc)                                                           # (H4, W4*C8)

    # ---- final Conv2d 4x4 / stride 4 / pad 0, Cout=1, no bias, no activation ----
    wfin = wfin_ref[...]                                                     # (4, 4*C8)
    for gy in range(H4 // 4):
        for gx in range(W4 // 4):
            blk = yc[4 * gy:4 * gy + 4, gx * 4 * C8:(gx + 1) * 4 * C8]
            o_ref[0, gy:gy + 1, gx:gx + 1] = jnp.sum(blk * wfin, keepdims=True)


# ----------------------------------------------------------------------------
# Forward pass (same semantics as NetD.forward)
# ----------------------------------------------------------------------------
@jax.jit
def netd_forward(x1, x2, params):
    """x1: (N, heatmap_channels, H, W) f32 NCHW; x2: (N, embed_dim) f32.
    Returns (N, 1, H//64, W//64) f32."""
    N, C0, H, W = x1.shape
    E = x2.shape[1]
    assert H % 64 == 0 and W % 64 == 0, "H, W must be multiples of 64"
    ndf = params["w_e"].shape[1] // 8
    H64, W64 = H // 64, W // 64

    # Layer-1 row-pair lhs: NHWC, one-row zero pad top/bottom, rows paired (free
    # reshape) -> (N, H//2 + 1, 2*W*C0).  Single layout transpose at the boundary.
    xh = jnp.transpose(x1, (0, 2, 3, 1)).astype(jnp.bfloat16)
    xh = jnp.pad(xh, ((0, 0), (1, 1), (0, 0), (0, 0)))
    lhs1 = xh.reshape(N, H // 2 + 1, 2 * W * C0)
    x2r = x2.reshape(N, 1, E)

    kernel = functools.partial(_netd_kernel, slope=_SLOPE, H=H, W=W, C0=C0, ndf=ndf)
    out = pl.pallas_call(
        kernel,
        out_shape=jax.ShapeDtypeStruct((N, H64, W64), jnp.float32),
        grid=(N,),
        in_specs=[
            pl.BlockSpec((1, H // 2 + 1, 2 * W * C0), lambda n: (n, 0, 0)),
            pl.BlockSpec((1, 1, E), lambda n: (n, 0, 0)),
            pl.BlockSpec(params["b1"].shape, lambda n: (0, 0, 0)),
            pl.BlockSpec(params["b2"].shape, lambda n: (0, 0, 0)),
            pl.BlockSpec(params["b3"].shape, lambda n: (0, 0, 0)),
            pl.BlockSpec(params["b4"].shape, lambda n: (0, 0, 0)),
            pl.BlockSpec(params["w_lin"].shape, lambda n: (0, 0)),
            pl.BlockSpec(params["b_lin"].shape, lambda n: (0, 0)),
            pl.BlockSpec(params["w_e"].shape, lambda n: (0, 0)),
            pl.BlockSpec(params["w_hbd"].shape, lambda n: (0, 0)),
            pl.BlockSpec(params["w_fin"].shape, lambda n: (0, 0)),
        ],
        out_specs=pl.BlockSpec((1, H64, W64), lambda n: (n, 0, 0)),
        scratch_shapes=[
            pltpu.VMEM((H // 4 + 1, 2 * (W // 2) * ndf), jnp.bfloat16),
            pltpu.VMEM((H // 8 + 1, 2 * (W // 4) * 2 * ndf), jnp.bfloat16),
            pltpu.VMEM((H // 16 + 1, 2 * (W // 8) * 4 * ndf), jnp.bfloat16),
        ],
        compiler_params=pltpu.CompilerParams(dimension_semantics=("parallel",)),
    )(lhs1, x2r, params["b1"], params["b2"], params["b3"], params["b4"],
      params["w_lin"], params["b_lin"], params["w_e"], params["w_hbd"], params["w_fin"])
    return out[:, None, :, :]


# ----------------------------------------------------------------------------
# Parameter init (PyTorch layouts) + one-time packing into kernel-ready layouts
# ----------------------------------------------------------------------------
def init_netd_params_raw(key, heatmap_channels, embed_dim, ndf, scale=0.1):
    ks = jax.random.split(key, 8)
    c4, c8, c12 = 4 * ndf, 8 * ndf, 12 * ndf

    def rnd(k, shape):
        return scale * jax.random.normal(k, shape, jnp.float32)

    return {
        "w1": rnd(ks[0], (ndf, heatmap_channels, 4, 4)),
        "w2": rnd(ks[1], (2 * ndf, ndf, 4, 4)),
        "w3": rnd(ks[2], (c4, 2 * ndf, 4, 4)),
        "w4": rnd(ks[3], (c8, c4, 4, 4)),
        "w_lin": rnd(ks[4], (c4, embed_dim)),      # torch Linear weight (out, in)
        "b_lin": rnd(ks[5], (c4,)),
        "w_comb": rnd(ks[6], (c8, c12, 1, 1)),     # combined_conv (bias=False)
        "w_down": rnd(ks[7], (1, c8, 4, 4)),       # combined_down (bias=False)
    }


def _pack_banded_conv(w, win):
    """PyTorch Conv2d weight (Co, Ci, 4, 4), stride 2, pad 1, for input width `win`.

    Returns B of shape (2, 2*win*Ci, (win//2)*Co) bf16 such that
        out[oy] = S[oy] @ B[0] + S[oy+1] @ B[1]
    where S[s, u*win*Ci + j*Ci + c] = img[2s-1+u, j, c] (zero outside the image)."""
    w = np.asarray(w, np.float32)
    co, ci = w.shape[0], w.shape[1]
    wo = win // 2
    B = np.zeros((2, 2 * win * ci, wo * co), np.float32)
    for half in range(2):            # row-tap pair: di in {2*half, 2*half + 1}
        for u in range(2):
            wt = np.transpose(w[:, :, 2 * half + u, :], (1, 0, 2))  # (Ci, Co, 4)
            for ox in range(wo):
                for dj in range(4):
                    j = 2 * ox + dj - 1        # input (unpadded) column
                    if 0 <= j < win:
                        r0 = u * win * ci + j * ci
                        B[half, r0:r0 + ci, ox * co:(ox + 1) * co] = wt[:, :, dj]
    return jnp.asarray(B, jnp.bfloat16)


def pack_netd_params(raw, H, W):
    """Pack raw (PyTorch-layout) f32 weights into kernel-ready layouts, once, for a
    fixed input size H x W (the banded conv weights are size-specialized)."""
    ndf = raw["w1"].shape[0]
    c4, c8 = 4 * ndf, 8 * ndf
    w16 = W // 16
    wc = np.asarray(raw["w_comb"], np.float32)[:, :, 0, 0]        # (C8, C12)
    w_h = wc[:, :c8].T                                            # heatmap half (C8, C8)
    w_e = wc[:, c8:].T                                            # embed half   (C4, C8)
    wd = np.asarray(raw["w_down"], np.float32)[0]                 # (C8, 4, 4)
    w_fin = np.transpose(wd, (1, 2, 0)).reshape(4, 4 * c8)        # [di, dj*C8 + c]
    return {
        "b1": _pack_banded_conv(raw["w1"], W),
        "b2": _pack_banded_conv(raw["w2"], W // 2),
        "b3": _pack_banded_conv(raw["w3"], W // 4),
        "b4": _pack_banded_conv(raw["w4"], W // 8),
        "w_lin": jnp.asarray(np.asarray(raw["w_lin"], np.float32).T, jnp.bfloat16),
        "b_lin": jnp.asarray(np.asarray(raw["b_lin"], np.float32).reshape(1, c4),
                             jnp.float32),
        "w_e": jnp.asarray(w_e, jnp.bfloat16),
        "w_hbd": jnp.asarray(np.kron(np.eye(w16, dtype=np.float32), w_h), jnp.bfloat16),
        "w_fin": jnp.asarray(w_fin, jnp.float32),
    }


# ----------------------------------------------------------------------------
# Pure-JAX f32 reference of the PyTorch module (for validation only)
# ----------------------------------------------------------------------------
def netd_reference(x1, x2, raw, slope=_SLOPE):
    def lrelu(v):
        return jnp.where(v >= 0, v, slope * v)

    def conv(x, w, stride, pad):
        return lax.conv_general_dilated(
            x, w, (stride, stride), [(pad, pad), (pad, pad)],
            dimension_numbers=("NCHW", "OIHW", "NCHW"))

    h = lrelu(conv(x1, raw["w1"], 2, 1))
    h = lrelu(conv(h, raw["w2"], 2, 1))
    h = lrelu(conv(h, raw["w3"], 2, 1))
    h = lrelu(conv(h, raw["w4"], 2, 1))
    e = lrelu(x2 @ raw["w_lin"].T + raw["b_lin"])                     # (N, 4ndf)
    e_map = jnp.broadcast_to(e[:, :, None, None],
                             (h.shape[0], e.shape[1], h.shape[2], h.shape[3]))
    comb = jnp.concatenate([h, e_map], axis=1)
    y = lrelu(conv(comb, raw["w_comb"], 1, 0))
    return conv(y, raw["w_down"], 4, 0)


# ----------------------------------------------------------------------------
if __name__ == "__main__":
    heatmap_channels = 4
    embed_dim = 8
    ndf = 8
    N, H, W = 2, 64, 64   # H, W must be multiples of 64 (4 stride-2 halvings + /4)

    key = jax.random.PRNGKey(0)
    k_x1, k_x2, k_p = jax.random.split(key, 3)
    x1 = jax.random.normal(k_x1, (N, heatmap_channels, H, W), jnp.float32)
    x2 = jax.random.normal(k_x2, (N, embed_dim), jnp.float32)

    raw = init_netd_params_raw(k_p, heatmap_channels, embed_dim, ndf)
    params = pack_netd_params(raw, H, W)

    y = netd_forward(x1, x2, params)
    y = jax.block_until_ready(y)
    assert y.shape == (N, 1, H // 64, W // 64), y.shape

    # Validate against the pure-JAX f32 reference (loose tolerance: bf16 MXU path).
    y_ref = jax.block_until_ready(netd_reference(x1, x2, raw))
    np.testing.assert_allclose(np.asarray(y), np.asarray(y_ref), rtol=0.1, atol=0.05)

    print("KERNEL_OK")
</pallas_src>

<mosaic_0001>
module attributes {stable_mosaic.version = 11 : i64} {
  func.func @_netd_kernel(%arg0: i32, %arg1: memref<1x33x512xbf16, #tpu.memory_space<vmem>>, %arg2: memref<1x1x8xf32, #tpu.memory_space<vmem>>, %arg3: memref<2x512x256xbf16, #tpu.memory_space<vmem>>, %arg4: memref<2x512x256xbf16, #tpu.memory_space<vmem>>, %arg5: memref<2x512x256xbf16, #tpu.memory_space<vmem>>, %arg6: memref<2x512x256xbf16, #tpu.memory_space<vmem>>, %arg7: memref<8x32xbf16, #tpu.memory_space<vmem>>, %arg8: memref<1x32xf32, #tpu.memory_space<vmem>>, %arg9: memref<32x64xbf16, #tpu.memory_space<vmem>>, %arg10: memref<256x256xbf16, #tpu.memory_space<vmem>>, %arg11: memref<4x256xf32, #tpu.memory_space<vmem>>, %arg12: memref<1x1x1xf32, #tpu.memory_space<vmem>>, %arg13: memref<17x512xbf16, #tpu.memory_space<vmem>>, %arg14: memref<9x512xbf16, #tpu.memory_space<vmem>>, %arg15: memref<5x512xbf16, #tpu.memory_space<vmem>>) attributes {dimension_semantics = [#tpu.dimension_semantics<parallel>], iteration_bounds = array<i64: 2>, scalar_prefetch = 0 : i64, scratch_operands = 3 : i64, tpu.core_type = #tpu.core_type<tc>, window_params = [{transform_indices = @transform_0, window_bounds = array<i64: 1, 33, 512>}, {transform_indices = @transform_1, window_bounds = array<i64: 1, 1, 8>}, {pipeline_mode = #tpu.pipeline_mode<synchronous>, transform_indices = @transform_2, window_bounds = array<i64: 2, 512, 256>}, {pipeline_mode = #tpu.pipeline_mode<synchronous>, transform_indices = @transform_3, window_bounds = array<i64: 2, 512, 256>}, {pipeline_mode = #tpu.pipeline_mode<synchronous>, transform_indices = @transform_4, window_bounds = array<i64: 2, 512, 256>}, {pipeline_mode = #tpu.pipeline_mode<synchronous>, transform_indices = @transform_5, window_bounds = array<i64: 2, 512, 256>}, {pipeline_mode = #tpu.pipeline_mode<synchronous>, transform_indices = @transform_6, window_bounds = array<i64: 8, 32>}, {pipeline_mode = #tpu.pipeline_mode<synchronous>, transform_indices = @transform_7, window_bounds = array<i64: 1, 32>}, {pipeline_mode = #tpu.pipeline_mode<synchronous>, transform_indices = @transform_8, window_bounds = array<i64: 32, 64>}, {pipeline_mode = #tpu.pipeline_mode<synchronous>, transform_indices = @transform_9, window_bounds = array<i64: 256, 256>}, {pipeline_mode = #tpu.pipeline_mode<synchronous>, transform_indices = @transform_10, window_bounds = array<i64: 4, 256>}, {transform_indices = @transform_11, window_bounds = array<i64: 1, 1, 1>}]} {
    %cst = arith.constant 0.000000e+00 : bf16
    %0 = vector.broadcast %cst : bf16 to vector<17x512xbf16>
    %c0 = arith.constant 0 : index
    %c0_0 = arith.constant 0 : index
    %1 = vector.load %arg13[%c0, %c0_0] : memref<17x512xbf16, #tpu.memory_space<vmem>>, vector<17x512xbf16>
    tpu.vector_store %arg13[%c0, %c0_0], %0 {strides = array<i32>} : memref<17x512xbf16, #tpu.memory_space<vmem>>, vector<17x512xbf16>,
    %cst_1 = arith.constant 0.000000e+00 : bf16
    %2 = vector.broadcast %cst_1 : bf16 to vector<9x512xbf16>
    %c0_2 = arith.constant 0 : index
    %c0_3 = arith.constant 0 : index
    %3 = vector.load %arg14[%c0_2, %c0_3] : memref<9x512xbf16, #tpu.memory_space<vmem>>, vector<9x512xbf16>
    tpu.vector_store %arg14[%c0_2, %c0_3], %2 {strides = array<i32>} : memref<9x512xbf16, #tpu.memory_space<vmem>>, vector<9x512xbf16>,
    %cst_4 = arith.constant 0.000000e+00 : bf16
    %4 = vector.broadcast %cst_4 : bf16 to vector<5x512xbf16>
    %c0_5 = arith.constant 0 : index
    %c0_6 = arith.constant 0 : index
    %5 = vector.load %arg15[%c0_5, %c0_6] : memref<5x512xbf16, #tpu.memory_space<vmem>>, vector<5x512xbf16>
    tpu.vector_store %arg15[%c0_5, %c0_6], %4 {strides = array<i32>} : memref<5x512xbf16, #tpu.memory_space<vmem>>, vector<5x512xbf16>,
    %c0_7 = arith.constant 0 : index
    %c0_8 = arith.constant 0 : index
    %c0_9 = arith.constant 0 : index
    %6 = vector.load %arg1[%c0_7, %c0_8, %c0_9] : memref<1x33x512xbf16, #tpu.memory_space<vmem>>, vector<1x32x512xbf16>
    %7 = vector.shape_cast %6 : vector<1x32x512xbf16> to vector<32x512xbf16>
    %c0_10 = arith.constant 0 : index
    %c1 = arith.constant 1 : index
    %c0_11 = arith.constant 0 : index
    %8 = vector.load %arg1[%c0_10, %c1, %c0_11] : memref<1x33x512xbf16, #tpu.memory_space<vmem>>, vector<1x32x512xbf16>
    %9 = vector.shape_cast %8 : vector<1x32x512xbf16> to vector<32x512xbf16>
    %c0_12 = arith.constant 0 : index
    %c0_13 = arith.constant 0 : index
    %c0_14 = arith.constant 0 : index
    %10 = vector.load %arg3[%c0_12, %c0_13, %c0_14] : memref<2x512x256xbf16, #tpu.memory_space<vmem>>, vector<1x512x256xbf16>
    %11 = vector.shape_cast %10 : vector<1x512x256xbf16> to vector<512x256xbf16>
    %cst_15 = arith.constant dense<0.000000e+00> : vector<32x256xf32>
    %12 = tpu.matmul %7, %11, %cst_15 {dimension_numbers = #tpu.dot_dimension_numbers<[1], [0], [0], [1], [0, 0, 1, 1], [], []>} : vector<32x512xbf16>, vector<512x256xbf16>, vector<32x256xf32> -> vector<32x256xf32>
    %c1_16 = arith.constant 1 : index
    %c0_17 = arith.constant 0 : index
    %c0_18 = arith.constant 0 : index
    %13 = vector.load %arg3[%c1_16, %c0_17, %c0_18] : memref<2x512x256xbf16, #tpu.memory_space<vmem>>, vector<1x512x256xbf16>
    %14 = vector.shape_cast %13 : vector<1x512x256xbf16> to vector<512x256xbf16>
    %cst_19 = arith.constant dense<0.000000e+00> : vector<32x256xf32>
    %15 = tpu.matmul %9, %14, %cst_19 {dimension_numbers = #tpu.dot_dimension_numbers<[1], [0], [0], [1], [0, 0, 1, 1], [], []>} : vector<32x512xbf16>, vector<512x256xbf16>, vector<32x256xf32> -> vector<32x256xf32>
    %16 = arith.addf %12, %15 : vector<32x256xf32>
    %cst_20 = arith.constant 0.000000e+00 : f32
    %17 = vector.broadcast %cst_20 : f32 to vector<32x256xf32>
    %18 = arith.cmpf oge, %16, %17 : vector<32x256xf32>
    %cst_21 = arith.constant 0.00999999977 : f32
    %19 = vector.broadcast %cst_21 : f32 to vector<32x256xf32>
    %20 = arith.mulf %19, %16 : vector<32x256xf32>
    %21 = arith.select %18, %16, %20 : vector<32x256xi1>, vector<32x256xf32>
    %22 = arith.truncf %21 : vector<32x256xf32> to vector<32x256xbf16>
    %23 = vector.extract_strided_slice %22 {offsets = [0, 0], sizes = [1, 256], strides = [1, 1]} : vector<32x256xbf16> to vector<1x256xbf16>
    %c0_22 = arith.constant 0 : index
    %c256 = arith.constant 256 : index
    %24 = vector.load %arg13[%c0_22, %c256] : memref<17x512xbf16, #tpu.memory_space<vmem>>, vector<1x256xbf16>
    tpu.vector_store %arg13[%c0_22, %c256], %23 {strides = array<i32>} : memref<17x512xbf16, #tpu.memory_space<vmem>>, vector<1x256xbf16>,
    %25 = vector.extract_strided_slice %22 {offsets = [1, 0], sizes = [1, 256], strides = [1, 1]} : vector<32x256xbf16> to vector<1x256xbf16>
    %c1_23 = arith.constant 1 : index
    %c0_24 = arith.constant 0 : index
    %26 = vector.load %arg13[%c1_23, %c0_24] : memref<17x512xbf16, #tpu.memory_space<vmem>>, vector<1x256xbf16>
    tpu.vector_store %arg13[%c1_23, %c0_24], %25 {strides = array<i32>} : memref<17x512xbf16, #tpu.memory_space<vmem>>, vector<1x256xbf16>,
    %27 = vector.extract_strided_slice %22 {offsets = [2, 0], sizes = [1, 256], strides = [1, 1]} : vector<32x256xbf16> to vector<1x256xbf16>
    %c1_25 = arith.constant 1 : index
    %c256_26 = arith.constant 256 : index
    %28 = vector.load %arg13[%c1_25, %c256_26] : memref<17x512xbf16, #tpu.memory_space<vmem>>, vector<1x256xbf16>
    tpu.vector_store %arg13[%c1_25, %c256_26], %27 {strides = array<i32>} : memref<17x512xbf16, #tpu.memory_space<vmem>>, vector<1x256xbf16>,
    %29 = vector.extract_strided_slice %22 {offsets = [3, 0], sizes = [1, 256], strides = [1, 1]} : vector<32x256xbf16> to vector<1x256xbf16>
    %c2 = arith.constant 2 : index
    %c0_27 = arith.constant 0 : index
    %30 = vector.load %arg13[%c2, %c0_27] : memref<17x512xbf16, #tpu.memory_space<vmem>>, vector<1x256xbf16>
    tpu.vector_store %arg13[%c2, %c0_27], %29 {strides = array<i32>} : memref<17x512xbf16, #tpu.memory_space<vmem>>, vector<1x256xbf16>,
    %31 = vector.extract_strided_slice %22 {offsets = [4, 0], sizes = [1, 256], strides = [1, 1]} : vector<32x256xbf16> to vector<1x256xbf16>
    %c2_28 = arith.constant 2 : index
    %c256_29 = arith.constant 256 : index
    %32 = vector.load %arg13[%c2_28, %c256_29] : memref<17x512xbf16, #tpu.memory_space<vmem>>, vector<1x256xbf16>
    tpu.vector_store %arg13[%c2_28, %c256_29], %31 {strides = array<i32>} : memref<17x512xbf16, #tpu.memory_space<vmem>>, vector<1x256xbf16>,
    %33 = vector.extract_strided_slice %22 {offsets = [5, 0], sizes = [1, 256], strides = [1, 1]} : vector<32x256xbf16> to vector<1x256xbf16>
    %c3 = arith.constant 3 : index
    %c0_30 = arith.constant 0 : index
    %34 = vector.load %arg13[%c3, %c0_30] : memref<17x512xbf16, #tpu.memory_space<vmem>>, vector<1x256xbf16>
    tpu.vector_store %arg13[%c3, %c0_30], %33 {strides = array<i32>} : memref<17x512xbf16, #tpu.memory_space<vmem>>, vector<1x256xbf16>,
    %35 = vector.extract_strided_slice %22 {offsets = [6, 0], sizes = [1, 256], strides = [1, 1]} : vector<32x256xbf16> to vector<1x256xbf16>
    %c3_31 = arith.constant 3 : index
    %c256_32 = arith.constant 256 : index
    %36 = vector.load %arg13[%c3_31, %c256_32] : memref<17x512xbf16, #tpu.memory_space<vmem>>, vector<1x256xbf16>
    tpu.vector_store %arg13[%c3_31, %c256_32], %35 {strides = array<i32>} : memref<17x512xbf16, #tpu.memory_space<vmem>>, vector<1x256xbf16>,
    %37 = vector.extract_strided_slice %22 {offsets = [7, 0], sizes = [1, 256], strides = [1, 1]} : vector<32x256xbf16> to vector<1x256xbf16>
    %c4 = arith.constant 4 : index
    %c0_33 = arith.constant 0 : index
    %38 = vector.load %arg13[%c4, %c0_33] : memref<17x512xbf16, #tpu.memory_space<vmem>>, vector<1x256xbf16>
    tpu.vector_store %arg13[%c4, %c0_33], %37 {strides = array<i32>} : memref<17x512xbf16, #tpu.memory_space<vmem>>, vector<1x256xbf16>,
    %39 = vector.extract_strided_slice %22 {offsets = [8, 0], sizes = [1, 256], strides = [1, 1]} : vector<32x256xbf16> to vector<1x256xbf16>
    %c4_34 = arith.constant 4 : index
    %c256_35 = arith.constant 256 : index
    %40 = vector.load %arg13[%c4_34, %c256_35] : memref<17x512xbf16, #tpu.memory_space<vmem>>, vector<1x256xbf16>
    tpu.vector_store %arg13[%c4_34, %c256_35], %39 {strides = array<i32>} : memref<17x512xbf16, #tpu.memory_space<vmem>>, vector<1x256xbf16>,
    %41 = vector.extract_strided_slice %22 {offsets = [9, 0], sizes = [1, 256], strides = [1, 1]} : vector<32x256xbf16> to vector<1x256xbf16>
    %c5 = arith.constant 5 : index
    %c0_36 = arith.constant 0 : index
    %42 = vector.load %arg13[%c5, %c0_36] : memref<17x512xbf16, #tpu.memory_space<vmem>>, vector<1x256xbf16>
    tpu.vector_store %arg13[%c5, %c0_36], %41 {strides = array<i32>} : memref<17x512xbf16, #tpu.memory_space<vmem>>, vector<1x256xbf16>,
    %43 = vector.extract_strided_slice %22 {offsets = [10, 0], sizes = [1, 256], strides = [1, 1]} : vector<32x256xbf16> to vector<1x256xbf16>
    %c5_37 = arith.constant 5 : index
    %c256_38 = arith.constant 256 : index
    %44 = vector.load %arg13[%c5_37, %c256_38] : memref<17x512xbf16, #tpu.memory_space<vmem>>, vector<1x256xbf16>
    tpu.vector_store %arg13[%c5_37, %c256_38], %43 {strides = array<i32>} : memref<17x512xbf16, #tpu.memory_space<vmem>>, vector<1x256xbf16>,
    %45 = vector.extract_strided_slice %22 {offsets = [11, 0], sizes = [1, 256], strides = [1, 1]} : vector<32x256xbf16> to vector<1x256xbf16>
    %c6 = arith.constant 6 : index
    %c0_39 = arith.constant 0 : index
    %46 = vector.load %arg13[%c6, %c0_39] : memref<17x512xbf16, #tpu.memory_space<vmem>>, vector<1x256xbf16>
    tpu.vector_store %arg13[%c6, %c0_39], %45 {strides = array<i32>} : memref<17x512xbf16, #tpu.memory_space<vmem>>, vector<1x256xbf16>,
    %47 = vector.extract_strided_slice %22 {offsets = [12, 0], sizes = [1, 256], strides = [1, 1]} : vector<32x256xbf16> to vector<1x256xbf16>
    %c6_40 = arith.constant 6 : index
    %c256_41 = arith.constant 256 : index
    %48 = vector.load %arg13[%c6_40, %c256_41] : memref<17x512xbf16, #tpu.memory_space<vmem>>, vector<1x256xbf16>
    tpu.vector_store %arg13[%c6_40, %c256_41], %47 {strides = array<i32>} : memref<17x512xbf16, #tpu.memory_space<vmem>>, vector<1x256xbf16>,
    %49 = vector.extract_strided_slice %22 {offsets = [13, 0], sizes = [1, 256], strides = [1, 1]} : vector<32x256xbf16> to vector<1x256xbf16>
    %c7 = arith.constant 7 : index
    %c0_42 = arith.constant 0 : index
    %50 = vector.load %arg13[%c7, %c0_42] : memref<17x512xbf16, #tpu.memory_space<vmem>>, vector<1x256xbf16>
    tpu.vector_store %arg13[%c7, %c0_42], %49 {strides = array<i32>} : memref<17x512xbf16, #tpu.memory_space<vmem>>, vector<1x256xbf16>,
    %51 = vector.extract_strided_slice %22 {offsets = [14, 0], sizes = [1, 256], strides = [1, 1]} : vector<32x256xbf16> to vector<1x256xbf16>
    %c7_43 = arith.constant 7 : index
    %c256_44 = arith.constant 256 : index
    %52 = vector.load %arg13[%c7_43, %c256_44] : memref<17x512xbf16, #tpu.memory_space<vmem>>, vector<1x256xbf16>
    tpu.vector_store %arg13[%c7_43, %c256_44], %51 {strides = array<i32>} : memref<17x512xbf16, #tpu.memory_space<vmem>>, vector<1x256xbf16>,
    %53 = vector.extract_strided_slice %22 {offsets = [15, 0], sizes = [1, 256], strides = [1, 1]} : vector<32x256xbf16> to vector<1x256xbf16>
    %c8 = arith.constant 8 : index
    %c0_45 = arith.constant 0 : index
    %54 = vector.load %arg13[%c8, %c0_45] : memref<17x512xbf16, #tpu.memory_space<vmem>>, vector<1x256xbf16>
    tpu.vector_store %arg13[%c8, %c0_45], %53 {strides = array<i32>} : memref<17x512xbf16, #tpu.memory_space<vmem>>, vector<1x256xbf16>,
    %55 = vector.extract_strided_slice %22 {offsets = [16, 0], sizes = [1, 256], strides = [1, 1]} : vector<32x256xbf16> to vector<1x256xbf16>
    %c8_46 = arith.constant 8 : index
    %c256_47 = arith.constant 256 : index
    %56 = vector.load %arg13[%c8_46, %c256_47] : memref<17x512xbf16, #tpu.memory_space<vmem>>, vector<1x256xbf16>
    tpu.vector_store %arg13[%c8_46, %c256_47], %55 {strides = array<i32>} : memref<17x512xbf16, #tpu.memory_space<vmem>>, vector<1x256xbf16>,
    %57 = vector.extract_strided_slice %22 {offsets = [17, 0], sizes = [1, 256], strides = [1, 1]} : vector<32x256xbf16> to vector<1x256xbf16>
    %c9 = arith.constant 9 : index
    %c0_48 = arith.constant 0 : index
    %58 = vector.load %arg13[%c9, %c0_48] : memref<17x512xbf16, #tpu.memory_space<vmem>>, vector<1x256xbf16>
    tpu.vector_store %arg13[%c9, %c0_48], %57 {strides = array<i32>} : memref<17x512xbf16, #tpu.memory_space<vmem>>, vector<1x256xbf16>,
    %59 = vector.extract_strided_slice %22 {offsets = [18, 0], sizes = [1, 256], strides = [1, 1]} : vector<32x256xbf16> to vector<1x256xbf16>
    %c9_49 = arith.constant 9 : index
    %c256_50 = arith.constant 256 : index
    %60 = vector.load %arg13[%c9_49, %c256_50] : memref<17x512xbf16, #tpu.memory_space<vmem>>, vector<1x256xbf16>
    tpu.vector_store %arg13[%c9_49, %c256_50], %59 {strides = array<i32>} : memref<17x512xbf16, #tpu.memory_space<vmem>>, vector<1x256xbf16>,
    %61 = vector.extract_strided_slice %22 {offsets = [19, 0], sizes = [1, 256], strides = [1, 1]} : vector<32x256xbf16> to vector<1x256xbf16>
    %c10 = arith.constant 10 : index
    %c0_51 = arith.constant 0 : index
    %62 = vector.load %arg13[%c10, %c0_51] : memref<17x512xbf16, #tpu.memory_space<vmem>>, vector<1x256xbf16>
    tpu.vector_store %arg13[%c10, %c0_51], %61 {strides = array<i32>} : memref<17x512xbf16, #tpu.memory_space<vmem>>, vector<1x256xbf16>,
    %63 = vector.extract_strided_slice %22 {offsets = [20, 0], sizes = [1, 256], strides = [1, 1]} : vector<32x256xbf16> to vector<1x256xbf16>
    %c10_52 = arith.constant 10 : index
    %c256_53 = arith.constant 256 : index
    %64 = vector.load %arg13[%c10_52, %c256_53] : memref<17x512xbf16, #tpu.memory_space<vmem>>, vector<1x256xbf16>
    tpu.vector_store %arg13[%c10_52, %c256_53], %63 {strides = array<i32>} : memref<17x512xbf16, #tpu.memory_space<vmem>>, vector<1x256xbf16>,
    %65 = vector.extract_strided_slice %22 {offsets = [21, 0], sizes = [1, 256], strides = [1, 1]} : vector<32x256xbf16> to vector<1x256xbf16>
    %c11 = arith.constant 11 : index
    %c0_54 = arith.constant 0 : index
    %66 = vector.load %arg13[%c11, %c0_54] : memref<17x512xbf16, #tpu.memory_space<vmem>>, vector<1x256xbf16>
    tpu.vector_store %arg13[%c11, %c0_54], %65 {strides = array<i32>} : memref<17x512xbf16, #tpu.memory_space<vmem>>, vector<1x256xbf16>,
    %67 = vector.extract_strided_slice %22 {offsets = [22, 0], sizes = [1, 256], strides = [1, 1]} : vector<32x256xbf16> to vector<1x256xbf16>
    %c11_55 = arith.constant 11 : index
    %c256_56 = arith.constant 256 : index
    %68 = vector.load %arg13[%c11_55, %c256_56] : memref<17x512xbf16, #tpu.memory_space<vmem>>, vector<1x256xbf16>
    tpu.vector_store %arg13[%c11_55, %c256_56], %67 {strides = array<i32>} : memref<17x512xbf16, #tpu.memory_space<vmem>>, vector<1x256xbf16>,
    %69 = vector.extract_strided_slice %22 {offsets = [23, 0], sizes = [1, 256], strides = [1, 1]} : vector<32x256xbf16> to vector<1x256xbf16>
    %c12 = arith.constant 12 : index
    %c0_57 = arith.constant 0 : index
    %70 = vector.load %arg13[%c12, %c0_57] : memref<17x512xbf16, #tpu.memory_space<vmem>>, vector<1x256xbf16>
    tpu.vector_store %arg13[%c12, %c0_57], %69 {strides = array<i32>} : memref<17x512xbf16, #tpu.memory_space<vmem>>, vector<1x256xbf16>,
    %71 = vector.extract_strided_slice %22 {offsets = [24, 0], sizes = [1, 256], strides = [1, 1]} : vector<32x256xbf16> to vector<1x256xbf16>
    %c12_58 = arith.constant 12 : index
    %c256_59 = arith.constant 256 : index
    %72 = vector.load %arg13[%c12_58, %c256_59] : memref<17x512xbf16, #tpu.memory_space<vmem>>, vector<1x256xbf16>
    tpu.vector_store %arg13[%c12_58, %c256_59], %71 {strides = array<i32>} : memref<17x512xbf16, #tpu.memory_space<vmem>>, vector<1x256xbf16>,
    %73 = vector.extract_strided_slice %22 {offsets = [25, 0], sizes = [1, 256], strides = [1, 1]} : vector<32x256xbf16> to vector<1x256xbf16>
    %c13 = arith.constant 13 : index
    %c0_60 = arith.constant 0 : index
    %74 = vector.load %arg13[%c13, %c0_60] : memref<17x512xbf16, #tpu.memory_space<vmem>>, vector<1x256xbf16>
    tpu.vector_store %arg13[%c13, %c0_60], %73 {strides = array<i32>} : memref<17x512xbf16, #tpu.memory_space<vmem>>, vector<1x256xbf16>,
    %75 = vector.extract_strided_slice %22 {offsets = [26, 0], sizes = [1, 256], strides = [1, 1]} : vector<32x256xbf16> to vector<1x256xbf16>
    %c13_61 = arith.constant 13 : index
    %c256_62 = arith.constant 256 : index
    %76 = vector.load %arg13[%c13_61, %c256_62] : memref<17x512xbf16, #tpu.memory_space<vmem>>, vector<1x256xbf16>
    tpu.vector_store %arg13[%c13_61, %c256_62], %75 {strides = array<i32>} : memref<17x512xbf16, #tpu.memory_space<vmem>>, vector<1x256xbf16>,
    %77 = vector.extract_strided_slice %22 {offsets = [27, 0], sizes = [1, 256], strides = [1, 1]} : vector<32x256xbf16> to vector<1x256xbf16>
    %c14 = arith.constant 14 : index
    %c0_63 = arith.constant 0 : index
    %78 = vector.load %arg13[%c14, %c0_63] : memref<17x512xbf16, #tpu.memory_space<vmem>>, vector<1x256xbf16>
    tpu.vector_store %arg13[%c14, %c0_63], %77 {strides = array<i32>} : memref<17x512xbf16, #tpu.memory_space<vmem>>, vector<1x256xbf16>,
    %79 = vector.extract_strided_slice %22 {offsets = [28, 0], sizes = [1, 256], strides = [1, 1]} : vector<32x256xbf16> to vector<1x256xbf16>
    %c14_64 = arith.constant 14 : index
    %c256_65 = arith.constant 256 : index
    %80 = vector.load %arg13[%c14_64, %c256_65] : memref<17x512xbf16, #tpu.memory_space<vmem>>, vector<1x256xbf16>
    tpu.vector_store %arg13[%c14_64, %c256_65], %79 {strides = array<i32>} : memref<17x512xbf16, #tpu.memory_space<vmem>>, vector<1x256xbf16>,
    %81 = vector.extract_strided_slice %22 {offsets = [29, 0], sizes = [1, 256], strides = [1, 1]} : vector<32x256xbf16> to vector<1x256xbf16>
    %c15 = arith.constant 15 : index
    %c0_66 = arith.constant 0 : index
    %82 = vector.load %arg13[%c15, %c0_66] : memref<17x512xbf16, #tpu.memory_space<vmem>>, vector<1x256xbf16>
    tpu.vector_store %arg13[%c15, %c0_66], %81 {strides = array<i32>} : memref<17x512xbf16, #tpu.memory_space<vmem>>, vector<1x256xbf16>,
    %83 = vector.extract_strided_slice %22 {offsets = [30, 0], sizes = [1, 256], strides = [1, 1]} : vector<32x256xbf16> to vector<1x256xbf16>
    %c15_67 = arith.constant 15 : index
    %c256_68 = arith.constant 256 : index
    %84 = vector.load %arg13[%c15_67, %c256_68] : memref<17x512xbf16, #tpu.memory_space<vmem>>, vector<1x256xbf16>
    tpu.vector_store %arg13[%c15_67, %c256_68], %83 {strides = array<i32>} : memref<17x512xbf16, #tpu.memory_space<vmem>>, vector<1x256xbf16>,
    %85 = vector.extract_strided_slice %22 {offsets = [31, 0], sizes = [1, 256], strides = [1, 1]} : vector<32x256xbf16> to vector<1x256xbf16>
    %c16 = arith.constant 16 : index
    %c0_69 = arith.constant 0 : index
    %86 = vector.load %arg13[%c16, %c0_69] : memref<17x512xbf16, #tpu.memory_space<vmem>>, vector<1x256xbf16>
    tpu.vector_store %arg13[%c16, %c0_69], %85 {strides = array<i32>} : memref<17x512xbf16, #tpu.memory_space<vmem>>, vector<1x256xbf16>,
    %c0_70 = arith.constant 0 : index
    %c0_71 = arith.constant 0 : index
    %87 = vector.load %arg13[%c0_70, %c0_71] : memref<17x512xbf16, #tpu.memory_space<vmem>>, vector<16x512xbf16>
    %c1_72 = arith.constant 1 : index
    %c0_73 = arith.constant 0 : index
    %88 = vector.load %arg13[%c1_72, %c0_73] : memref<17x512xbf16, #tpu.memory_space<vmem>>, vector<16x512xbf16>
    %c0_74 = arith.constant 0 : index
    %c0_75 = arith.constant 0 : index
    %c0_76 = arith.constant 0 : index
    %89 = vector.load %arg4[%c0_74, %c0_75, %c0_76] : memref<2x512x256xbf16, #tpu.memory_space<vmem>>, vector<1x512x256xbf16>
    %90 = vector.shape_cast %89 : vector<1x512x256xbf16> to vector<512x256xbf16>
    %cst_77 = arith.constant dense<0.000000e+00> : vector<16x256xf32>
    %91 = tpu.matmul %87, %90, %cst_77 {dimension_numbers = #tpu.dot_dimension_numbers<[1], [0], [0], [1], [0, 0, 1, 1], [], []>} : vector<16x512xbf16>, vector<512x256xbf16>, vector<16x256xf32> -> vector<16x256xf32>
    %c1_78 = arith.constant 1 : index
    %c0_79 = arith.constant 0 : index
    %c0_80 = arith.constant 0 : index
    %92 = vector.load %arg4[%c1_78, %c0_79, %c0_80] : memref<2x512x256xbf16, #tpu.memory_space<vmem>>, vector<1x512x256xbf16>
    %93 = vector.shape_cast %92 : vector<1x512x256xbf16> to vector<512x256xbf16>
    %cst_81 = arith.constant dense<0.000000e+00> : vector<16x256xf32>
    %94 = tpu.matmul %88, %93, %cst_81 {dimension_numbers = #tpu.dot_dimension_numbers<[1], [0], [0], [1], [0, 0, 1, 1], [], []>} : vector<16x512xbf16>, vector<512x256xbf16>, vector<16x256xf32> -> vector<16x256xf32>
    %95 = arith.addf %91, %94 : vector<16x256xf32>
    %cst_82 = arith.constant 0.000000e+00 : f32
    %96 = vector.broadcast %cst_82 : f32 to vector<16x256xf32>
    %97 = arith.cmpf oge, %95, %96 : vector<16x256xf32>
    %cst_83 = arith.constant 0.00999999977 : f32
    %98 = vector.broadcast %cst_83 : f32 to vector<16x256xf32>
    %99 = arith.mulf %98, %95 : vector<16x256xf32>
    %100 = arith.select %97, %95, %99 : vector<16x256xi1>, vector<16x256xf32>
    %101 = arith.truncf %100 : vector<16x256xf32> to vector<16x256xbf16>
    %102 = vector.extract_strided_slice %101 {offsets = [0, 0], sizes = [1, 256], strides = [1, 1]} : vector<16x256xbf16> to vector<1x256xbf16>
    %c0_84 = arith.constant 0 : index
    %c256_85 = arith.constant 256 : index
    %103 = vector.load %arg14[%c0_84, %c256_85] : memref<9x512xbf16, #tpu.memory_space<vmem>>, vector<1x256xbf16>
    tpu.vector_store %arg14[%c0_84, %c256_85], %102 {strides = array<i32>} : memref<9x512xbf16, #tpu.memory_space<vmem>>, vector<1x256xbf16>,
    %104 = vector.extract_strided_slice %101 {offsets = [1, 0], sizes = [1, 256], strides = [1, 1]} : vector<16x256xbf16> to vector<1x256xbf16>
    %c1_86 = arith.constant 1 : index
    %c0_87 = arith.constant 0 : index
    %105 = vector.load %arg14[%c1_86, %c0_87] : memref<9x512xbf16, #tpu.memory_space<vmem>>, vector<1x256xbf16>
    tpu.vector_store %arg14[%c1_86, %c0_87], %104 {strides = array<i32>} : memref<9x512xbf16, #tpu.memory_space<vmem>>, vector<1x256xbf16>,
    %106 = vector.extract_strided_slice %101 {offsets = [2, 0], sizes = [1, 256], strides = [1, 1]} : vector<16x256xbf16> to vector<1x256xbf16>
    %c1_88 = arith.constant 1 : index
    %c256_89 = arith.constant 256 : index
    %107 = vector.load %arg14[%c1_88, %c256_89] : memref<9x512xbf16, #tpu.memory_space<vmem>>, vector<1x256xbf16>
    tpu.vector_store %arg14[%c1_88, %c256_89], %106 {strides = array<i32>} : memref<9x512xbf16, #tpu.memory_space<vmem>>, vector<1x256xbf16>,
    %108 = vector.extract_strided_slice %101 {offsets = [3, 0], sizes = [1, 256], strides = [1, 1]} : vector<16x256xbf16> to vector<1x256xbf16>
    %c2_90 = arith.constant 2 : index
    %c0_91 = arith.constant 0 : index
    %109 = vector.load %arg14[%c2_90, %c0_91] : memref<9x512xbf16, #tpu.memory_space<vmem>>, vector<1x256xbf16>
    tpu.vector_store %arg14[%c2_90, %c0_91], %108 {strides = array<i32>} : memref<9x512xbf16, #tpu.memory_space<vmem>>, vector<1x256xbf16>,
    %110 = vector.extract_strided_slice %101 {offsets = [4, 0], sizes = [1, 256], strides = [1, 1]} : vector<16x256xbf16> to vector<1x256xbf16>
    %c2_92 = arith.constant 2 : index
    %c256_93 = arith.constant 256 : index
    %111 = vector.load %arg14[%c2_92, %c256_93] : memref<9x512xbf16, #tpu.memory_space<vmem>>, vector<1x256xbf16>
    tpu.vector_store %arg14[%c2_92, %c256_93], %110 {strides = array<i32>} : memref<9x512xbf16, #tpu.memory_space<vmem>>, vector<1x256xbf16>,
    %112 = vector.extract_strided_slice %101 {offsets = [5, 0], sizes = [1, 256], strides = [1, 1]} : vector<16x256xbf16> to vector<1x256xbf16>
    %c3_94 = arith.constant 3 : index
    %c0_95 = arith.constant 0 : index
    %113 = vector.load %arg14[%c3_94, %c0_95] : memref<9x512xbf16, #tpu.memory_space<vmem>>, vector<1x256xbf16>
    tpu.vector_store %arg14[%c3_94, %c0_95], %112 {strides = array<i32>} : memref<9x512xbf16, #tpu.memory_space<vmem>>, vector<1x256xbf16>,
    %114 = vector.extract_strided_slice %101 {offsets = [6, 0], sizes = [1, 256], strides = [1, 1]} : vector<16x256xbf16> to vector<1x256xbf16>
    %c3_96 = arith.constant 3 : index
    %c256_97 = arith.constant 256 : index
    %115 = vector.load %arg14[%c3_96, %c256_97] : memref<9x512xbf16, #tpu.memory_space<vmem>>, vector<1x256xbf16>
    tpu.vector_store %arg14[%c3_96, %c256_97], %114 {strides = array<i32>} : memref<9x512xbf16, #tpu.memory_space<vmem>>, vector<1x256xbf16>,
    %116 = vector.extract_strided_slice %101 {offsets = [7, 0], sizes = [1, 256], strides = [1, 1]} : vector<16x256xbf16> to vector<1x256xbf16>
    %c4_98 = arith.constant 4 : index
    %c0_99 = arith.constant 0 : index
    %117 = vector.load %arg14[%c4_98, %c0_99] : memref<9x512xbf16, #tpu.memory_space<vmem>>, vector<1x256xbf16>
    tpu.vector_store %arg14[%c4_98, %c0_99], %116 {strides = array<i32>} : memref<9x512xbf16, #tpu.memory_space<vmem>>, vector<1x256xbf16>,
    %118 = vector.extract_strided_slice %101 {offsets = [8, 0], sizes = [1, 256], strides = [1, 1]} : vector<16x256xbf16> to vector<1x256xbf16>
    %c4_100 = arith.constant 4 : index
    %c256_101 = arith.constant 256 : index
    %119 = vector.load %arg14[%c4_100, %c256_101] : memref<9x512xbf16, #tpu.memory_space<vmem>>, vector<1x256xbf16>
    tpu.vector_store %arg14[%c4_100, %c256_101], %118 {strides = array<i32>} : memref<9x512xbf16, #tpu.memory_space<vmem>>, vector<1x256xbf16>,
    %120 = vector.extract_strided_slice %101 {offsets = [9, 0], sizes = [1, 256], strides = [1, 1]} : vector<16x256xbf16> to vector<1x256xbf16>
    %c5_102 = arith.constant 5 : index
    %c0_103 = arith.constant 0 : index
    %121 = vector.load %arg14[%c5_102, %c0_103] : memref<9x512xbf16, #tpu.memory_space<vmem>>, vector<1x256xbf16>
    tpu.vector_store %arg14[%c5_102, %c0_103], %120 {strides = array<i32>} : memref<9x512xbf16, #tpu.memory_space<vmem>>, vector<1x256xbf16>,
    %122 = vector.extract_strided_slice %101 {offsets = [10, 0], sizes = [1, 256], strides = [1, 1]} : vector<16x256xbf16> to vector<1x256xbf16>
    %c5_104 = arith.constant 5 : index
    %c256_105 = arith.constant 256 : index
    %123 = vector.load %arg14[%c5_104, %c256_105] : memref<9x512xbf16, #tpu.memory_space<vmem>>, vector<1x256xbf16>
    tpu.vector_store %arg14[%c5_104, %c256_105], %122 {strides = array<i32>} : memref<9x512xbf16, #tpu.memory_space<vmem>>, vector<1x256xbf16>,
    %124 = vector.extract_strided_slice %101 {offsets = [11, 0], sizes = [1, 256], strides = [1, 1]} : vector<16x256xbf16> to vector<1x256xbf16>
    %c6_106 = arith.constant 6 : index
    %c0_107 = arith.constant 0 : index
    %125 = vector.load %arg14[%c6_106, %c0_107] : memref<9x512xbf16, #tpu.memory_space<vmem>>, vector<1x256xbf16>
    tpu.vector_store %arg14[%c6_106, %c0_107], %124 {strides = array<i32>} : memref<9x512xbf16, #tpu.memory_space<vmem>>, vector<1x256xbf16>,
    %126 = vector.extract_strided_slice %101 {offsets = [12, 0], sizes = [1, 256], strides = [1, 1]} : vector<16x256xbf16> to vector<1x256xbf16>
    %c6_108 = arith.constant 6 : index
    %c256_109 = arith.constant 256 : index
    %127 = vector.load %arg14[%c6_108, %c256_109] : memref<9x512xbf16, #tpu.memory_space<vmem>>, vector<1x256xbf16>
    tpu.vector_store %arg14[%c6_108, %c256_109], %126 {strides = array<i32>} : memref<9x512xbf16, #tpu.memory_space<vmem>>, vector<1x256xbf16>,
    %128 = vector.extract_strided_slice %101 {offsets = [13, 0], sizes = [1, 256], strides = [1, 1]} : vector<16x256xbf16> to vector<1x256xbf16>
    %c7_110 = arith.constant 7 : index
    %c0_111 = arith.constant 0 : index
    %129 = vector.load %arg14[%c7_110, %c0_111] : memref<9x512xbf16, #tpu.memory_space<vmem>>, vector<1x256xbf16>
    tpu.vector_store %arg14[%c7_110, %c0_111], %128 {strides = array<i32>} : memref<9x512xbf16, #tpu.memory_space<vmem>>, vector<1x256xbf16>,
    %130 = vector.extract_strided_slice %101 {offsets = [14, 0], sizes = [1, 256], strides = [1, 1]} : vector<16x256xbf16> to vector<1x256xbf16>
    %c7_112 = arith.constant 7 : index
    %c256_113 = arith.constant 256 : index
    %131 = vector.load %arg14[%c7_112, %c256_113] : memref<9x512xbf16, #tpu.memory_space<vmem>>, vector<1x256xbf16>
    tpu.vector_store %arg14[%c7_112, %c256_113], %130 {strides = array<i32>} : memref<9x512xbf16, #tpu.memory_space<vmem>>, vector<1x256xbf16>,
    %132 = vector.extract_strided_slice %101 {offsets = [15, 0], sizes = [1, 256], strides = [1, 1]} : vector<16x256xbf16> to vector<1x256xbf16>
    %c8_114 = arith.constant 8 : index
    %c0_115 = arith.constant 0 : index
    %133 = vector.load %arg14[%c8_114, %c0_115] : memref<9x512xbf16, #tpu.memory_space<vmem>>, vector<1x256xbf16>
    tpu.vector_store %arg14[%c8_114, %c0_115], %132 {strides = array<i32>} : memref<9x512xbf16, #tpu.memory_space<vmem>>, vector<1x256xbf16>,
    %c0_116 = arith.constant 0 : index
    %c0_117 = arith.constant 0 : index
    %134 = vector.load %arg14[%c0_116, %c0_117] : memref<9x512xbf16, #tpu.memory_space<vmem>>, vector<8x512xbf16>
    %c1_118 = arith.constant 1 : index
    %c0_119 = arith.constant 0 : index
    %135 = vector.load %arg14[%c1_118, %c0_119] : memref<9x512xbf16, #tpu.memory_space<vmem>>, vector<8x512xbf16>
    %c0_120 = arith.constant 0 : index
    %c0_121 = arith.constant 0 : index
    %c0_122 = arith.constant 0 : index
    %136 = vector.load %arg5[%c0_120, %c0_121, %c0_122] : memref<2x512x256xbf16, #tpu.memory_space<vmem>>, vector<1x512x256xbf16>
    %137 = vector.shape_cast %136 : vector<1x512x256xbf16> to vector<512x256xbf16>
    %cst_123 = arith.constant dense<0.000000e+00> : vector<8x256xf32>
    %138 = tpu.matmul %134, %137, %cst_123 {dimension_numbers = #tpu.dot_dimension_numbers<[1], [0], [0], [1], [0, 0, 1, 1], [], []>} : vector<8x512xbf16>, vector<512x256xbf16>, vector<8x256xf32> -> vector<8x256xf32>
    %c1_124 = arith.constant 1 : index
    %c0_125 = arith.constant 0 : index
    %c0_126 = arith.constant 0 : index
    %139 = vector.load %arg5[%c1_124, %c0_125, %c0_126] : memref<2x512x256xbf16, #tpu.memory_space<vmem>>, vector<1x512x256xbf16>
    %140 = vector.shape_cast %139 : vector<1x512x256xbf16> to vector<512x256xbf16>
    %cst_127 = arith.constant dense<0.000000e+00> : vector<8x256xf32>
    %141 = tpu.matmul %135, %140, %cst_127 {dimension_numbers = #tpu.dot_dimension_numbers<[1], [0], [0], [1], [0, 0, 1, 1], [], []>} : vector<8x512xbf16>, vector<512x256xbf16>, vector<8x256xf32> -> vector<8x256xf32>
    %142 = arith.addf %138, %141 : vector<8x256xf32>
    %cst_128 = arith.constant 0.000000e+00 : f32
    %143 = vector.broadcast %cst_128 : f32 to vector<8x256xf32>
    %144 = arith.cmpf oge, %142, %143 : vector<8x256xf32>
    %cst_129 = arith.constant 0.00999999977 : f32
    %145 = vector.broadcast %cst_129 : f32 to vector<8x256xf32>
    %146 = arith.mulf %145, %142 : vector<8x256xf32>
    %147 = arith.select %144, %142, %146 : vector<8x256xi1>, vector<8x256xf32>
    %148 = arith.truncf %147 : vector<8x256xf32> to vector<8x256xbf16>
    %149 = vector.extract_strided_slice %148 {offsets = [0, 0], sizes = [1, 256], strides = [1, 1]} : vector<8x256xbf16> to vector<1x256xbf16>
    %c0_130 = arith.constant 0 : index
    %c256_131 = arith.constant 256 : index
    %150 = vector.load %arg15[%c0_130, %c256_131] : memref<5x512xbf16, #tpu.memory_space<vmem>>, vector<1x256xbf16>
    tpu.vector_store %arg15[%c0_130, %c256_131], %149 {strides = array<i32>} : memref<5x512xbf16, #tpu.memory_space<vmem>>, vector<1x256xbf16>,
    %151 = vector.extract_strided_slice %148 {offsets = [1, 0], sizes = [1, 256], strides = [1, 1]} : vector<8x256xbf16> to vector<1x256xbf16>
    %c1_132 = arith.constant 1 : index
    %c0_133 = arith.constant 0 : index
    %152 = vector.load %arg15[%c1_132, %c0_133] : memref<5x512xbf16, #tpu.memory_space<vmem>>, vector<1x256xbf16>
    tpu.vector_store %arg15[%c1_132, %c0_133], %151 {strides = array<i32>} : memref<5x512xbf16, #tpu.memory_space<vmem>>, vector<1x256xbf16>,
    %153 = vector.extract_strided_slice %148 {offsets = [2, 0], sizes = [1, 256], strides = [1, 1]} : vector<8x256xbf16> to vector<1x256xbf16>
    %c1_134 = arith.constant 1 : index
    %c256_135 = arith.constant 256 : index
    %154 = vector.load %arg15[%c1_134, %c256_135] : memref<5x512xbf16, #tpu.memory_space<vmem>>, vector<1x256xbf16>
    tpu.vector_store %arg15[%c1_134, %c256_135], %153 {strides = array<i32>} : memref<5x512xbf16, #tpu.memory_space<vmem>>, vector<1x256xbf16>,
    %155 = vector.extract_strided_slice %148 {offsets = [3, 0], sizes = [1, 256], strides = [1, 1]} : vector<8x256xbf16> to vector<1x256xbf16>
    %c2_136 = arith.constant 2 : index
    %c0_137 = arith.constant 0 : index
    %156 = vector.load %arg15[%c2_136, %c0_137] : memref<5x512xbf16, #tpu.memory_space<vmem>>, vector<1x256xbf16>
    tpu.vector_store %arg15[%c2_136, %c0_137], %155 {strides = array<i32>} : memref<5x512xbf16, #tpu.memory_space<vmem>>, vector<1x256xbf16>,
    %157 = vector.extract_strided_slice %148 {offsets = [4, 0], sizes = [1, 256], strides = [1, 1]} : vector<8x256xbf16> to vector<1x256xbf16>
    %c2_138 = arith.constant 2 : index
    %c256_139 = arith.constant 256 : index
    %158 = vector.load %arg15[%c2_138, %c256_139] : memref<5x512xbf16, #tpu.memory_space<vmem>>, vector<1x256xbf16>
    tpu.vector_store %arg15[%c2_138, %c256_139], %157 {strides = array<i32>} : memref<5x512xbf16, #tpu.memory_space<vmem>>, vector<1x256xbf16>,
    %159 = vector.extract_strided_slice %148 {offsets = [5, 0], sizes = [1, 256], strides = [1, 1]} : vector<8x256xbf16> to vector<1x256xbf16>
    %c3_140 = arith.constant 3 : index
    %c0_141 = arith.constant 0 : index
    %160 = vector.load %arg15[%c3_140, %c0_141] : memref<5x512xbf16, #tpu.memory_space<vmem>>, vector<1x256xbf16>
    tpu.vector_store %arg15[%c3_140, %c0_141], %159 {strides = array<i32>} : memref<5x512xbf16, #tpu.memory_space<vmem>>, vector<1x256xbf16>,
    %161 = vector.extract_strided_slice %148 {offsets = [6, 0], sizes = [1, 256], strides = [1, 1]} : vector<8x256xbf16> to vector<1x256xbf16>
    %c3_142 = arith.constant 3 : index
    %c256_143 = arith.constant 256 : index
    %162 = vector.load %arg15[%c3_142, %c256_143] : memref<5x512xbf16, #tpu.memory_space<vmem>>, vector<1x256xbf16>
    tpu.vector_store %arg15[%c3_142, %c256_143], %161 {strides = array<i32>} : memref<5x512xbf16, #tpu.memory_space<vmem>>, vector<1x256xbf16>,
    %163 = vector.extract_strided_slice %148 {offsets = [7, 0], sizes = [1, 256], strides = [1, 1]} : vector<8x256xbf16> to vector<1x256xbf16>
    %c4_144 = arith.constant 4 : index
    %c0_145 = arith.constant 0 : index
    %164 = vector.load %arg15[%c4_144, %c0_145] : memref<5x512xbf16, #tpu.memory_space<vmem>>, vector<1x256xbf16>
    tpu.vector_store %arg15[%c4_144, %c0_145], %163 {strides = array<i32>} : memref<5x512xbf16, #tpu.memory_space<vmem>>, vector<1x256xbf16>,
    %c0_146 = arith.constant 0 : index
    %c0_147 = arith.constant 0 : index
    %165 = vector.load %arg15[%c0_146, %c0_147] : memref<5x512xbf16, #tpu.memory_space<vmem>>, vector<4x512xbf16>
    %c1_148 = arith.constant 1 : index
    %c0_149 = arith.constant 0 : index
    %166 = vector.load %arg15[%c1_148, %c0_149] : memref<5x512xbf16, #tpu.memory_space<vmem>>, vector<4x512xbf16>
    %c0_150 = arith.constant 0 : index
    %c0_151 = arith.constant 0 : index
    %c0_152 = arith.constant 0 : index
    %167 = vector.load %arg6[%c0_150, %c0_151, %c0_152] : memref<2x512x256xbf16, #tpu.memory_space<vmem>>, vector<1x512x256xbf16>
    %168 = vector.shape_cast %167 : vector<1x512x256xbf16> to vector<512x256xbf16>
    %cst_153 = arith.constant dense<0.000000e+00> : vector<4x256xf32>
    %169 = tpu.matmul %165, %168, %cst_153 {dimension_numbers = #tpu.dot_dimension_numbers<[1], [0], [0], [1], [0, 0, 1, 1], [], []>} : vector<4x512xbf16>, vector<512x256xbf16>, vector<4x256xf32> -> vector<4x256xf32>
    %c1_154 = arith.constant 1 : index
    %c0_155 = arith.constant 0 : index
    %c0_156 = arith.constant 0 : index
    %170 = vector.load %arg6[%c1_154, %c0_155, %c0_156] : memref<2x512x256xbf16, #tpu.memory_space<vmem>>, vector<1x512x256xbf16>
    %171 = vector.shape_cast %170 : vector<1x512x256xbf16> to vector<512x256xbf16>
    %cst_157 = arith.constant dense<0.000000e+00> : vector<4x256xf32>
    %172 = tpu.matmul %166, %171, %cst_157 {dimension_numbers = #tpu.dot_dimension_numbers<[1], [0], [0], [1], [0, 0, 1, 1], [], []>} : vector<4x512xbf16>, vector<512x256xbf16>, vector<4x256xf32> -> vector<4x256xf32>
    %173 = arith.addf %169, %172 : vector<4x256xf32>
    %cst_158 = arith.constant 0.000000e+00 : f32
    %174 = vector.broadcast %cst_158 : f32 to vector<4x256xf32>
    %175 = arith.cmpf oge, %173, %174 : vector<4x256xf32>
    %cst_159 = arith.constant 0.00999999977 : f32
    %176 = vector.broadcast %cst_159 : f32 to vector<4x256xf32>
    %177 = arith.mulf %176, %173 : vector<4x256xf32>
    %178 = arith.select %175, %173, %177 : vector<4x256xi1>, vector<4x256xf32>
    %c0_160 = arith.constant 0 : index
    %c0_161 = arith.constant 0 : index
    %c0_162 = arith.constant 0 : index
    %179 = vector.load %arg2[%c0_160, %c0_161, %c0_162] : memref<1x1x8xf32, #tpu.memory_space<vmem>>, vector<1x1x8xf32>
    %180 = vector.shape_cast %179 : vector<1x1x8xf32> to vector<1x8xf32>
    %181 = arith.truncf %180 : vector<1x8xf32> to vector<1x8xbf16>
    %c0_163 = arith.constant 0 : index
    %c0_164 = arith.constant 0 : index
    %182 = vector.load %arg7[%c0_163, %c0_164] : memref<8x32xbf16, #tpu.memory_space<vmem>>, vector<8x32xbf16>
    %cst_165 = arith.constant dense<0.000000e+00> : vector<1x32xf32>
    %183 = tpu.matmul %181, %182, %cst_165 {dimension_numbers = #tpu.dot_dimension_numbers<[1], [0], [0], [1], [0, 0, 1, 1], [], []>} : vector<1x8xbf16>, vector<8x32xbf16>, vector<1x32xf32> -> vector<1x32xf32>
    %c0_166 = arith.constant 0 : index
    %c0_167 = arith.constant 0 : index
    %184 = vector.load %arg8[%c0_166, %c0_167] : memref<1x32xf32, #tpu.memory_space<vmem>>, vector<1x32xf32>
    %185 = arith.addf %183, %184 : vector<1x32xf32>
    %cst_168 = arith.constant 0.000000e+00 : f32
    %186 = vector.broadcast %cst_168 : f32 to vector<1x32xf32>
    %187 = arith.cmpf oge, %185, %186 : vector<1x32xf32>
    %cst_169 = arith.constant 0.00999999977 : f32
    %188 = vector.broadcast %cst_169 : f32 to vector<1x32xf32>
    %189 = arith.mulf %188, %185 : vector<1x32xf32>
    %190 = arith.select %187, %185, %189 : vector<1x32xi1>, vector<1x32xf32>
    %191 = arith.truncf %190 : vector<1x32xf32> to vector<1x32xbf16>
    %c0_170 = arith.constant 0 : index
    %c0_171 = arith.constant 0 : index
    %192 = vector.load %arg9[%c0_170, %c0_171] : memref<32x64xbf16, #tpu.memory_space<vmem>>, vector<32x64xbf16>
    %cst_172 = arith.constant dense<0.000000e+00> : vector<1x64xf32>
    %193 = tpu.matmul %191, %192, %cst_172 {dimension_numbers = #tpu.dot_dimension_numbers<[1], [0], [0], [1], [0, 0, 1, 1], [], []>} : vector<1x32xbf16>, vector<32x64xbf16>, vector<1x64xf32> -> vector<1x64xf32>
    %194 = tpu.concatenate %193, %193, %193, %193 in 1 : vector<1x64xf32>, vector<1x64xf32>, vector<1x64xf32>, vector<1x64xf32> -> vector<1x256xf32>
    %195 = arith.truncf %178 : vector<4x256xf32> to vector<4x256xbf16>
    %c0_173 = arith.constant 0 : index
    %c0_174 = arith.constant 0 : index
    %196 = vector.load %arg10[%c0_173, %c0_174] : memref<256x256xbf16, #tpu.memory_space<vmem>>, vector<256x256xbf16>
    %cst_175 = arith.constant dense<0.000000e+00> : vector<4x256xf32>
    %197 = tpu.matmul %195, %196, %cst_175 {dimension_numbers = #tpu.dot_dimension_numbers<[1], [0], [0], [1], [0, 0, 1, 1], [], []>} : vector<4x256xbf16>, vector<256x256xbf16>, vector<4x256xf32> -> vector<4x256xf32>
    %198 = vector.broadcast %194 : vector<1x256xf32> to vector<4x256xf32>
    %199 = arith.addf %197, %198 : vector<4x256xf32>
    %cst_176 = arith.constant 0.000000e+00 : f32
    %200 = vector.broadcast %cst_176 : f32 to vector<4x256xf32>
    %201 = arith.cmpf oge, %199, %200 : vector<4x256xf32>
    %cst_177 = arith.constant 0.00999999977 : f32
    %202 = vector.broadcast %cst_177 : f32 to vector<4x256xf32>
    %203 = arith.mulf %202, %199 : vector<4x256xf32>
    %204 = arith.select %201, %199, %203 : vector<4x256xi1>, vector<4x256xf32>
    %c0_178 = arith.constant 0 : index
    %c0_179 = arith.constant 0 : index
    %205 = vector.load %arg11[%c0_178, %c0_179] : memref<4x256xf32, #tpu.memory_space<vmem>>, vector<4x256xf32>
    %206 = arith.mulf %204, %205 : vector<4x256xf32>
    %207 = vector.shape_cast %206 : vector<4x256xf32> to vector<1x4x256xf32>
    %cst_180 = arith.constant dense<0.000000e+00> : vector<1xf32>
    %208 = vector.multi_reduction <add>, %207, %cst_180 [1, 2] : vector<1x4x256xf32> to vector<1xf32>
    %209 = vector.shape_cast %208 : vector<1xf32> to vector<1x1x1xf32>
    %210 = vector.extract %209[0, 0, 0] : f32 from vector<1x1x1xf32>
    %211 = vector.broadcast %210 : f32 to vector<1x1xf32>
    %c0_181 = arith.constant 0 : index
    %c0_182 = arith.constant 0 : index
    %c0_183 = arith.constant 0 : index
    %212 = vector.load %arg12[%c0_181, %c0_182, %c0_183] : memref<1x1x1xf32, #tpu.memory_space<vmem>>, vector<1x1x1xf32>
    %213 = vector.shape_cast %212 : vector<1x1x1xf32> to vector<1x1xf32>
    %214 = vector.shape_cast %211 : vector<1x1xf32> to vector<1x1x1xf32>
    tpu.vector_store %arg12[%c0_181, %c0_182, %c0_183], %214 {strides = array<i32>} : memref<1x1x1xf32, #tpu.memory_space<vmem>>, vector<1x1x1xf32>,
    return
  }
  func.func @transform_0(%arg0: i32) -> (i32, i32, i32) {
    %c0_i32 = arith.constant 0 : i32
    %c0_i32_0 = arith.constant 0 : i32
    %c0_i32_1 = arith.constant 0 : i32
    return %arg0, %c0_i32, %c0_i32_0 : i32, i32, i32
  }
  func.func @transform_1(%arg0: i32) -> (i32, i32, i32) {
    %c0_i32 = arith.constant 0 : i32
    %c0_i32_0 = arith.constant 0 : i32
    %c0_i32_1 = arith.constant 0 : i32
    return %arg0, %c0_i32, %c0_i32_0 : i32, i32, i32
  }
  func.func @transform_2(%arg0: i32) -> (i32, i32, i32) {
    %c0_i32 = arith.constant 0 : i32
    %c0_i32_0 = arith.constant 0 : i32
    %c0_i32_1 = arith.constant 0 : i32
    %c0_i32_2 = arith.constant 0 : i32
    return %c0_i32, %c0_i32_0, %c0_i32_1 : i32, i32, i32
  }
  func.func @transform_3(%arg0: i32) -> (i32, i32, i32) {
    %c0_i32 = arith.constant 0 : i32
    %c0_i32_0 = arith.constant 0 : i32
    %c0_i32_1 = arith.constant 0 : i32
    %c0_i32_2 = arith.constant 0 : i32
    return %c0_i32, %c0_i32_0, %c0_i32_1 : i32, i32, i32
  }
  func.func @transform_4(%arg0: i32) -> (i32, i32, i32) {
    %c0_i32 = arith.constant 0 : i32
    %c0_i32_0 = arith.constant 0 : i32
    %c0_i32_1 = arith.constant 0 : i32
    %c0_i32_2 = arith.constant 0 : i32
    return %c0_i32, %c0_i32_0, %c0_i32_1 : i32, i32, i32
  }
  func.func @transform_5(%arg0: i32) -> (i32, i32, i32) {
    %c0_i32 = arith.constant 0 : i32
    %c0_i32_0 = arith.constant 0 : i32
    %c0_i32_1 = arith.constant 0 : i32
    %c0_i32_2 = arith.constant 0 : i32
    return %c0_i32, %c0_i32_0, %c0_i32_1 : i32, i32, i32
  }
  func.func @transform_6(%arg0: i32) -> (i32, i32) {
    %c0_i32 = arith.constant 0 : i32
    %c0_i32_0 = arith.constant 0 : i32
    %c0_i32_1 = arith.constant 0 : i32
    return %c0_i32, %c0_i32_0 : i32, i32
  }
  func.func @transform_7(%arg0: i32) -> (i32, i32) {
    %c0_i32 = arith.constant 0 : i32
    %c0_i32_0 = arith.constant 0 : i32
    %c0_i32_1 = arith.constant 0 : i32
    return %c0_i32, %c0_i32_0 : i32, i32
  }
  func.func @transform_8(%arg0: i32) -> (i32, i32) {
    %c0_i32 = arith.constant 0 : i32
    %c0_i32_0 = arith.constant 0 : i32
    %c0_i32_1 = arith.constant 0 : i32
    return %c0_i32, %c0_i32_0 : i32, i32
  }
  func.func @transform_9(%arg0: i32) -> (i32, i32) {
    %c0_i32 = arith.constant 0 : i32
    %c0_i32_0 = arith.constant 0 : i32
    %c0_i32_1 = arith.constant 0 : i32
    return %c0_i32, %c0_i32_0 : i32, i32
  }
  func.func @transform_10(%arg0: i32) -> (i32, i32) {
    %c0_i32 = arith.constant 0 : i32
    %c0_i32_0 = arith.constant 0 : i32
    %c0_i32_1 = arith.constant 0 : i32
    return %c0_i32, %c0_i32_0 : i32, i32
  }
  func.func @transform_11(%arg0: i32) -> (i32, i32, i32) {
    %c0_i32 = arith.constant 0 : i32
    %c0_i32_0 = arith.constant 0 : i32
    %c0_i32_1 = arith.constant 0 : i32
    return %arg0, %c0_i32, %c0_i32_0 : i32, i32, i32
  }
}

</mosaic_0001>

<llo_original>
// kernel: netd_forward.1
$region0: #{netd_forward.1}
  #allocation0 [shape = 'u32[]', space=smem, size = 0x4, offset = 0x4, fixed_abs, tag = 'smem constant byte address 0x4 - core index']
  #allocation1 [shape = 'u32[144,128]{1,0:T(1,128)}', space=vmem, size = 0x12000, scoped, tag = 'internal scratch']
  #allocation2 [shape = 'bf16[17,512]{1,0:T(8,128)(2,1)}', space=vmem, size = 0x6000, scoped, tag = 'scratch operand']
  #allocation3 [shape = 'bf16[9,512]{1,0:T(8,128)(2,1)}', space=vmem, size = 0x4000, scoped, tag = 'scratch operand']
  #allocation4 [shape = 'bf16[5,512]{1,0:T(8,128)(2,1)}', space=vmem, size = 0x2000, scoped, tag = 'scratch operand']
  %s0 = inlined_call_operand.vmem [shape: bf16[2,33,512], index: 0, kind: input, shape index: {}]
  %s1 = inlined_call_operand.vmem [shape: f32[2,1,8], index: 1, kind: input, shape index: {}]
  %s2 = inlined_call_operand.vmem [shape: bf16[2,512,256], index: 2, kind: input, shape index: {}]
  %s3 = inlined_call_operand.vmem [shape: bf16[2,512,256], index: 3, kind: input, shape index: {}]
  %s4 = inlined_call_operand.vmem [shape: bf16[2,512,256], index: 4, kind: input, shape index: {}]
  %s5 = inlined_call_operand.vmem [shape: bf16[2,512,256], index: 5, kind: input, shape index: {}]
  %s6 = inlined_call_operand.vmem [shape: bf16[8,32], index: 6, kind: input, shape index: {}]
  %s7 = inlined_call_operand.vmem [shape: f32[1,32], index: 7, kind: input, shape index: {}]
  %s8 = inlined_call_operand.vmem [shape: bf16[32,64], index: 8, kind: input, shape index: {}]
  %s9 = inlined_call_operand.vmem [shape: bf16[256,256], index: 9, kind: input, shape index: {}]
  %s10 = inlined_call_operand.vmem [shape: f32[4,256], index: 10, kind: input, shape index: {}]
  %s11 = inlined_call_operand.vmem [shape: f32[2,1,1], index: 11, kind: output, shape index: {}]
  %s12 = sld [smem:[#allocation0]]
  $region77: #{netd_forward.1} parent=0
    _
  %s14 = ssub.s32 1, %s12
  %s15 = scalar_select 0, %s14, %s12
  loop: start=0, step=1, limit=4
  $region2: #{netd_forward.1} parent=0 // loop_pre_header
    _
  $region3: #{netd_forward.1} parent=0 // loop_header
    %s17 = sphi 0, %s21
    %p18 = scmp.ge.s32.totalorder %s17, 4
    %s27 = sphi 0, %s29
    %s30 = sphi 0, %s27
    %s31 = sphi 0, %s30
    %s47 = sphi 0, %s31
    %s53 = sphi 0, %s55
    %s56 = sphi 0, %s53
    %s57 = sphi 0, %s56
    %s73 = sphi 0, %s57
    %s77 = sphi 0, %s77
    %s79 = sphi 0, %s77
    %s80 = sphi 0, %s79
    %s94 = sphi 0, %s80
    %s98 = sphi 0, %s98
    %s100 = sphi 0, %s98
    %s101 = sphi 0, %s100
    %s115 = sphi 0, %s101
    %s119 = sphi 0, %s119
    %s121 = sphi 0, %s119
    %s122 = sphi 0, %s121
    %s136 = sphi 0, %s122
    %s140 = sphi 0, %s140
    %s142 = sphi 0, %s140
    %s143 = sphi 0, %s142
    %s157 = sphi 0, %s143
    %s161 = sphi 0, %s161
    %s163 = sphi 0, %s161
    %s164 = sphi 0, %s163
    %s178 = sphi 0, %s164
    %s182 = sphi 0, %s182
    %s184 = sphi 0, %s182
    %s185 = sphi 0, %s184
    %s199 = sphi 0, %s185
    %s203 = sphi 0, %s203
    %s205 = sphi 0, %s203
    %s206 = sphi 0, %s205
    %s220 = sphi 0, %s206
    %s224 = sphi 0, %s224
    %s226 = sphi 0, %s224
    %s227 = sphi 0, %s226
    %s241 = sphi 0, %s227
    %s245 = sphi 0, %s245
    %s247 = sphi 0, %s245
    %s248 = sphi 0, %s247
    %s262 = sphi 0, %s248
    %s268 = sphi 0, %s270
    %s271 = sphi 0, %s268
    %s272 = sphi 0, %s271
    %s288 = sphi 0, %s272
  $region4: #{netd_forward.1} parent=0 // loop_header_branch
    %20 = sbr.rel (%p18) target = $region8
  $region5: #{netd_forward.1} parent=0 // loop_body
    %s22 = ssub.s32 %s17, 1
    %s23 = ssub.s32 %s17, 2
    %s24 = sadd.s32 %s17, 1
    %s25 = ssub.s32 %s17, %s24
    %p26 = scmp.eq.s32.totalorder %s25, 0
    %s28 = sadd.s32 %s27, 1
    %s29 = scalar_select %p26, %s27, %s28
    %p32 = pneg %p26
    %p33 = scmp.eq.s32.totalorder %s17, 1
    %p34 = por %p32, %p33
    %p35 = scmp.ne.s32.totalorder %s27, %s30
    %p36 = scmp.eq.s32.totalorder %s17, 0
    %p37 = por %p35, %p36
    %p38 = scmp.ne.s32.totalorder %s27, %s30
    %p39 = scmp.eq.s32.totalorder %s22, 1
    %p40 = por %p38, %p39
    %p41 = scmp.ne.s32.totalorder %s30, %s31
    %p42 = scmp.eq.s32.totalorder %s22, 0
    %p43 = por %p41, %p42
    %p44 = scmp.ne.s32.totalorder %s30, %s31
    %p45 = scmp.eq.s32.totalorder %s23, 1
    %p46 = por %p44, %p45
    %p48 = scmp.ne.s32.totalorder %s31, %s47
    %p49 = scmp.eq.s32.totalorder %s23, 0
    %p50 = por %p48, %p49
    %s51 = ssub.s32 %s17, %s24
    %p52 = scmp.eq.s32.totalorder %s51, 0
    %s54 = sadd.s32 %s53, 1
    %s55 = scalar_select %p52, %s53, %s54
    %p58 = pneg %p52
    %p59 = scmp.eq.s32.totalorder %s17, 1
    %p60 = por %p58, %p59
    %p61 = scmp.ne.s32.totalorder %s53, %s56
    %p62 = scmp.eq.s32.totalorder %s17, 0
    %p63 = por %p61, %p62
    %p64 = scmp.ne.s32.totalorder %s53, %s56
    %p65 = scmp.eq.s32.totalorder %s22, 1
    %p66 = por %p64, %p65
    %p67 = scmp.ne.s32.totalorder %s56, %s57
    %p68 = scmp.eq.s32.totalorder %s22, 0
    %p69 = por %p67, %p68
    %p70 = scmp.ne.s32.totalorder %s56, %s57
    %p71 = scmp.eq.s32.totalorder %s23, 1
    %p72 = por %p70, %p71
    %p74 = scmp.ne.s32.totalorder %s57, %s73
    %p75 = scmp.eq.s32.totalorder %s23, 0
    %p76 = por %p74, %p75
    %s78 = sadd.s32 %s77, 1
    %p81 = scmp.eq.s32.totalorder %s17, 1
    %p82 = scmp.ne.s32.totalorder %s77, %s79
    %p83 = scmp.eq.s32.totalorder %s17, 0
    %p84 = por %p82, %p83
    %p85 = scmp.ne.s32.totalorder %s77, %s79
    %p86 = scmp.eq.s32.totalorder %s22, 1
    %p87 = por %p85, %p86
    %p88 = scmp.ne.s32.totalorder %s79, %s80
    %p89 = scmp.eq.s32.totalorder %s22, 0
    %p90 = por %p88, %p89
    %p91 = scmp.ne.s32.totalorder %s79, %s80
    %p92 = scmp.eq.s32.totalorder %s23, 1
    %p93 = por %p91, %p92
    %p95 = scmp.ne.s32.totalorder %s80, %s94
    %p96 = scmp.eq.s32.totalorder %s23, 0
    %p97 = por %p95, %p96
    %s99 = sadd.s32 %s98, 1
    %p102 = scmp.eq.s32.totalorder %s17, 1
    %p103 = scmp.ne.s32.totalorder %s98, %s100
    %p104 = scmp.eq.s32.totalorder %s17, 0
    %p105 = por %p103, %p104
    %p106 = scmp.ne.s32.totalorder %s98, %s100
    %p107 = scmp.eq.s32.totalorder %s22, 1
    %p108 = por %p106, %p107
    %p109 = scmp.ne.s32.totalorder %s100, %s101
    %p110 = scmp.eq.s32.totalorder %s22, 0
    %p111 = por %p109, %p110
    %p112 = scmp.ne.s32.totalorder %s100, %s101
    %p113 = scmp.eq.s32.totalorder %s23, 1
    %p114 = por %p112, %p113
    %p116 = scmp.ne.s32.totalorder %s101, %s115
    %p117 = scmp.eq.s32.totalorder %s23, 0
    %p118 = por %p116, %p117
    %s120 = sadd.s32 %s119, 1
    %p123 = scmp.eq.s32.totalorder %s17, 1
    %p124 = scmp.ne.s32.totalorder %s119, %s121
    %p125 = scmp.eq.s32.totalorder %s17, 0
    %p126 = por %p124, %p125
    %p127 = scmp.ne.s32.totalorder %s119, %s121
    %p128 = scmp.eq.s32.totalorder %s22, 1
    %p129 = por %p127, %p128
    %p130 = scmp.ne.s32.totalorder %s121, %s122
    %p131 = scmp.eq.s32.totalorder %s22, 0
    %p132 = por %p130, %p131
    %p133 = scmp.ne.s32.totalorder %s121, %s122
    %p134 = scmp.eq.s32.totalorder %s23, 1
    %p135 = por %p133, %p134
    %p137 = scmp.ne.s32.totalorder %s122, %s136
    %p138 = scmp.eq.s32.totalorder %s23, 0
    %p139 = por %p137, %p138
    %s141 = sadd.s32 %s140, 1
    %p144 = scmp.eq.s32.totalorder %s17, 1
    %p145 = scmp.ne.s32.totalorder %s140, %s142
    %p146 = scmp.eq.s32.totalorder %s17, 0
    %p147 = por %p145, %p146
    %p148 = scmp.ne.s32.totalorder %s140, %s142
    %p149 = scmp.eq.s32.totalorder %s22, 1
    %p150 = por %p148, %p149
    %p151 = scmp.ne.s32.totalorder %s142, %s143
    %p152 = scmp.eq.s32.totalorder %s22, 0
    %p153 = por %p151, %p152
    %p154 = scmp.ne.s32.totalorder %s142, %s143
    %p155 = scmp.eq.s32.totalorder %s23, 1
    %p156 = por %p154, %p155
    %p158 = scmp.ne.s32.totalorder %s143, %s157
    %p159 = scmp.eq.s32.totalorder %s23, 0
    %p160 = por %p158, %p159
    %s162 = sadd.s32 %s161, 1
    %p165 = scmp.eq.s32.totalorder %s17, 1
    %p166 = scmp.ne.s32.totalorder %s161, %s163
    %p167 = scmp.eq.s32.totalorder %s17, 0
    %p168 = por %p166, %p167
    %p169 = scmp.ne.s32.totalorder %s161, %s163
    %p170 = scmp.eq.s32.totalorder %s22, 1
    %p171 = por %p169, %p170
    %p172 = scmp.ne.s32.totalorder %s163, %s164
    %p173 = scmp.eq.s32.totalorder %s22, 0
    %p174 = por %p172, %p173
    %p175 = scmp.ne.s32.totalorder %s163, %s164
    %p176 = scmp.eq.s32.totalorder %s23, 1
    %p177 = por %p175, %p176
    %p179 = scmp.ne.s32.totalorder %s164, %s178
    %p180 = scmp.eq.s32.totalorder %s23, 0
    %p181 = por %p179, %p180
    %s183 = sadd.s32 %s182, 1
    %p186 = scmp.eq.s32.totalorder %s17, 1
    %p187 = scmp.ne.s32.totalorder %s182, %s184
    %p188 = scmp.eq.s32.totalorder %s17, 0
    %p189 = por %p187, %p188
    %p190 = scmp.ne.s32.totalorder %s182, %s184
    %p191 = scmp.eq.s32.totalorder %s22, 1
    %p192 = por %p190, %p191
    %p193 = scmp.ne.s32.totalorder %s184, %s185
    %p194 = scmp.eq.s32.totalorder %s22, 0
    %p195 = por %p193, %p194
    %p196 = scmp.ne.s32.totalorder %s184, %s185
    %p197 = scmp.eq.s32.totalorder %s23, 1
    %p198 = por %p196, %p197
    %p200 = scmp.ne.s32.totalorder %s185, %s199
    %p201 = scmp.eq.s32.totalorder %s23, 0
    %p202 = por %p200, %p201
    %s204 = sadd.s32 %s203, 1
    %p207 = scmp.eq.s32.totalorder %s17, 1
    %p208 = scmp.ne.s32.totalorder %s203, %s205
    %p209 = scmp.eq.s32.totalorder %s17, 0
    %p210 = por %p208, %p209
    %p211 = scmp.ne.s32.totalorder %s203, %s205
    %p212 = scmp.eq.s32.totalorder %s22, 1
    %p213 = por %p211, %p212
    %p214 = scmp.ne.s32.totalorder %s205, %s206
    %p215 = scmp.eq.s32.totalorder %s22, 0
    %p216 = por %p214, %p215
    %p217 = scmp.ne.s32.totalorder %s205, %s206
    %p218 = scmp.eq.s32.totalorder %s23, 1
    %p219 = por %p217, %p218
    %p221 = scmp.ne.s32.totalorder %s206, %s220
    %p222 = scmp.eq.s32.totalorder %s23, 0
    %p223 = por %p221, %p222
    %s225 = sadd.s32 %s224, 1
    %p228 = scmp.eq.s32.totalorder %s17, 1
    %p229 = scmp.ne.s32.totalorder %s224, %s226
    %p230 = scmp.eq.s32.totalorder %s17, 0
    %p231 = por %p229, %p230
    %p232 = scmp.ne.s32.totalorder %s224, %s226
    %p233 = scmp.eq.s32.totalorder %s22, 1
    %p234 = por %p232, %p233
    %p235 = scmp.ne.s32.totalorder %s226, %s227
    %p236 = scmp.eq.s32.totalorder %s22, 0
    %p237 = por %p235, %p236
    %p238 = scmp.ne.s32.totalorder %s226, %s227
    %p239 = scmp.eq.s32.totalorder %s23, 1
    %p240 = por %p238, %p239
    %p242 = scmp.ne.s32.totalorder %s227, %s241
    %p243 = scmp.eq.s32.totalorder %s23, 0
    %p244 = por %p242, %p243
    %s246 = sadd.s32 %s245, 1
    %p249 = scmp.eq.s32.totalorder %s17, 1
    %p250 = scmp.ne.s32.totalorder %s245, %s247
    %p251 = scmp.eq.s32.totalorder %s17, 0
    %p252 = por %p250, %p251
    %p253 = scmp.ne.s32.totalorder %s245, %s247
    %p254 = scmp.eq.s32.totalorder %s22, 1
    %p255 = por %p253, %p254
    %p256 = scmp.ne.s32.totalorder %s247, %s248
    %p257 = scmp.eq.s32.totalorder %s22, 0
    %p258 = por %p256, %p257
    %p259 = scmp.ne.s32.totalorder %s247, %s248
    %p260 = scmp.eq.s32.totalorder %s23, 1
    %p261 = por %p259, %p260
    %p263 = scmp.ne.s32.totalorder %s248, %s262
    %p264 = scmp.eq.s32.totalorder %s23, 0
    %p265 = por %p263, %p264
    %s266 = ssub.s32 %s17, %s24
    %p267 = scmp.eq.s32.totalorder %s266, 0
    %s269 = sadd.s32 %s268, 1
    %s270 = scalar_select %p267, %s268, %s269
    %p273 = pneg %p267
    %p274 = scmp.eq.s32.totalorder %s17, 1
    %p275 = por %p273, %p274
    %p276 = scmp.ne.s32.totalorder %s268, %s271
    %p277 = scmp.eq.s32.totalorder %s17, 0
    %p278 = por %p276, %p277
    %p279 = scmp.ne.s32.totalorder %s268, %s271
    %p280 = scmp.eq.s32.totalorder %s22, 1
    %p281 = por %p279, %p280
    %p282 = scmp.ne.s32.totalorder %s271, %s272
    %p283 = scmp.eq.s32.totalorder %s22, 0
    %p284 = por %p282, %p283
    %p285 = scmp.ne.s32.totalorder %s271, %s272
    %p286 = scmp.eq.s32.totalorder %s23, 1
    %p287 = por %p285, %p286
    %p289 = scmp.ne.s32.totalorder %s272, %s288
    %p290 = scmp.eq.s32.totalorder %s23, 0
    %p291 = por %p289, %p290
    %p292 = scmp.le.s32.totalorder 1, %s17
    %p293 = scmp.lt.s32.totalorder %s17, 3
    %p294 = pnand %p292, %p293
    %p295 = pneg %p294
    // Predicated region
    $region9: #{netd_forward.1} parent=5 // pred_check
      _
    $region10: #{netd_forward.1} parent=5 // pred_check_branch
      %297 = sbr.rel (%p294) target = $region12
    $region11: #{netd_forward.1} parent=5 // pred_region
      %s298 = ssub.s32 %s17, 1
      // Predicated region
      $region13: #{netd_forward.1} parent=11 // pred_check
        %p299 = pneg %p90
      $region14: #{netd_forward.1} parent=11 // pred_check_branch
        %301 = sbr.rel (%p299) target = $region16
      $region15: #{netd_forward.1} parent=11 // pred_region
        _
      $region16: #{netd_forward.1} parent=11 // pred_fallthru
        _
      // Predicated region
      $region17: #{netd_forward.1} parent=11 // pred_check
        %p302 = pneg %p111
      $region18: #{netd_forward.1} parent=11 // pred_check_branch
        %304 = sbr.rel (%p302) target = $region20
      $region19: #{netd_forward.1} parent=11 // pred_region
        _
      $region20: #{netd_forward.1} parent=11 // pred_fallthru
        _
      // Predicated region
      $region21: #{netd_forward.1} parent=11 // pred_check
        %p305 = pneg %p132
      $region22: #{netd_forward.1} parent=11 // pred_check_branch
        %307 = sbr.rel (%p305) target = $region24
      $region23: #{netd_forward.1} parent=11 // pred_region
        _
      $region24: #{netd_forward.1} parent=11 // pred_fallthru
        _
      // Predicated region
      $region25: #{netd_forward.1} parent=11 // pred_check
        %p308 = pneg %p153
      $region26: #{netd_forward.1} parent=11 // pred_check_branch
        %310 = sbr.rel (%p308) target = $region28
      $region27: #{netd_forward.1} parent=11 // pred_region
        _
      $region28: #{netd_forward.1} parent=11 // pred_fallthru
        _
      // Predicated region
      $region29: #{netd_forward.1} parent=11 // pred_check
        %p311 = pneg %p174
      $region30: #{netd_forward.1} parent=11 // pred_check_branch
        %313 = sbr.rel (%p311) target = $region32
      $region31: #{netd_forward.1} parent=11 // pred_region
        _
      $region32: #{netd_forward.1} parent=11 // pred_fallthru
        _
      // Predicated region
      $region33: #{netd_forward.1} parent=11 // pred_check
        %p314 = pneg %p195
      $region34: #{netd_forward.1} parent=11 // pred_check_branch
        %316 = sbr.rel (%p314) target = $region36
      $region35: #{netd_forward.1} parent=11 // pred_region
        _
      $region36: #{netd_forward.1} parent=11 // pred_fallthru
        _
      // Predicated region
      $region37: #{netd_forward.1} parent=11 // pred_check
        %p317 = pneg %p216
      $region38: #{netd_forward.1} parent=11 // pred_check_branch
        %319 = sbr.rel (%p317) target = $region40
      $region39: #{netd_forward.1} parent=11 // pred_region
        _
      $region40: #{netd_forward.1} parent=11 // pred_fallthru
        _
      // Predicated region
      $region41: #{netd_forward.1} parent=11 // pred_check
        %p320 = pneg %p237
      $region42: #{netd_forward.1} parent=11 // pred_check_branch
        %322 = sbr.rel (%p320) target = $region44
      $region43: #{netd_forward.1} parent=11 // pred_region
        _
      $region44: #{netd_forward.1} parent=11 // pred_fallthru
        _
      // Predicated region
      $region45: #{netd_forward.1} parent=11 // pred_check
        %p323 = pneg %p258
      $region46: #{netd_forward.1} parent=11 // pred_check_branch
        %325 = sbr.rel (%p323) target = $region48
      $region47: #{netd_forward.1} parent=11 // pred_region
        _
      $region48: #{netd_forward.1} parent=11 // pred_fallthru
        _
    $region12: #{netd_forward.1} parent=5 // pred_fallthru
      _
    %p326 = scmp.lt.s32.totalorder %s17, 2
    // Predicated region
    $region49: #{netd_forward.1} parent=5 // pred_check
      %p327 = pneg %p326
    $region50: #{netd_forward.1} parent=5 // pred_check_branch
      %329 = sbr.rel (%p327) target = $region52
    $region51: #{netd_forward.1} parent=5 // pred_region
      // Predicated region
      $region53: #{netd_forward.1} parent=51 // pred_check
        %p330 = pneg %p37
      $region54: #{netd_forward.1} parent=51 // pred_check_branch
        %332 = sbr.rel (%p330) target = $region56
      $region55: #{netd_forward.1} parent=51 // pred_region
        %p333 = scmp.lt.s32.totalorder %s17, 1
        %s334 = scalar_select %p333, %s17, 1
        %s335 = smul.addr %s334, 20
        %s336 = smul.addr %s335, 4
        %s337 = scalar_lea.vmem %s0, %s336
      $region56: #{netd_forward.1} parent=51 // pred_fallthru
        _
      // Predicated region
      $region57: #{netd_forward.1} parent=51 // pred_check
        %p338 = pneg %p63
      $region58: #{netd_forward.1} parent=51 // pred_check_branch
        %340 = sbr.rel (%p338) target = $region60
      $region59: #{netd_forward.1} parent=51 // pred_region
        %p341 = scmp.lt.s32.totalorder %s17, 1
        %s342 = scalar_select %p341, %s17, 1
        %s343 = scalar_lea.vmem %s1, %s342
      $region60: #{netd_forward.1} parent=51 // pred_fallthru
        _
    $region52: #{netd_forward.1} parent=5 // pred_fallthru
      _
    %p344 = scmp.le.s32.totalorder 1, %s17
    %p345 = scmp.lt.s32.totalorder %s17, 3
    %p346 = pnand %p344, %p345
    %p347 = pneg %p346
    // Predicated region
    $region61: #{netd_forward.1} parent=5 // pred_check
      _
    $region62: #{netd_forward.1} parent=5 // pred_check_branch
      %349 = sbr.rel (%p346) target = $region64
    $region63: #{netd_forward.1} parent=5 // pred_region
      %s350 = ssub.s32 %s17, 1
      %p351 = scmp.lt.s32.totalorder %s22, 1
      %s352 = scalar_select %p351, %s22, 1
      %s353 = smul.addr %s352, 20
      %s354 = smul.addr %s353, 4
      %s355 = scalar_lea.vmem %s0, %s354
      %p356 = pneg %p43
      %p357 = pneg %p40
      %p358 = scmp.lt.s32.totalorder %s22, 1
      %s359 = scalar_select %p358, %s22, 1
      %s360 = scalar_lea.vmem %s1, %s359
      %p361 = pneg %p69
      %p362 = pneg %p66
      %p363 = pneg %p90
      %p364 = pneg %p87
      %p365 = pneg %p111
      %p366 = pneg %p108
      %p367 = pneg %p132
      %p368 = pneg %p129
      %p369 = pneg %p153
      %p370 = pneg %p150
      %p371 = pneg %p174
      %p372 = pneg %p171
      %p373 = pneg %p195
      %p374 = pneg %p192
      %p375 = pneg %p216
      %p376 = pneg %p213
      %p377 = pneg %p237
      %p378 = pneg %p234
      %p379 = pneg %p258
      %p380 = pneg %p255
      %p381 = pneg %p284
      %p382 = pneg %p281
      %p383 = scmp.lt.s32.totalorder %s22, 1
      %s384 = scalar_select %p383, %s22, 1
      %s385 = scalar_lea.vmem %s11, %s384
      %p386 = scmp.lt.s32.totalorder %s22, 1
      %s387 = scalar_select %p386, %s22, 1
      %s388 = smul.addr %s387, 20
      %s389 = smul.addr %s388, 4
      %s390 = scalar_lea.vmem %s0, %s389
      %p391 = scmp.lt.s32.totalorder %s22, 1
      %s392 = scalar_select %p391, %s22, 1
      %s393 = scalar_lea.vmem %s1, %s392
      %p394 = scmp.lt.s32.totalorder %s22, 1
      %s395 = scalar_select %p394, %s22, 1
      %s396 = scalar_lea.vmem %s11, %s395
      %398 = vst [vmem:[#allocation2] sm:$0xff] 0
      %399 = vst [vmem:[#allocation2 + $0x8] sm:$0xff] 0
      %400 = vst [vmem:[#allocation2 + $0x10] sm:$0xff] 0
      %401 = vst [vmem:[#allocation2 + $0x18] sm:$0xff] 0
      %vm402 = vcmask 1040384
      %vm403 = vsmask.f32 256
      %vm404 = vmand %vm402, %vm403
      %vm405 = vcmask 1044484
      %vm406 = vsmask.f32 4352
      %vm407 = vmand %vm405, %vm406
      %vm408 = vmor %vm407, %vm404
      %v409 = vld [vmem:[#allocation2 + $0x20] sm:$0x11]
      %v410 = vsel %vm408, 0, %v409
      %411 = vst [vmem:[#allocation2 + $0x20] sm:$0x11] %v410
      %v412 = vld [vmem:[#allocation2 + $0x28] sm:$0x11]
      %v413 = vsel %vm408, 0, %v412
      %414 = vst [vmem:[#allocation2 + $0x28] sm:$0x11] %v413
      %415 = vst [vmem:[#allocation3] sm:$0xff] 0
      %416 = vst [vmem:[#allocation3 + $0x8] sm:$0xff] 0
      %v417 = vld [vmem:[#allocation3 + $0x10] sm:$0x11]
      %v418 = vsel %vm408, 0, %v417
      %419 = vst [vmem:[#allocation3 + $0x10] sm:$0x11] %v418
      %v420 = vld [vmem:[#allocation3 + $0x18] sm:$0x11]
      %v421 = vsel %vm408, 0, %v420
      %422 = vst [vmem:[#allocation3 + $0x18] sm:$0x11] %v421
      %vm423 = vcmask 1042432
      %vm424 = vsmask.f32 2304
      %vm425 = vmand %vm423, %vm424
      %vm426 = vcmask 1046532
      %vm427 = vsmask.f32 6400
      %vm428 = vmand %vm426, %vm427
      %vm429 = vmor %vm428, %vm425
      %v430 = vld [vmem:[#allocation4] sm:$0x77]
      %v431 = vsel %vm429, 0, %v430
      %432 = vst [vmem:[#allocation4] sm:$0x77] %v431
      %v433 = vld [vmem:[#allocation4 + $0x8] sm:$0x77]
      %v434 = vsel %vm429, 0, %v433
      %435 = vst [vmem:[#allocation4 + $0x8] sm:$0x77] %v434
      %v436 = vld [vmem:[%s390] sm:$0xff]
      %v437 = vld [vmem:[%s390 + $0x8] sm:$0xff]
      %v438 = vld [vmem:[%s390 + $0x10] sm:$0xff]
      %v439 = vld [vmem:[%s390 + $0x18] sm:$0xff]
      %v440 = vld [vmem:[%s390 + $0x20] sm:$0xff]
      %v441 = vld [vmem:[%s390 + $0x28] sm:$0xff]
      %v442 = vld [vmem:[%s390 + $0x30] sm:$0xff]
      %v443 = vld [vmem:[%s390 + $0x38] sm:$0xff]
      %v444 = vld [vmem:[%s390 + $0x40] sm:$0x11]
      %v445 = vld [vmem:[%s390 + $0x48] sm:$0x11]
      %v446 = vld [vmem:[%s2] sm:$0xff]
      %v447 = vld [vmem:[%s2 + $0x8] sm:$0xff]
      %v448 = vld [vmem:[%s2 + $0x10] sm:$0xff]
      %v449 = vld [vmem:[%s2 + $0x18] sm:$0xff]
      %v450 = vld [vmem:[%s2 + $0x20] sm:$0xff]
      %v451 = vld [vmem:[%s2 + $0x28] sm:$0xff]
      %v452 = vld [vmem:[%s2 + $0x30] sm:$0xff]
      %v453 = vld [vmem:[%s2 + $0x38] sm:$0xff]
      %v454 = vld [vmem:[%s2 + $0x40] sm:$0xff]
      %v455 = vld [vmem:[%s2 + $0x48] sm:$0xff]
      %v456 = vld [vmem:[%s2 + $0x50] sm:$0xff]
      %v457 = vld [vmem:[%s2 + $0x58] sm:$0xff]
      %v458 = vld [vmem:[%s2 + $0x60] sm:$0xff]
      %v459 = vld [vmem:[%s2 + $0x68] sm:$0xff]
      %v460 = vld [vmem:[%s2 + $0x70] sm:$0xff]
      %v461 = vld [vmem:[%s2 + $0x78] sm:$0xff]
      %v462 = vld [vmem:[%s2 + $0x80] sm:$0xff]
      %v463 = vld [vmem:[%s2 + $0x88] sm:$0xff]
      %v464 = vld [vmem:[%s2 + $0x90] sm:$0xff]
      %v465 = vld [vmem:[%s2 + $0x98] sm:$0xff]
      %v466 = vld [vmem:[%s2 + $0xa0] sm:$0xff]
      %v467 = vld [vmem:[%s2 + $0xa8] sm:$0xff]
      %v468 = vld [vmem:[%s2 + $0xb0] sm:$0xff]
      %v469 = vld [vmem:[%s2 + $0xb8] sm:$0xff]
      %v470 = vld [vmem:[%s2 + $0xc0] sm:$0xff]
      %v471 = vld [vmem:[%s2 + $0xc8] sm:$0xff]
      %v472 = vld [vmem:[%s2 + $0xd0] sm:$0xff]
      %v473 = vld [vmem:[%s2 + $0xd8] sm:$0xff]
      %v474 = vld [vmem:[%s2 + $0xe0] sm:$0xff]
      %v475 = vld [vmem:[%s2 + $0xe8] sm:$0xff]
      %v476 = vld [vmem:[%s2 + $0xf0] sm:$0xff]
      %v477 = vld [vmem:[%s2 + $0xf8] sm:$0xff]
      %v478 = vld [vmem:[%s2 + $0x100] sm:$0xff]
      %v479 = vld [vmem:[%s2 + $0x108] sm:$0xff]
      %v480 = vld [vmem:[%s2 + $0x110] sm:$0xff]
      %v481 = vld [vmem:[%s2 + $0x118] sm:$0xff]
      %v482 = vld [vmem:[%s2 + $0x120] sm:$0xff]
      %v483 = vld [vmem:[%s2 + $0x128] sm:$0xff]
      %v484 = vld [vmem:[%s2 + $0x130] sm:$0xff]
      %v485 = vld [vmem:[%s2 + $0x138] sm:$0xff]
      %v486 = vld [vmem:[%s2 + $0x140] sm:$0xff]
      %v487 = vld [vmem:[%s2 + $0x148] sm:$0xff]
      %v488 = vld [vmem:[%s2 + $0x150] sm:$0xff]
      %v489 = vld [vmem:[%s2 + $0x158] sm:$0xff]
      %v490 = vld [vmem:[%s2 + $0x160] sm:$0xff]
      %v491 = vld [vmem:[%s2 + $0x168] sm:$0xff]
      %v492 = vld [vmem:[%s2 + $0x170] sm:$0xff]
      %v493 = vld [vmem:[%s2 + $0x178] sm:$0xff]
      %v494 = vld [vmem:[%s2 + $0x180] sm:$0xff]
      %v495 = vld [vmem:[%s2 + $0x188] sm:$0xff]
      %v496 = vld [vmem:[%s2 + $0x190] sm:$0xff]
      %v497 = vld [vmem:[%s2 + $0x198] sm:$0xff]
      %v498 = vld [vmem:[%s2 + $0x1a0] sm:$0xff]
      %v499 = vld [vmem:[%s2 + $0x1a8] sm:$0xff]
      %v500 = vld [vmem:[%s2 + $0x1b0] sm:$0xff]
      %v501 = vld [vmem:[%s2 + $0x1b8] sm:$0xff]
      %v502 = vld [vmem:[%s2 + $0x1c0] sm:$0xff]
      %v503 = vld [vmem:[%s2 + $0x1c8] sm:$0xff]
      %v504 = vld [vmem:[%s2 + $0x1d0] sm:$0xff]
      %v505 = vld [vmem:[%s2 + $0x1d8] sm:$0xff]
      %v506 = vld [vmem:[%s2 + $0x1e0] sm:$0xff]
      %v507 = vld [vmem:[%s2 + $0x1e8] sm:$0xff]
      %v508 = vld [vmem:[%s2 + $0x1f0] sm:$0xff]
      %v509 = vld [vmem:[%s2 + $0x1f8] sm:$0xff]
      %s510 = scalar_lea.vmem %s2, 512
      %v511 = vld [vmem:[%s510] sm:$0xff]
      %v512 = vld [vmem:[%s510 + $0x8] sm:$0xff]
      %v513 = vld [vmem:[%s510 + $0x10] sm:$0xff]
      %v514 = vld [vmem:[%s510 + $0x18] sm:$0xff]
      %v515 = vld [vmem:[%s510 + $0x20] sm:$0xff]
      %v516 = vld [vmem:[%s510 + $0x28] sm:$0xff]
      %v517 = vld [vmem:[%s510 + $0x30] sm:$0xff]
      %v518 = vld [vmem:[%s510 + $0x38] sm:$0xff]
      %v519 = vld [vmem:[%s510 + $0x40] sm:$0xff]
      %v520 = vld [vmem:[%s510 + $0x48] sm:$0xff]
      %v521 = vld [vmem:[%s510 + $0x50] sm:$0xff]
      %v522 = vld [vmem:[%s510 + $0x58] sm:$0xff]
      %v523 = vld [vmem:[%s510 + $0x60] sm:$0xff]
      %v524 = vld [vmem:[%s510 + $0x68] sm:$0xff]
      %v525 = vld [vmem:[%s510 + $0x70] sm:$0xff]
      %v526 = vld [vmem:[%s510 + $0x78] sm:$0xff]
      %v527 = vld [vmem:[%s510 + $0x80] sm:$0xff]
      %v528 = vld [vmem:[%s510 + $0x88] sm:$0xff]
      %v529 = vld [vmem:[%s510 + $0x90] sm:$0xff]
      %v530 = vld [vmem:[%s510 + $0x98] sm:$0xff]
      %v531 = vld [vmem:[%s510 + $0xa0] sm:$0xff]
      %v532 = vld [vmem:[%s510 + $0xa8] sm:$0xff]
      %v533 = vld [vmem:[%s510 + $0xb0] sm:$0xff]
      %v534 = vld [vmem:[%s510 + $0xb8] sm:$0xff]
      %v535 = vld [vmem:[%s510 + $0xc0] sm:$0xff]
      %v536 = vld [vmem:[%s510 + $0xc8] sm:$0xff]
      %v537 = vld [vmem:[%s510 + $0xd0] sm:$0xff]
      %v538 = vld [vmem:[%s510 + $0xd8] sm:$0xff]
      %v539 = vld [vmem:[%s510 + $0xe0] sm:$0xff]
      %v540 = vld [vmem:[%s510 + $0xe8] sm:$0xff]
      %v541 = vld [vmem:[%s510 + $0xf0] sm:$0xff]
      %v542 = vld [vmem:[%s510 + $0xf8] sm:$0xff]
      %v543 = vld [vmem:[%s510 + $0x100] sm:$0xff]
      %v544 = vld [vmem:[%s510 + $0x108] sm:$0xff]
      %v545 = vld [vmem:[%s510 + $0x110] sm:$0xff]
      %v546 = vld [vmem:[%s510 + $0x118] sm:$0xff]
      %v547 = vld [vmem:[%s510 + $0x120] sm:$0xff]
      %v548 = vld [vmem:[%s510 + $0x128] sm:$0xff]
      %v549 = vld [vmem:[%s510 + $0x130] sm:$0xff]
      %v550 = vld [vmem:[%s510 + $0x138] sm:$0xff]
      %v551 = vld [vmem:[%s510 + $0x140] sm:$0xff]
      %v552 = vld [vmem:[%s510 + $0x148] sm:$0xff]
      %v553 = vld [vmem:[%s510 + $0x150] sm:$0xff]
      %v554 = vld [vmem:[%s510 + $0x158] sm:$0xff]
      %v555 = vld [vmem:[%s510 + $0x160] sm:$0xff]
      %v556 = vld [vmem:[%s510 + $0x168] sm:$0xff]
      %v557 = vld [vmem:[%s510 + $0x170] sm:$0xff]
      %v558 = vld [vmem:[%s510 + $0x178] sm:$0xff]
      %v559 = vld [vmem:[%s510 + $0x180] sm:$0xff]
      %v560 = vld [vmem:[%s510 + $0x188] sm:$0xff]
      %v561 = vld [vmem:[%s510 + $0x190] sm:$0xff]
      %v562 = vld [vmem:[%s510 + $0x198] sm:$0xff]
      %v563 = vld [vmem:[%s510 + $0x1a0] sm:$0xff]
      %v564 = vld [vmem:[%s510 + $0x1a8] sm:$0xff]
      %v565 = vld [vmem:[%s510 + $0x1b0] sm:$0xff]
      %v566 = vld [vmem:[%s510 + $0x1b8] sm:$0xff]
      %v567 = vld [vmem:[%s510 + $0x1c0] sm:$0xff]
      %v568 = vld [vmem:[%s510 + $0x1c8] sm:$0xff]
      %v569 = vld [vmem:[%s510 + $0x1d0] sm:$0xff]
      %v570 = vld [vmem:[%s510 + $0x1d8] sm:$0xff]
      %v571 = vld [vmem:[%s510 + $0x1e0] sm:$0xff]
      %v572 = vld [vmem:[%s510 + $0x1e8] sm:$0xff]
      %v573 = vld [vmem:[%s510 + $0x1f0] sm:$0xff]
      %v574 = vld [vmem:[%s510 + $0x1f8] sm:$0xff]
      %v585 = vunpack.c.l.b16 %v436
      %v586 = vunpack.c.h.b16 %v436
      %v587 = vunpack.c.l.b16 %v437
      %v588 = vunpack.c.h.b16 %v437
      %v589 = vunpack.c.l.b16 %v438
      %v590 = vunpack.c.h.b16 %v438
      %v591 = vunpack.c.l.b16 %v439
      %v592 = vunpack.c.h.b16 %v439
      %v593 = vunpack.c.l.b16 %v440
      %v594 = vunpack.c.h.b16 %v440
      %v595 = vunpack.c.l.b16 %v441
      %v596 = vunpack.c.h.b16 %v441
      %v597 = vunpack.c.l.b16 %v442
      %v598 = vunpack.c.h.b16 %v442
      %v599 = vunpack.c.l.b16 %v443
      %v600 = vunpack.c.h.b16 %v443
      %v601 = vunpack.c.l.b16 %v444
      %v602 = vunpack.c.h.b16 %v444
      %v603 = vunpack.c.l.b16 %v445
      %v604 = vunpack.c.h.b16 %v445
      %v605 = vpack.c.b16 %v589, %v585
      %v606 = vpack.c.b16 %v590, %v586
      %v607 = vpack.c.b16 %v591, %v587
      %v608 = vpack.c.b16 %v592, %v588
      %v609 = vpack.c.b16 %v597, %v593
      %v610 = vpack.c.b16 %v598, %v594
      %v611 = vpack.c.b16 %v599, %v595
      %v612 = vpack.c.b16 %v600, %v596
      %v613 = vpack.c.b16 %v601, %v601
      %v614 = vpack.c.b16 %v602, %v602
      %v615 = vpack.c.b16 %v603, %v603
      %v616 = vpack.c.b16 %v604, %v604
      %vm617 = vsmask.f32 7424
      %v619 = vshrl.u32 %v605, 16
      %v621 = vshll.u32 %v605, 16
      %v623 = vrot.slane %v621, 1
      %v624 = vor.u32 %v619, %v623
      %v626 = vshll.u32 %v609, 16
      %v628 = vrot.slane %v626, 1
      %v629 = vsel %vm617, %v624, %v628
      %v631 = vshrl.u32 %v606, 16
      %v633 = vshll.u32 %v606, 16
      %v635 = vrot.slane %v633, 1
      %v636 = vor.u32 %v631, %v635
      %v638 = vshll.u32 %v610, 16
      %v640 = vrot.slane %v638, 1
      %v641 = vsel %vm617, %v636, %v640
      %v643 = vshrl.u32 %v607, 16
      %v645 = vshll.u32 %v607, 16
      %v647 = vrot.slane %v645, 1
      %v648 = vor.u32 %v643, %v647
      %v650 = vshll.u32 %v611, 16
      %v652 = vrot.slane %v650, 1
      %v653 = vsel %vm617, %v648, %v652
      %v655 = vshrl.u32 %v608, 16
      %v657 = vshll.u32 %v608, 16
      %v659 = vrot.slane %v657, 1
      %v660 = vor.u32 %v655, %v659
      %v662 = vshll.u32 %v612, 16
      %v664 = vrot.slane %v662, 1
      %v665 = vsel %vm617, %v660, %v664
      %v666 = vshrl.u32 %v609, 16
      %v668 = vor.u32 %v666, %v628
      %v670 = vshll.u32 %v613, 16
      %v672 = vrot.slane %v670, 1
      %v673 = vsel %vm617, %v668, %v672
      %v674 = vshrl.u32 %v610, 16
      %v676 = vor.u32 %v674, %v640
      %v678 = vshll.u32 %v614, 16
      %v680 = vrot.slane %v678, 1
      %v681 = vsel %vm617, %v676, %v680
      %v682 = vshrl.u32 %v611, 16
      %v684 = vor.u32 %v682, %v652
      %v686 = vshll.u32 %v615, 16
      %v688 = vrot.slane %v686, 1
      %v689 = vsel %vm617, %v684, %v688
      %v690 = vshrl.u32 %v612, 16
      %v692 = vor.u32 %v690, %v664
      %v694 = vshll.u32 %v616, 16
      %v696 = vrot.slane %v694, 1
      %v697 = vsel %vm617, %v692, %v696
      %v770 = vunpack.c.l.b16 %v511
      %v771 = vunpack.c.h.b16 %v511
      %v772 = vunpack.c.l.b16 %v512
      %v773 = vunpack.c.h.b16 %v512
      %v774 = vunpack.c.l.b16 %v513
      %v775 = vunpack.c.h.b16 %v513
      %v776 = vunpack.c.l.b16 %v514
      %v777 = vunpack.c.h.b16 %v514
      %v778 = vunpack.c.l.b16 %v515
      %v779 = vunpack.c.h.b16 %v515
      %v780 = vunpack.c.l.b16 %v516
      %v781 = vunpack.c.h.b16 %v516
      %v782 = vunpack.c.l.b16 %v517
      %v783 = vunpack.c.h.b16 %v517
      %v784 = vunpack.c.l.b16 %v518
      %v785 = vunpack.c.h.b16 %v518
      %v786 = vunpack.c.l.b16 %v519
      %v787 = vunpack.c.h.b16 %v519
      %v788 = vunpack.c.l.b16 %v520
      %v789 = vunpack.c.h.b16 %v520
      %v790 = vunpack.c.l.b16 %v521
      %v791 = vunpack.c.h.b16 %v521
      %v792 = vunpack.c.l.b16 %v522
      %v793 = vunpack.c.h.b16 %v522
      %v794 = vunpack.c.l.b16 %v523
      %v795 = vunpack.c.h.b16 %v523
      %v796 = vunpack.c.l.b16 %v524
      %v797 = vunpack.c.h.b16 %v524
      %v798 = vunpack.c.l.b16 %v525
      %v799 = vunpack.c.h.b16 %v525
      %v800 = vunpack.c.l.b16 %v526
      %v801 = vunpack.c.h.b16 %v526
      %v802 = vunpack.c.l.b16 %v527
      %v803 = vunpack.c.h.b16 %v527
      %v804 = vunpack.c.l.b16 %v528
      %v805 = vunpack.c.h.b16 %v528
      %v806 = vunpack.c.l.b16 %v529
      %v807 = vunpack.c.h.b16 %v529
      %v808 = vunpack.c.l.b16 %v530
      %v809 = vunpack.c.h.b16 %v530
      %v810 = vunpack.c.l.b16 %v531
      %v811 = vunpack.c.h.b16 %v531
      %v812 = vunpack.c.l.b16 %v532
      %v813 = vunpack.c.h.b16 %v532
      %v814 = vunpack.c.l.b16 %v533
      %v815 = vunpack.c.h.b16 %v533
      %v816 = vunpack.c.l.b16 %v534
      %v817 = vunpack.c.h.b16 %v534
      %v818 = vunpack.c.l.b16 %v535
      %v819 = vunpack.c.h.b16 %v535
      %v820 = vunpack.c.l.b16 %v536
      %v821 = vunpack.c.h.b16 %v536
      %v822 = vunpack.c.l.b16 %v537
      %v823 = vunpack.c.h.b16 %v537
      %v824 = vunpack.c.l.b16 %v538
      %v825 = vunpack.c.h.b16 %v538
      %v826 = vunpack.c.l.b16 %v539
      %v827 = vunpack.c.h.b16 %v539
      %v828 = vunpack.c.l.b16 %v540
      %v829 = vunpack.c.h.b16 %v540
      %v830 = vunpack.c.l.b16 %v541
      %v831 = vunpack.c.h.b16 %v541
      %v832 = vunpack.c.l.b16 %v542
      %v833 = vunpack.c.h.b16 %v542
      %v834 = vunpack.c.l.b16 %v543
      %v835 = vunpack.c.h.b16 %v543
      %v836 = vunpack.c.l.b16 %v544
      %v837 = vunpack.c.h.b16 %v544
      %v838 = vunpack.c.l.b16 %v545
      %v839 = vunpack.c.h.b16 %v545
      %v840 = vunpack.c.l.b16 %v546
      %v841 = vunpack.c.h.b16 %v546
      %v842 = vunpack.c.l.b16 %v547
      %v843 = vunpack.c.h.b16 %v547
      %v844 = vunpack.c.l.b16 %v548
      %v845 = vunpack.c.h.b16 %v548
      %v846 = vunpack.c.l.b16 %v549
      %v847 = vunpack.c.h.b16 %v549
      %v848 = vunpack.c.l.b16 %v550
      %v849 = vunpack.c.h.b16 %v550
      %v850 = vunpack.c.l.b16 %v551
      %v851 = vunpack.c.h.b16 %v551
      %v852 = vunpack.c.l.b16 %v552
      %v853 = vunpack.c.h.b16 %v552
      %v854 = vunpack.c.l.b16 %v553
      %v855 = vunpack.c.h.b16 %v553
      %v856 = vunpack.c.l.b16 %v554
      %v857 = vunpack.c.h.b16 %v554
      %v858 = vunpack.c.l.b16 %v555
      %v859 = vunpack.c.h.b16 %v555
      %v860 = vunpack.c.l.b16 %v556
      %v861 = vunpack.c.h.b16 %v556
      %v862 = vunpack.c.l.b16 %v557
      %v863 = vunpack.c.h.b16 %v557
      %v864 = vunpack.c.l.b16 %v558
      %v865 = vunpack.c.h.b16 %v558
      %v866 = vunpack.c.l.b16 %v559
      %v867 = vunpack.c.h.b16 %v559
      %v868 = vunpack.c.l.b16 %v560
      %v869 = vunpack.c.h.b16 %v560
      %v870 = vunpack.c.l.b16 %v561
      %v871 = vunpack.c.h.b16 %v561
      %v872 = vunpack.c.l.b16 %v562
      %v873 = vunpack.c.h.b16 %v562
      %v874 = vunpack.c.l.b16 %v563
      %v875 = vunpack.c.h.b16 %v563
      %v876 = vunpack.c.l.b16 %v564
      %v877 = vunpack.c.h.b16 %v564
      %v878 = vunpack.c.l.b16 %v565
      %v879 = vunpack.c.h.b16 %v565
      %v880 = vunpack.c.l.b16 %v566
      %v881 = vunpack.c.h.b16 %v566
      %v882 = vunpack.c.l.b16 %v567
      %v883 = vunpack.c.h.b16 %v567
      %v884 = vunpack.c.l.b16 %v568
      %v885 = vunpack.c.h.b16 %v568
      %v886 = vunpack.c.l.b16 %v569
      %v887 = vunpack.c.h.b16 %v569
      %v888 = vunpack.c.l.b16 %v570
      %v889 = vunpack.c.h.b16 %v570
      %v890 = vunpack.c.l.b16 %v571
      %v891 = vunpack.c.h.b16 %v571
      %v892 = vunpack.c.l.b16 %v572
      %v893 = vunpack.c.h.b16 %v572
      %v894 = vunpack.c.l.b16 %v573
      %v895 = vunpack.c.h.b16 %v573
      %v896 = vunpack.c.l.b16 %v574
      %v897 = vunpack.c.h.b16 %v574
      %v898 = vpack.c.b16 %v772, %v770
      %v899 = vpack.c.b16 %v773, %v771
      %v900 = vpack.c.b16 %v776, %v774
      %v901 = vpack.c.b16 %v777, %v775
      %v902 = vpack.c.b16 %v780, %v778
      %v903 = vpack.c.b16 %v781, %v779
      %v904 = vpack.c.b16 %v784, %v782
      %v905 = vpack.c.b16 %v785, %v783
      %v906 = vpack.c.b16 %v788, %v786
      %v907 = vpack.c.b16 %v789, %v787
      %v908 = vpack.c.b16 %v792, %v790
      %v909 = vpack.c.b16 %v793, %v791
      %v910 = vpack.c.b16 %v796, %v794
      %v911 = vpack.c.b16 %v797, %v795
      %v912 = vpack.c.b16 %v800, %v798
      %v913 = vpack.c.b16 %v801, %v799
      %v914 = vpack.c.b16 %v804, %v802
      %v915 = vpack.c.b16 %v805, %v803
      %v916 = vpack.c.b16 %v808, %v806
      %v917 = vpack.c.b16 %v809, %v807
      %v918 = vpack.c.b16 %v812, %v810
      %v919 = vpack.c.b16 %v813, %v811
      %v920 = vpack.c.b16 %v816, %v814
      %v921 = vpack.c.b16 %v817, %v815
      %v922 = vpack.c.b16 %v820, %v818
      %v923 = vpack.c.b16 %v821, %v819
      %v924 = vpack.c.b16 %v824, %v822
      %v925 = vpack.c.b16 %v825, %v823
      %v926 = vpack.c.b16 %v828, %v826
      %v927 = vpack.c.b16 %v829, %v827
      %v928 = vpack.c.b16 %v832, %v830
      %v929 = vpack.c.b16 %v833, %v831
      %v930 = vpack.c.b16 %v836, %v834
      %v931 = vpack.c.b16 %v837, %v835
      %v932 = vpack.c.b16 %v840, %v838
      %v933 = vpack.c.b16 %v841, %v839
      %v934 = vpack.c.b16 %v844, %v842
      %v935 = vpack.c.b16 %v845, %v843
      %v936 = vpack.c.b16 %v848, %v846
      %v937 = vpack.c.b16 %v849, %v847
      %v938 = vpack.c.b16 %v852, %v850
      %v939 = vpack.c.b16 %v853, %v851
      %v940 = vpack.c.b16 %v856, %v854
      %v941 = vpack.c.b16 %v857, %v855
      %v942 = vpack.c.b16 %v860, %v858
      %v943 = vpack.c.b16 %v861, %v859
      %v944 = vpack.c.b16 %v864, %v862
      %v945 = vpack.c.b16 %v865, %v863
      %v946 = vpack.c.b16 %v868, %v866
      %v947 = vpack.c.b16 %v869, %v867
      %v948 = vpack.c.b16 %v872, %v870
      %v949 = vpack.c.b16 %v873, %v871
      %v950 = vpack.c.b16 %v876, %v874
      %v951 = vpack.c.b16 %v877, %v875
      %v952 = vpack.c.b16 %v880, %v878
      %v953 = vpack.c.b16 %v881, %v879
      %v954 = vpack.c.b16 %v884, %v882
      %v955 = vpack.c.b16 %v885, %v883
      %v956 = vpack.c.b16 %v888, %v886
      %v957 = vpack.c.b16 %v889, %v887
      %v958 = vpack.c.b16 %v892, %v890
      %v959 = vpack.c.b16 %v893, %v891
      %v960 = vpack.c.b16 %v896, %v894
      %v961 = vpack.c.b16 %v897, %v895
      %1026 = vmatprep.subr.bf16.mxu0 %v899
      %1027 = vmatpush1.bf16.msra.mxu0 %v898
      %1028 = vmatprep.subr.bf16.mxu0 %v901
      %1029 = vmatpush1.bf16.msra.mxu0 %v900
      %1030 = vmatprep.subr.bf16.mxu0 %v903
      %1031 = vmatpush1.bf16.msra.mxu0 %v902
      %1032 = vmatprep.subr.bf16.mxu0 %v905
      %1033 = vmatpush1.bf16.msra.mxu0 %v904
      %1034 = vmatprep.subr.bf16.mxu0 %v907
      %1035 = vmatpush1.bf16.msra.mxu0 %v906
      %1036 = vmatprep.subr.bf16.mxu0 %v909
      %1037 = vmatpush1.bf16.msra.mxu0 %v908
      %1038 = vmatprep.subr.bf16.mxu0 %v911
      %1039 = vmatpush1.bf16.msra.mxu0 %v910
      %1040 = vmatprep.subr.bf16.mxu0 %v913
      %1041 = vmatpush1.bf16.msra.mxu0 %v912
      %1042 = vmatprep.subr.bf16.mxu0 %v915
      %1043 = vmatpush1.bf16.msra.mxu0 %v914
      %1044 = vmatprep.subr.bf16.mxu0 %v917
      %1045 = vmatpush1.bf16.msra.mxu0 %v916
      %1046 = vmatprep.subr.bf16.mxu0 %v919
      %1047 = vmatpush1.bf16.msra.mxu0 %v918
      %1048 = vmatprep.subr.bf16.mxu0 %v921
      %1049 = vmatpush1.bf16.msra.mxu0 %v920
      %1050 = vmatprep.subr.bf16.mxu0 %v923
      %1051 = vmatpush1.bf16.msra.mxu0 %v922
      %1052 = vmatprep.subr.bf16.mxu0 %v925
      %1053 = vmatpush1.bf16.msra.mxu0 %v924
      %1054 = vmatprep.subr.bf16.mxu0 %v927
      %1055 = vmatpush1.bf16.msra.mxu0 %v926
      %1056 = vmatprep.subr.bf16.mxu0 %v929
      %1057 = vmatpush1.bf16.msra.mxu0 %v928
      %1058 = vmatprep.mubr.bf16.mxu0 %v641
      %1059 = vmatmul.mubr.bf16.gmra.mrb[0].mxu0 %v629
      %v1060 = vpop.f32.mrb[0].mxu0
      %v1061 = vadd.f32 0.0, %v1060
      %v1062 = vpop.f32.mrb[0].mxu0
      %v1063 = vadd.f32 0.0, %v1062
      %v1064 = vpop.f32.mrb[0].mxu0
      %v1065 = vadd.f32 0.0, %v1064
      %v1066 = vpop.f32.mrb[0].mxu0
      %v1067 = vadd.f32 0.0, %v1066
      %1068 = vmatprep.mubr.bf16.mxu0 %v681
      %1069 = vmatmul.mubr.bf16.gmra.mrb[0].mxu0 %v673
      %v1070 = vpop.f32.mrb[0].mxu0
      %v1071 = vadd.f32 0.0, %v1070
      %v1072 = vpop.f32.mrb[0].mxu0
      %v1073 = vadd.f32 0.0, %v1072
      %v1074 = vpop.f32.mrb[0].mxu0
      %v1075 = vadd.f32 0.0, %v1074
      %v1076 = vpop.f32.mrb[0].mxu0
      %v1077 = vadd.f32 0.0, %v1076
      %1078 = vdwg.mxu0
      %1079 = vmatprep.subr.bf16.mxu0 %v931
      %1080 = vmatpush1.bf16.msra.mxu0 %v930
      %1081 = vmatprep.subr.bf16.mxu0 %v933
      %1082 = vmatpush1.bf16.msra.mxu0 %v932
      %1083 = vmatprep.subr.bf16.mxu0 %v935
      %1084 = vmatpush1.bf16.msra.mxu0 %v934
      %1085 = vmatprep.subr.bf16.mxu0 %v937
      %1086 = vmatpush1.bf16.msra.mxu0 %v936
      %1087 = vmatprep.subr.bf16.mxu0 %v939
      %1088 = vmatpush1.bf16.msra.mxu0 %v938
      %1089 = vmatprep.subr.bf16.mxu0 %v941
      %1090 = vmatpush1.bf16.msra.mxu0 %v940
      %1091 = vmatprep.subr.bf16.mxu0 %v943
      %1092 = vmatpush1.bf16.msra.mxu0 %v942
      %1093 = vmatprep.subr.bf16.mxu0 %v945
      %1094 = vmatpush1.bf16.msra.mxu0 %v944
      %1095 = vmatprep.subr.bf16.mxu0 %v947
      %1096 = vmatpush1.bf16.msra.mxu0 %v946
      %1097 = vmatprep.subr.bf16.mxu0 %v949
      %1098 = vmatpush1.bf16.msra.mxu0 %v948
      %1099 = vmatprep.subr.bf16.mxu0 %v951
      %1100 = vmatpush1.bf16.msra.mxu0 %v950
      %1101 = vmatprep.subr.bf16.mxu0 %v953
      %1102 = vmatpush1.bf16.msra.mxu0 %v952
      %1103 = vmatprep.subr.bf16.mxu0 %v955
      %1104 = vmatpush1.bf16.msra.mxu0 %v954
      %1105 = vmatprep.subr.bf16.mxu0 %v957
      %1106 = vmatpush1.bf16.msra.mxu0 %v956
      %1107 = vmatprep.subr.bf16.mxu0 %v959
      %1108 = vmatpush1.bf16.msra.mxu0 %v958
      %1109 = vmatprep.subr.bf16.mxu0 %v961
      %1110 = vmatpush1.bf16.msra.mxu0 %v960
      %1111 = vmatprep.mubr.bf16.mxu0 %v665
      %1112 = vmatmul.mubr.bf16.gmra.mrb[0].mxu0 %v653
      %v1113 = vpop.f32.mrb[0].mxu0
      %v1114 = vadd.f32 %v1061, %v1113
      %v1115 = vpop.f32.mrb[0].mxu0
      %v1116 = vadd.f32 %v1063, %v1115
      %v1117 = vpop.f32.mrb[0].mxu0
      %v1118 = vadd.f32 %v1065, %v1117
      %v1119 = vpop.f32.mrb[0].mxu0
      %v1120 = vadd.f32 %v1067, %v1119
      %1121 = vmatprep.mubr.bf16.mxu0 %v697
      %1122 = vmatmul.mubr.bf16.gmra.mrb[0].mxu0 %v689
      %v1123 = vpop.f32.mrb[0].mxu0
      %v1124 = vadd.f32 %v1071, %v1123
      %v1125 = vpop.f32.mrb[0].mxu0
      %v1126 = vadd.f32 %v1073, %v1125
      %v1127 = vpop.f32.mrb[0].mxu0
      %v1128 = vadd.f32 %v1075, %v1127
      %v1129 = vpop.f32.mrb[0].mxu0
      %v1130 = vadd.f32 %v1077, %v1129
      %1131 = vdwg.mxu0
      %v1204 = vunpack.c.l.b16 %v446
      %v1205 = vunpack.c.h.b16 %v446
      %v1206 = vunpack.c.l.b16 %v447
      %v1207 = vunpack.c.h.b16 %v447
      %v1208 = vunpack.c.l.b16 %v448
      %v1209 = vunpack.c.h.b16 %v448
      %v1210 = vunpack.c.l.b16 %v449
      %v1211 = vunpack.c.h.b16 %v449
      %v1212 = vunpack.c.l.b16 %v450
      %v1213 = vunpack.c.h.b16 %v450
      %v1214 = vunpack.c.l.b16 %v451
      %v1215 = vunpack.c.h.b16 %v451
      %v1216 = vunpack.c.l.b16 %v452
      %v1217 = vunpack.c.h.b16 %v452
      %v1218 = vunpack.c.l.b16 %v453
      %v1219 = vunpack.c.h.b16 %v453
      %v1220 = vunpack.c.l.b16 %v454
      %v1221 = vunpack.c.h.b16 %v454
      %v1222 = vunpack.c.l.b16 %v455
      %v1223 = vunpack.c.h.b16 %v455
      %v1224 = vunpack.c.l.b16 %v456
      %v1225 = vunpack.c.h.b16 %v456
      %v1226 = vunpack.c.l.b16 %v457
      %v1227 = vunpack.c.h.b16 %v457
      %v1228 = vunpack.c.l.b16 %v458
      %v1229 = vunpack.c.h.b16 %v458
      %v1230 = vunpack.c.l.b16 %v459
      %v1231 = vunpack.c.h.b16 %v459
      %v1232 = vunpack.c.l.b16 %v460
      %v1233 = vunpack.c.h.b16 %v460
      %v1234 = vunpack.c.l.b16 %v461
      %v1235 = vunpack.c.h.b16 %v461
      %v1236 = vunpack.c.l.b16 %v462
      %v1237 = vunpack.c.h.b16 %v462
      %v1238 = vunpack.c.l.b16 %v463
      %v1239 = vunpack.c.h.b16 %v463
      %v1240 = vunpack.c.l.b16 %v464
      %v1241 = vunpack.c.h.b16 %v464
      %v1242 = vunpack.c.l.b16 %v465
      %v1243 = vunpack.c.h.b16 %v465
      %v1244 = vunpack.c.l.b16 %v466
      %v1245 = vunpack.c.h.b16 %v466
      %v1246 = vunpack.c.l.b16 %v467
      %v1247 = vunpack.c.h.b16 %v467
      %v1248 = vunpack.c.l.b16 %v468
      %v1249 = vunpack.c.h.b16 %v468
      %v1250 = vunpack.c.l.b16 %v469
      %v1251 = vunpack.c.h.b16 %v469
      %v1252 = vunpack.c.l.b16 %v470
      %v1253 = vunpack.c.h.b16 %v470
      %v1254 = vunpack.c.l.b16 %v471
      %v1255 = vunpack.c.h.b16 %v471
      %v1256 = vunpack.c.l.b16 %v472
      %v1257 = vunpack.c.h.b16 %v472
      %v1258 = vunpack.c.l.b16 %v473
      %v1259 = vunpack.c.h.b16 %v473
      %v1260 = vunpack.c.l.b16 %v474
      %v1261 = vunpack.c.h.b16 %v474
      %v1262 = vunpack.c.l.b16 %v475
      %v1263 = vunpack.c.h.b16 %v475
      %v1264 = vunpack.c.l.b16 %v476
      %v1265 = vunpack.c.h.b16 %v476
      %v1266 = vunpack.c.l.b16 %v477
      %v1267 = vunpack.c.h.b16 %v477
      %v1268 = vunpack.c.l.b16 %v478
      %v1269 = vunpack.c.h.b16 %v478
      %v1270 = vunpack.c.l.b16 %v479
      %v1271 = vunpack.c.h.b16 %v479
      %v1272 = vunpack.c.l.b16 %v480
      %v1273 = vunpack.c.h.b16 %v480
      %v1274 = vunpack.c.l.b16 %v481
      %v1275 = vunpack.c.h.b16 %v481
      %v1276 = vunpack.c.l.b16 %v482
      %v1277 = vunpack.c.h.b16 %v482
      %v1278 = vunpack.c.l.b16 %v483
      %v1279 = vunpack.c.h.b16 %v483
      %v1280 = vunpack.c.l.b16 %v484
      %v1281 = vunpack.c.h.b16 %v484
      %v1282 = vunpack.c.l.b16 %v485
      %v1283 = vunpack.c.h.b16 %v485
      %v1284 = vunpack.c.l.b16 %v486
      %v1285 = vunpack.c.h.b16 %v486
      %v1286 = vunpack.c.l.b16 %v487
      %v1287 = vunpack.c.h.b16 %v487
      %v1288 = vunpack.c.l.b16 %v488
      %v1289 = vunpack.c.h.b16 %v488
      %v1290 = vunpack.c.l.b16 %v489
      %v1291 = vunpack.c.h.b16 %v489
      %v1292 = vunpack.c.l.b16 %v490
      %v1293 = vunpack.c.h.b16 %v490
      %v1294 = vunpack.c.l.b16 %v491
      %v1295 = vunpack.c.h.b16 %v491
      %v1296 = vunpack.c.l.b16 %v492
      %v1297 = vunpack.c.h.b16 %v492
      %v1298 = vunpack.c.l.b16 %v493
      %v1299 = vunpack.c.h.b16 %v493
      %v1300 = vunpack.c.l.b16 %v494
      %v1301 = vunpack.c.h.b16 %v494
      %v1302 = vunpack.c.l.b16 %v495
      %v1303 = vunpack.c.h.b16 %v495
      %v1304 = vunpack.c.l.b16 %v496
      %v1305 = vunpack.c.h.b16 %v496
      %v1306 = vunpack.c.l.b16 %v497
      %v1307 = vunpack.c.h.b16 %v497
      %v1308 = vunpack.c.l.b16 %v498
      %v1309 = vunpack.c.h.b16 %v498
      %v1310 = vunpack.c.l.b16 %v499
      %v1311 = vunpack.c.h.b16 %v499
      %v1312 = vunpack.c.l.b16 %v500
      %v1313 = vunpack.c.h.b16 %v500
      %v1314 = vunpack.c.l.b16 %v501
      %v1315 = vunpack.c.h.b16 %v501
      %v1316 = vunpack.c.l.b16 %v502
      %v1317 = vunpack.c.h.b16 %v502
      %v1318 = vunpack.c.l.b16 %v503
      %v1319 = vunpack.c.h.b16 %v503
      %v1320 = vunpack.c.l.b16 %v504
      %v1321 = vunpack.c.h.b16 %v504
      %v1322 = vunpack.c.l.b16 %v505
      %v1323 = vunpack.c.h.b16 %v505
      %v1324 = vunpack.c.l.b16 %v506
      %v1325 = vunpack.c.h.b16 %v506
      %v1326 = vunpack.c.l.b16 %v507
      %v1327 = vunpack.c.h.b16 %v507
      %v1328 = vunpack.c.l.b16 %v508
      %v1329 = vunpack.c.h.b16 %v508
      %v1330 = vunpack.c.l.b16 %v509
      %v1331 = vunpack.c.h.b16 %v509
      %v1332 = vpack.c.b16 %v1206, %v1204
      %v1333 = vpack.c.b16 %v1207, %v1205
      %v1334 = vpack.c.b16 %v1210, %v1208
      %v1335 = vpack.c.b16 %v1211, %v1209
      %v1336 = vpack.c.b16 %v1214, %v1212
      %v1337 = vpack.c.b16 %v1215, %v1213
      %v1338 = vpack.c.b16 %v1218, %v1216
      %v1339 = vpack.c.b16 %v1219, %v1217
      %v1340 = vpack.c.b16 %v1222, %v1220
      %v1341 = vpack.c.b16 %v1223, %v1221
      %v1342 = vpack.c.b16 %v1226, %v1224
      %v1343 = vpack.c.b16 %v1227, %v1225
      %v1344 = vpack.c.b16 %v1230, %v1228
      %v1345 = vpack.c.b16 %v1231, %v1229
      %v1346 = vpack.c.b16 %v1234, %v1232
      %v1347 = vpack.c.b16 %v1235, %v1233
      %v1348 = vpack.c.b16 %v1238, %v1236
      %v1349 = vpack.c.b16 %v1239, %v1237
      %v1350 = vpack.c.b16 %v1242, %v1240
      %v1351 = vpack.c.b16 %v1243, %v1241
      %v1352 = vpack.c.b16 %v1246, %v1244
      %v1353 = vpack.c.b16 %v1247, %v1245
      %v1354 = vpack.c.b16 %v1250, %v1248
      %v1355 = vpack.c.b16 %v1251, %v1249
      %v1356 = vpack.c.b16 %v1254, %v1252
      %v1357 = vpack.c.b16 %v1255, %v1253
      %v1358 = vpack.c.b16 %v1258, %v1256
      %v1359 = vpack.c.b16 %v1259, %v1257
      %v1360 = vpack.c.b16 %v1262, %v1260
      %v1361 = vpack.c.b16 %v1263, %v1261
      %v1362 = vpack.c.b16 %v1266, %v1264
      %v1363 = vpack.c.b16 %v1267, %v1265
      %v1364 = vpack.c.b16 %v1270, %v1268
      %v1365 = vpack.c.b16 %v1271, %v1269
      %v1366 = vpack.c.b16 %v1274, %v1272
      %v1367 = vpack.c.b16 %v1275, %v1273
      %v1368 = vpack.c.b16 %v1278, %v1276
      %v1369 = vpack.c.b16 %v1279, %v1277
      %v1370 = vpack.c.b16 %v1282, %v1280
      %v1371 = vpack.c.b16 %v1283, %v1281
      %v1372 = vpack.c.b16 %v1286, %v1284
      %v1373 = vpack.c.b16 %v1287, %v1285
      %v1374 = vpack.c.b16 %v1290, %v1288
      %v1375 = vpack.c.b16 %v1291, %v1289
      %v1376 = vpack.c.b16 %v1294, %v1292
      %v1377 = vpack.c.b16 %v1295, %v1293
      %v1378 = vpack.c.b16 %v1298, %v1296
      %v1379 = vpack.c.b16 %v1299, %v1297
      %v1380 = vpack.c.b16 %v1302, %v1300
      %v1381 = vpack.c.b16 %v1303, %v1301
      %v1382 = vpack.c.b16 %v1306, %v1304
      %v1383 = vpack.c.b16 %v1307, %v1305
      %v1384 = vpack.c.b16 %v1310, %v1308
      %v1385 = vpack.c.b16 %v1311, %v1309
      %v1386 = vpack.c.b16 %v1314, %v1312
      %v1387 = vpack.c.b16 %v1315, %v1313
      %v1388 = vpack.c.b16 %v1318, %v1316
      %v1389 = vpack.c.b16 %v1319, %v1317
      %v1390 = vpack.c.b16 %v1322, %v1320
      %v1391 = vpack.c.b16 %v1323, %v1321
      %v1392 = vpack.c.b16 %v1326, %v1324
      %v1393 = vpack.c.b16 %v1327, %v1325
      %v1394 = vpack.c.b16 %v1330, %v1328
      %v1395 = vpack.c.b16 %v1331, %v1329
      %1460 = vmatprep.subr.bf16.mxu0 %v1333
      %1461 = vmatpush1.bf16.msra.mxu0 %v1332
      %1462 = vmatprep.subr.bf16.mxu0 %v1335
      %1463 = vmatpush1.bf16.msra.mxu0 %v1334
      %1464 = vmatprep.subr.bf16.mxu0 %v1337
      %1465 = vmatpush1.bf16.msra.mxu0 %v1336
      %1466 = vmatprep.subr.bf16.mxu0 %v1339
      %1467 = vmatpush1.bf16.msra.mxu0 %v1338
      %1468 = vmatprep.subr.bf16.mxu0 %v1341
      %1469 = vmatpush1.bf16.msra.mxu0 %v1340
      %1470 = vmatprep.subr.bf16.mxu0 %v1343
      %1471 = vmatpush1.bf16.msra.mxu0 %v1342
      %1472 = vmatprep.subr.bf16.mxu0 %v1345
      %1473 = vmatpush1.bf16.msra.mxu0 %v1344
      %1474 = vmatprep.subr.bf16.mxu0 %v1347
      %1475 = vmatpush1.bf16.msra.mxu0 %v1346
      %1476 = vmatprep.subr.bf16.mxu0 %v1349
      %1477 = vmatpush1.bf16.msra.mxu0 %v1348
      %1478 = vmatprep.subr.bf16.mxu0 %v1351
      %1479 = vmatpush1.bf16.msra.mxu0 %v1350
      %1480 = vmatprep.subr.bf16.mxu0 %v1353
      %1481 = vmatpush1.bf16.msra.mxu0 %v1352
      %1482 = vmatprep.subr.bf16.mxu0 %v1355
      %1483 = vmatpush1.bf16.msra.mxu0 %v1354
      %1484 = vmatprep.subr.bf16.mxu0 %v1357
      %1485 = vmatpush1.bf16.msra.mxu0 %v1356
      %1486 = vmatprep.subr.bf16.mxu0 %v1359
      %1487 = vmatpush1.bf16.msra.mxu0 %v1358
      %1488 = vmatprep.subr.bf16.mxu0 %v1361
      %1489 = vmatpush1.bf16.msra.mxu0 %v1360
      %1490 = vmatprep.subr.bf16.mxu0 %v1363
      %1491 = vmatpush1.bf16.msra.mxu0 %v1362
      %1492 = vmatprep.mubr.bf16.mxu0 %v606
      %1493 = vmatmul.mubr.bf16.gmra.mrb[0].mxu0 %v605
      %v1494 = vpop.f32.mrb[0].mxu0
      %v1495 = vadd.f32 %v1114, %v1494
      %v1496 = vpop.f32.mrb[0].mxu0
      %v1497 = vadd.f32 %v1116, %v1496
      %v1498 = vpop.f32.mrb[0].mxu0
      %v1499 = vadd.f32 %v1118, %v1498
      %v1500 = vpop.f32.mrb[0].mxu0
      %v1501 = vadd.f32 %v1120, %v1500
      %1502 = vmatprep.mubr.bf16.mxu0 %v610
      %1503 = vmatmul.mubr.bf16.gmra.mrb[0].mxu0 %v609
      %v1504 = vpop.f32.mrb[0].mxu0
      %v1505 = vadd.f32 %v1124, %v1504
      %v1506 = vpop.f32.mrb[0].mxu0
      %v1507 = vadd.f32 %v1126, %v1506
      %v1508 = vpop.f32.mrb[0].mxu0
      %v1509 = vadd.f32 %v1128, %v1508
      %v1510 = vpop.f32.mrb[0].mxu0
      %v1511 = vadd.f32 %v1130, %v1510
      %1512 = vdwg.mxu0
      %1513 = vmatprep.subr.bf16.mxu0 %v1365
      %1514 = vmatpush1.bf16.msra.mxu0 %v1364
      %1515 = vmatprep.subr.bf16.mxu0 %v1367
      %1516 = vmatpush1.bf16.msra.mxu0 %v1366
      %1517 = vmatprep.subr.bf16.mxu0 %v1369
      %1518 = vmatpush1.bf16.msra.mxu0 %v1368
      %1519 = vmatprep.subr.bf16.mxu0 %v1371
      %1520 = vmatpush1.bf16.msra.mxu0 %v1370
      %1521 = vmatprep.subr.bf16.mxu0 %v1373
      %1522 = vmatpush1.bf16.msra.mxu0 %v1372
      %1523 = vmatprep.subr.bf16.mxu0 %v1375
      %1524 = vmatpush1.bf16.msra.mxu0 %v1374
      %1525 = vmatprep.subr.bf16.mxu0 %v1377
      %1526 = vmatpush1.bf16.msra.mxu0 %v1376
      %1527 = vmatprep.subr.bf16.mxu0 %v1379
      %1528 = vmatpush1.bf16.msra.mxu0 %v1378
      %1529 = vmatprep.subr.bf16.mxu0 %v1381
      %1530 = vmatpush1.bf16.msra.mxu0 %v1380
      %1531 = vmatprep.subr.bf16.mxu0 %v1383
      %1532 = vmatpush1.bf16.msra.mxu0 %v1382
      %1533 = vmatprep.subr.bf16.mxu0 %v1385
      %1534 = vmatpush1.bf16.msra.mxu0 %v1384
      %1535 = vmatprep.subr.bf16.mxu0 %v1387
      %1536 = vmatpush1.bf16.msra.mxu0 %v1386
      %1537 = vmatprep.subr.bf16.mxu0 %v1389
      %1538 = vmatpush1.bf16.msra.mxu0 %v1388
      %1539 = vmatprep.subr.bf16.mxu0 %v1391
      %1540 = vmatpush1.bf16.msra.mxu0 %v1390
      %1541 = vmatprep.subr.bf16.mxu0 %v1393
      %1542 = vmatpush1.bf16.msra.mxu0 %v1392
      %1543 = vmatprep.subr.bf16.mxu0 %v1395
      %1544 = vmatpush1.bf16.msra.mxu0 %v1394
      %1545 = vmatprep.mubr.bf16.mxu0 %v608
      %1546 = vmatmul.mubr.bf16.gmra.mrb[0].mxu0 %v607
      %v1547 = vpop.f32.mrb[0].mxu0
      %v1548 = vadd.f32 %v1495, %v1547
      %v1549 = vpop.f32.mrb[0].mxu0
      %v1550 = vadd.f32 %v1497, %v1549
      %v1551 = vpop.f32.mrb[0].mxu0
      %v1552 = vadd.f32 %v1499, %v1551
      %v1553 = vpop.f32.mrb[0].mxu0
      %v1554 = vadd.f32 %v1501, %v1553
      %1555 = vmatprep.mubr.bf16.mxu0 %v612
      %1556 = vmatmul.mubr.bf16.gmra.mrb[0].mxu0 %v611
      %v1557 = vpop.f32.mrb[0].mxu0
      %v1558 = vadd.f32 %v1505, %v1557
      %v1559 = vpop.f32.mrb[0].mxu0
      %v1560 = vadd.f32 %v1507, %v1559
      %v1561 = vpop.f32.mrb[0].mxu0
      %v1562 = vadd.f32 %v1509, %v1561
      %v1563 = vpop.f32.mrb[0].mxu0
      %v1564 = vadd.f32 %v1511, %v1563
      %1565 = vdwg.mxu0
      %vm1566 = vcmp.ge.f32.partialorder %v1548, 0.0
      %vm1567 = vcmp.ge.f32.partialorder %v1550, 0.0
      %vm1568 = vcmp.ge.f32.partialorder %v1552, 0.0
      %vm1569 = vcmp.ge.f32.partialorder %v1554, 0.0
      %vm1570 = vcmp.ge.f32.partialorder %v1558, 0.0
      %vm1571 = vcmp.ge.f32.partialorder %v1560, 0.0
      %vm1572 = vcmp.ge.f32.partialorder %v1562, 0.0
      %vm1573 = vcmp.ge.f32.partialorder %v1564, 0.0
      %v1574 = vmul.f32 %v1548, 0.01
      %v1575 = vmul.f32 %v1550, 0.01
      %v1576 = vmul.f32 %v1552, 0.01
      %v1577 = vmul.f32 %v1554, 0.01
      %v1578 = vmul.f32 %v1558, 0.01
      %v1579 = vmul.f32 %v1560, 0.01
      %v1580 = vmul.f32 %v1562, 0.01
      %v1581 = vmul.f32 %v1564, 0.01
      %v1582 = vsel %vm1566, %v1548, %v1574
      %v1583 = vsel %vm1567, %v1550, %v1575
      %v1584 = vsel %vm1568, %v1552, %v1576
      %v1585 = vsel %vm1569, %v1554, %v1577
      %v1586 = vsel %vm1570, %v1558, %v1578
      %v1587 = vsel %vm1571, %v1560, %v1579
      %v1588 = vsel %vm1572, %v1562, %v1580
      %v1589 = vsel %vm1573, %v1564, %v1581
      %v1590 = vpack.c.bf16 %v1584, %v1582
      %v1591 = vpack.c.bf16 %v1585, %v1583
      %v1592 = vpack.c.bf16 %v1588, %v1586
      %v1593 = vpack.c.bf16 %v1589, %v1587
      %v1596 = vunpack.c.l.b16 %v1590
      %v1597 = vunpack.c.l.b16 %v1591
      %v1598 = vpack.c.b16 %v1597, %v1596
      %v1600 = vld [vmem:[#allocation2 + $0x8] sm:$0x11]
      %v1601 = vsel %vm408, %v1598, %v1600
      %1602 = vst [vmem:[#allocation2 + $0x8] sm:$0x11] %v1601
      %vm1603 = vsmask.f32 7938
      %vm1604 = vmand %vm402, %vm1603
      %vm1605 = vsmask.f32 7954
      %vm1606 = vmand %vm405, %vm1605
      %vm1607 = vmor %vm1606, %vm1604
      %v1608 = vld [vmem:[#allocation2] sm:$0x11]
      %v1609 = vsel %vm1607, %v1598, %v1608
      %1610 = vst [vmem:[#allocation2] sm:$0x11] %v1609
      %v1612 = vshll.u32 %v1598, 16
      %v1614 = vrot.slane %v1612, 5
      %v1615 = vrot.slane %v1614, 4
      %v1617 = vld [vmem:[#allocation2 + $0x8] sm:$0x11]
      %v1618 = vsel %vm1607, %v1615, %v1617
      %1619 = vst [vmem:[#allocation2 + $0x8] sm:$0x11] %v1618
      %v1620 = vshrl.u32 %v1598, 16
      %v1622 = vrot.slane %v1620, 4
      %v1623 = vrot.slane %v1622, 4
      %vm1625 = vcmask 1041409
      %vm1626 = vsmask.f32 1280
      %vm1627 = vmand %vm1625, %vm1626
      %vm1628 = vcmask 1045509
      %vm1629 = vsmask.f32 5376
      %vm1630 = vmand %vm1628, %vm1629
      %vm1631 = vmor %vm1630, %vm1627
      %v1632 = vld [vmem:[#allocation2] sm:$0x22]
      %v1633 = vsel %vm1631, %v1623, %v1632
      %1634 = vst [vmem:[#allocation2] sm:$0x22] %v1633
      %v1635 = vrot.slane %v1598, 5
      %v1636 = vrot.slane %v1635, 4
      %v1638 = vld [vmem:[#allocation2 + $0x8] sm:$0x22]
      %v1639 = vsel %vm1631, %v1636, %v1638
      %1640 = vst [vmem:[#allocation2 + $0x8] sm:$0x22] %v1639
      %vm1641 = vsmask.f32 7942
      %vm1642 = vmand %vm1625, %vm1641
      %vm1643 = vsmask.f32 7958
      %vm1644 = vmand %vm1628, %vm1643
      %vm1645 = vmor %vm1644, %vm1642
      %v1646 = vld [vmem:[#allocation2] sm:$0x22]
      %v1647 = vsel %vm1645, %v1636, %v1646
      %1648 = vst [vmem:[#allocation2] sm:$0x22] %v1647
      %v1649 = vrot.slane %v1612, 6
      %v1650 = vrot.slane %v1649, 4
      %v1652 = vld [vmem:[#allocation2 + $0x8] sm:$0x22]
      %v1653 = vsel %vm1645, %v1650, %v1652
      %1654 = vst [vmem:[#allocation2 + $0x8] sm:$0x22] %v1653
      %v1655 = vrot.slane %v1620, 5
      %v1656 = vrot.slane %v1655, 4
      %vm1658 = vcmask 1042434
      %vm1659 = vmand %vm1658, %vm424
      %vm1660 = vcmask 1046534
      %vm1661 = vmand %vm1660, %vm427
      %vm1662 = vmor %vm1661, %vm1659
      %v1663 = vld [vmem:[#allocation2] sm:$0x44]
      %v1664 = vsel %vm1662, %v1656, %v1663
      %1665 = vst [vmem:[#allocation2] sm:$0x44] %v1664
      %v1666 = vunpack.c.h.b16 %v1590
      %v1667 = vunpack.c.h.b16 %v1591
      %v1668 = vpack.c.b16 %v1667, %v1666
      %v1669 = vrot.slane %v1668, 6
      %v1671 = vld [vmem:[#allocation2 + $0x8] sm:$0x44]
      %v1672 = vsel %vm1662, %v1669, %v1671
      %1673 = vst [vmem:[#allocation2 + $0x8] sm:$0x44] %v1672
      %vm1674 = vsmask.f32 7946
      %vm1675 = vmand %vm1658, %vm1674
      %vm1676 = vsmask.f32 7962
      %vm1677 = vmand %vm1660, %vm1676
      %vm1678 = vmor %vm1677, %vm1675
      %v1679 = vld [vmem:[#allocation2] sm:$0x44]
      %v1680 = vsel %vm1678, %v1669, %v1679
      %1681 = vst [vmem:[#allocation2] sm:$0x44] %v1680
      %v1683 = vshll.u32 %v1668, 16
      %v1685 = vrot.slane %v1683, 7
      %v1687 = vld [vmem:[#allocation2 + $0x8] sm:$0x44]
      %v1688 = vsel %vm1678, %v1685, %v1687
      %1689 = vst [vmem:[#allocation2 + $0x8] sm:$0x44] %v1688
      %v1690 = vshrl.u32 %v1668, 16
      %v1692 = vrot.slane %v1690, 6
      %vm1694 = vcmask 1043459
      %vm1695 = vsmask.f32 3328
      %vm1696 = vmand %vm1694, %vm1695
      %vm1697 = vcmask 1047559
      %vm1698 = vmand %vm1697, %vm617
      %vm1699 = vmor %vm1698, %vm1696
      %v1700 = vld [vmem:[#allocation2] sm:$0x88]
      %v1701 = vsel %vm1699, %v1692, %v1700
      %1702 = vst [vmem:[#allocation2] sm:$0x88] %v1701
      %v1703 = vrot.slane %v1668, 7
      %v1705 = vld [vmem:[#allocation2 + $0x8] sm:$0x88]
      %v1706 = vsel %vm1699, %v1703, %v1705
      %1707 = vst [vmem:[#allocation2 + $0x8] sm:$0x88] %v1706
      %vm1708 = vsmask.f32 7950
      %vm1709 = vmand %vm1694, %vm1708
      %vm1710 = vsmask.f32 7966
      %vm1711 = vmand %vm1697, %vm1710
      %vm1712 = vmor %vm1711, %vm1709
      %v1713 = vld [vmem:[#allocation2] sm:$0x88]
      %v1714 = vsel %vm1712, %v1703, %v1713
      %1715 = vst [vmem:[#allocation2] sm:$0x88] %v1714
      %v1717 = vld [vmem:[#allocation2 + $0x8] sm:$0x88]
      %v1718 = vsel %vm1712, %v1683, %v1717
      %1719 = vst [vmem:[#allocation2 + $0x8] sm:$0x88] %v1718
      %v1720 = vrot.slane %v1690, 7
      %v1721 = vrot.slane %v1720, 4
      %v1723 = vld [vmem:[#allocation2 + $0x10] sm:$0x11]
      %v1724 = vsel %vm408, %v1721, %v1723
      %1725 = vst [vmem:[#allocation2 + $0x10] sm:$0x11] %v1724
      %v1728 = vunpack.c.l.b16 %v1592
      %v1729 = vunpack.c.l.b16 %v1593
      %v1730 = vpack.c.b16 %v1729, %v1728
      %v1732 = vld [vmem:[#allocation2 + $0x18] sm:$0x11]
      %v1733 = vsel %vm408, %v1730, %v1732
      %1734 = vst [vmem:[#allocation2 + $0x18] sm:$0x11] %v1733
      %v1735 = vld [vmem:[#allocation2 + $0x10] sm:$0x11]
      %v1736 = vsel %vm1607, %v1730, %v1735
      %1737 = vst [vmem:[#allocation2 + $0x10] sm:$0x11] %v1736
      %v1739 = vshll.u32 %v1730, 16
      %v1741 = vrot.slane %v1739, 5
      %v1742 = vrot.slane %v1741, 4
      %v1744 = vld [vmem:[#allocation2 + $0x18] sm:$0x11]
      %v1745 = vsel %vm1607, %v1742, %v1744
      %1746 = vst [vmem:[#allocation2 + $0x18] sm:$0x11] %v1745
      %v1747 = vshrl.u32 %v1730, 16
      %v1749 = vrot.slane %v1747, 4
      %v1750 = vrot.slane %v1749, 4
      %v1752 = vld [vmem:[#allocation2 + $0x10] sm:$0x22]
      %v1753 = vsel %vm1631, %v1750, %v1752
      %1754 = vst [vmem:[#allocation2 + $0x10] sm:$0x22] %v1753
      %v1755 = vrot.slane %v1730, 5
      %v1756 = vrot.slane %v1755, 4
      %v1758 = vld [vmem:[#allocation2 + $0x18] sm:$0x22]
      %v1759 = vsel %vm1631, %v1756, %v1758
      %1760 = vst [vmem:[#allocation2 + $0x18] sm:$0x22] %v1759
      %v1761 = vld [vmem:[#allocation2 + $0x10] sm:$0x22]
      %v1762 = vsel %vm1645, %v1756, %v1761
      %1763 = vst [vmem:[#allocation2 + $0x10] sm:$0x22] %v1762
      %v1764 = vrot.slane %v1739, 6
      %v1765 = vrot.slane %v1764, 4
      %v1767 = vld [vmem:[#allocation2 + $0x18] sm:$0x22]
      %v1768 = vsel %vm1645, %v1765, %v1767
      %1769 = vst [vmem:[#allocation2 + $0x18] sm:$0x22] %v1768
      %v1770 = vrot.slane %v1747, 5
      %v1771 = vrot.slane %v1770, 4
      %v1773 = vld [vmem:[#allocation2 + $0x10] sm:$0x44]
      %v1774 = vsel %vm1662, %v1771, %v1773
      %1775 = vst [vmem:[#allocation2 + $0x10] sm:$0x44] %v1774
      %v1776 = vunpack.c.h.b16 %v1592
      %v1777 = vunpack.c.h.b16 %v1593
      %v1778 = vpack.c.b16 %v1777, %v1776
      %v1779 = vrot.slane %v1778, 6
      %v1781 = vld [vmem:[#allocation2 + $0x18] sm:$0x44]
      %v1782 = vsel %vm1662, %v1779, %v1781
      %1783 = vst [vmem:[#allocation2 + $0x18] sm:$0x44] %v1782
      %v1784 = vld [vmem:[#allocation2 + $0x10] sm:$0x44]
      %v1785 = vsel %vm1678, %v1779, %v1784
      %1786 = vst [vmem:[#allocation2 + $0x10] sm:$0x44] %v1785
      %v1788 = vshll.u32 %v1778, 16
      %v1790 = vrot.slane %v1788, 7
      %v1792 = vld [vmem:[#allocation2 + $0x18] sm:$0x44]
      %v1793 = vsel %vm1678, %v1790, %v1792
      %1794 = vst [vmem:[#allocation2 + $0x18] sm:$0x44] %v1793
      %v1795 = vshrl.u32 %v1778, 16
      %v1797 = vrot.slane %v1795, 6
      %v1799 = vld [vmem:[#allocation2 + $0x10] sm:$0x88]
      %v1800 = vsel %vm1699, %v1797, %v1799
      %1801 = vst [vmem:[#allocation2 + $0x10] sm:$0x88] %v1800
      %v1802 = vrot.slane %v1778, 7
      %v1804 = vld [vmem:[#allocation2 + $0x18] sm:$0x88]
      %v1805 = vsel %vm1699, %v1802, %v1804
      %1806 = vst [vmem:[#allocation2 + $0x18] sm:$0x88] %v1805
      %v1807 = vld [vmem:[#allocation2 + $0x10] sm:$0x88]
      %v1808 = vsel %vm1712, %v1802, %v1807
      %1809 = vst [vmem:[#allocation2 + $0x10] sm:$0x88] %v1808
      %v1811 = vld [vmem:[#allocation2 + $0x18] sm:$0x88]
      %v1812 = vsel %vm1712, %v1788, %v1811
      %1813 = vst [vmem:[#allocation2 + $0x18] sm:$0x88] %v1812
      %v1814 = vrot.slane %v1795, 7
      %v1815 = vrot.slane %v1814, 4
      %v1817 = vld [vmem:[#allocation2 + $0x20] sm:$0x11]
      %v1818 = vsel %vm408, %v1815, %v1817
      %1819 = vst [vmem:[#allocation2 + $0x20] sm:$0x11] %v1818
      %v1820 = vld [vmem:[#allocation2] sm:$0xff]
      %v1821 = vld [vmem:[#allocation2 + $0x8] sm:$0xff]
      %v1822 = vld [vmem:[#allocation2 + $0x10] sm:$0xff]
      %v1823 = vld [vmem:[#allocation2 + $0x18] sm:$0xff]
      %v1824 = vld [vmem:[#allocation2 + $0x20] sm:$0x11]
      %v1825 = vld [vmem:[#allocation2 + $0x28] sm:$0x11]
      %v1826 = vld [vmem:[%s3] sm:$0xff]
      %v1827 = vld [vmem:[%s3 + $0x8] sm:$0xff]
      %v1828 = vld [vmem:[%s3 + $0x10] sm:$0xff]
      %v1829 = vld [vmem:[%s3 + $0x18] sm:$0xff]
      %v1830 = vld [vmem:[%s3 + $0x20] sm:$0xff]
      %v1831 = vld [vmem:[%s3 + $0x28] sm:$0xff]
      %v1832 = vld [vmem:[%s3 + $0x30] sm:$0xff]
      %v1833 = vld [vmem:[%s3 + $0x38] sm:$0xff]
      %v1834 = vld [vmem:[%s3 + $0x40] sm:$0xff]
      %v1835 = vld [vmem:[%s3 + $0x48] sm:$0xff]
      %v1836 = vld [vmem:[%s3 + $0x50] sm:$0xff]
      %v1837 = vld [vmem:[%s3 + $0x58] sm:$0xff]
      %v1838 = vld [vmem:[%s3 + $0x60] sm:$0xff]
      %v1839 = vld [vmem:[%s3 + $0x68] sm:$0xff]
      %v1840 = vld [vmem:[%s3 + $0x70] sm:$0xff]
      %v1841 = vld [vmem:[%s3 + $0x78] sm:$0xff]
      %v1842 = vld [vmem:[%s3 + $0x80] sm:$0xff]
      %v1843 = vld [vmem:[%s3 + $0x88] sm:$0xff]
      %v1844 = vld [vmem:[%s3 + $0x90] sm:$0xff]
      %v1845 = vld [vmem:[%s3 + $0x98] sm:$0xff]
      %v1846 = vld [vmem:[%s3 + $0xa0] sm:$0xff]
      %v1847 = vld [vmem:[%s3 + $0xa8] sm:$0xff]
      %v1848 = vld [vmem:[%s3 + $0xb0] sm:$0xff]
      %v1849 = vld [vmem:[%s3 + $0xb8] sm:$0xff]
      %v1850 = vld [vmem:[%s3 + $0xc0] sm:$0xff]
      %v1851 = vld [vmem:[%s3 + $0xc8] sm:$0xff]
      %v1852 = vld [vmem:[%s3 + $0xd0] sm:$0xff]
      %v1853 = vld [vmem:[%s3 + $0xd8] sm:$0xff]
      %v1854 = vld [vmem:[%s3 + $0xe0] sm:$0xff]
      %v1855 = vld [vmem:[%s3 + $0xe8] sm:$0xff]
      %v1856 = vld [vmem:[%s3 + $0xf0] sm:$0xff]
      %v1857 = vld [vmem:[%s3 + $0xf8] sm:$0xff]
      %v1858 = vld [vmem:[%s3 + $0x100] sm:$0xff]
      %v1859 = vld [vmem:[%s3 + $0x108] sm:$0xff]
      %v1860 = vld [vmem:[%s3 + $0x110] sm:$0xff]
      %v1861 = vld [vmem:[%s3 + $0x118] sm:$0xff]
      %v1862 = vld [vmem:[%s3 + $0x120] sm:$0xff]
      %v1863 = vld [vmem:[%s3 + $0x128] sm:$0xff]
      %v1864 = vld [vmem:[%s3 + $0x130] sm:$0xff]
      %v1865 = vld [vmem:[%s3 + $0x138] sm:$0xff]
      %v1866 = vld [vmem:[%s3 + $0x140] sm:$0xff]
      %v1867 = vld [vmem:[%s3 + $0x148] sm:$0xff]
      %v1868 = vld [vmem:[%s3 + $0x150] sm:$0xff]
      %v1869 = vld [vmem:[%s3 + $0x158] sm:$0xff]
      %v1870 = vld [vmem:[%s3 + $0x160] sm:$0xff]
      %v1871 = vld [vmem:[%s3 + $0x168] sm:$0xff]
      %v1872 = vld [vmem:[%s3 + $0x170] sm:$0xff]
      %v1873 = vld [vmem:[%s3 + $0x178] sm:$0xff]
      %v1874 = vld [vmem:[%s3 + $0x180] sm:$0xff]
      %v1875 = vld [vmem:[%s3 + $0x188] sm:$0xff]
      %v1876 = vld [vmem:[%s3 + $0x190] sm:$0xff]
      %v1877 = vld [vmem:[%s3 + $0x198] sm:$0xff]
      %v1878 = vld [vmem:[%s3 + $0x1a0] sm:$0xff]
      %v1879 = vld [vmem:[%s3 + $0x1a8] sm:$0xff]
      %v1880 = vld [vmem:[%s3 + $0x1b0] sm:$0xff]
      %v1881 = vld [vmem:[%s3 + $0x1b8] sm:$0xff]
      %v1882 = vld [vmem:[%s3 + $0x1c0] sm:$0xff]
      %v1883 = vld [vmem:[%s3 + $0x1c8] sm:$0xff]
      %v1884 = vld [vmem:[%s3 + $0x1d0] sm:$0xff]
      %v1885 = vld [vmem:[%s3 + $0x1d8] sm:$0xff]
      %v1886 = vld [vmem:[%s3 + $0x1e0] sm:$0xff]
      %v1887 = vld [vmem:[%s3 + $0x1e8] sm:$0xff]
      %v1888 = vld [vmem:[%s3 + $0x1f0] sm:$0xff]
      %v1889 = vld [vmem:[%s3 + $0x1f8] sm:$0xff]
      %s1890 = scalar_lea.vmem %s3, 512
      %v1891 = vld [vmem:[%s1890] sm:$0xff]
      %v1892 = vld [vmem:[%s1890 + $0x8] sm:$0xff]
      %v1893 = vld [vmem:[%s1890 + $0x10] sm:$0xff]
      %v1894 = vld [vmem:[%s1890 + $0x18] sm:$0xff]
      %v1895 = vld [vmem:[%s1890 + $0x20] sm:$0xff]
      %v1896 = vld [vmem:[%s1890 + $0x28] sm:$0xff]
      %v1897 = vld [vmem:[%s1890 + $0x30] sm:$0xff]
      %v1898 = vld [vmem:[%s1890 + $0x38] sm:$0xff]
      %v1899 = vld [vmem:[%s1890 + $0x40] sm:$0xff]
      %v1900 = vld [vmem:[%s1890 + $0x48] sm:$0xff]
      %v1901 = vld [vmem:[%s1890 + $0x50] sm:$0xff]
      %v1902 = vld [vmem:[%s1890 + $0x58] sm:$0xff]
      %v1903 = vld [vmem:[%s1890 + $0x60] sm:$0xff]
      %v1904 = vld [vmem:[%s1890 + $0x68] sm:$0xff]
      %v1905 = vld [vmem:[%s1890 + $0x70] sm:$0xff]
      %v1906 = vld [vmem:[%s1890 + $0x78] sm:$0xff]
      %v1907 = vld [vmem:[%s1890 + $0x80] sm:$0xff]
      %v1908 = vld [vmem:[%s1890 + $0x88] sm:$0xff]
      %v1909 = vld [vmem:[%s1890 + $0x90] sm:$0xff]
      %v1910 = vld [vmem:[%s1890 + $0x98] sm:$0xff]
      %v1911 = vld [vmem:[%s1890 + $0xa0] sm:$0xff]
      %v1912 = vld [vmem:[%s1890 + $0xa8] sm:$0xff]
      %v1913 = vld [vmem:[%s1890 + $0xb0] sm:$0xff]
      %v1914 = vld [vmem:[%s1890 + $0xb8] sm:$0xff]
      %v1915 = vld [vmem:[%s1890 + $0xc0] sm:$0xff]
      %v1916 = vld [vmem:[%s1890 + $0xc8] sm:$0xff]
      %v1917 = vld [vmem:[%s1890 + $0xd0] sm:$0xff]
      %v1918 = vld [vmem:[%s1890 + $0xd8] sm:$0xff]
      %v1919 = vld [vmem:[%s1890 + $0xe0] sm:$0xff]
      %v1920 = vld [vmem:[%s1890 + $0xe8] sm:$0xff]
      %v1921 = vld [vmem:[%s1890 + $0xf0] sm:$0xff]
      %v1922 = vld [vmem:[%s1890 + $0xf8] sm:$0xff]
      %v1923 = vld [vmem:[%s1890 + $0x100] sm:$0xff]
      %v1924 = vld [vmem:[%s1890 + $0x108] sm:$0xff]
      %v1925 = vld [vmem:[%s1890 + $0x110] sm:$0xff]
      %v1926 = vld [vmem:[%s1890 + $0x118] sm:$0xff]
      %v1927 = vld [vmem:[%s1890 + $0x120] sm:$0xff]
      %v1928 = vld [vmem:[%s1890 + $0x128] sm:$0xff]
      %v1929 = vld [vmem:[%s1890 + $0x130] sm:$0xff]
      %v1930 = vld [vmem:[%s1890 + $0x138] sm:$0xff]
      %v1931 = vld [vmem:[%s1890 + $0x140] sm:$0xff]
      %v1932 = vld [vmem:[%s1890 + $0x148] sm:$0xff]
      %v1933 = vld [vmem:[%s1890 + $0x150] sm:$0xff]
      %v1934 = vld [vmem:[%s1890 + $0x158] sm:$0xff]
      %v1935 = vld [vmem:[%s1890 + $0x160] sm:$0xff]
      %v1936 = vld [vmem:[%s1890 + $0x168] sm:$0xff]
      %v1937 = vld [vmem:[%s1890 + $0x170] sm:$0xff]
      %v1938 = vld [vmem:[%s1890 + $0x178] sm:$0xff]
      %v1939 = vld [vmem:[%s1890 + $0x180] sm:$0xff]
      %v1940 = vld [vmem:[%s1890 + $0x188] sm:$0xff]
      %v1941 = vld [vmem:[%s1890 + $0x190] sm:$0xff]
      %v1942 = vld [vmem:[%s1890 + $0x198] sm:$0xff]
      %v1943 = vld [vmem:[%s1890 + $0x1a0] sm:$0xff]
      %v1944 = vld [vmem:[%s1890 + $0x1a8] sm:$0xff]
      %v1945 = vld [vmem:[%s1890 + $0x1b0] sm:$0xff]
      %v1946 = vld [vmem:[%s1890 + $0x1b8] sm:$0xff]
      %v1947 = vld [vmem:[%s1890 + $0x1c0] sm:$0xff]
      %v1948 = vld [vmem:[%s1890 + $0x1c8] sm:$0xff]
      %v1949 = vld [vmem:[%s1890 + $0x1d0] sm:$0xff]
      %v1950 = vld [vmem:[%s1890 + $0x1d8] sm:$0xff]
      %v1951 = vld [vmem:[%s1890 + $0x1e0] sm:$0xff]
      %v1952 = vld [vmem:[%s1890 + $0x1e8] sm:$0xff]
      %v1953 = vld [vmem:[%s1890 + $0x1f0] sm:$0xff]
      %v1954 = vld [vmem:[%s1890 + $0x1f8] sm:$0xff]
      %v1961 = vunpack.c.l.b16 %v1820
      %v1962 = vunpack.c.h.b16 %v1820
      %v1963 = vunpack.c.l.b16 %v1821
      %v1964 = vunpack.c.h.b16 %v1821
      %v1965 = vunpack.c.l.b16 %v1822
      %v1966 = vunpack.c.h.b16 %v1822
      %v1967 = vunpack.c.l.b16 %v1823
      %v1968 = vunpack.c.h.b16 %v1823
      %v1969 = vunpack.c.l.b16 %v1824
      %v1970 = vunpack.c.h.b16 %v1824
      %v1971 = vunpack.c.l.b16 %v1825
      %v1972 = vunpack.c.h.b16 %v1825
      %v1973 = vpack.c.b16 %v1965, %v1961
      %v1974 = vpack.c.b16 %v1966, %v1962
      %v1975 = vpack.c.b16 %v1967, %v1963
      %v1976 = vpack.c.b16 %v1968, %v1964
      %v1977 = vpack.c.b16 %v1969, %v1969
      %v1978 = vpack.c.b16 %v1970, %v1970
      %v1979 = vpack.c.b16 %v1971, %v1971
      %v1980 = vpack.c.b16 %v1972, %v1972
      %v1982 = vshrl.u32 %v1973, 16
      %v1984 = vshll.u32 %v1973, 16
      %v1986 = vrot.slane %v1984, 1
      %v1987 = vor.u32 %v1982, %v1986
      %v1989 = vshll.u32 %v1977, 16
      %v1991 = vrot.slane %v1989, 1
      %v1992 = vsel %vm617, %v1987, %v1991
      %v1994 = vshrl.u32 %v1974, 16
      %v1996 = vshll.u32 %v1974, 16
      %v1998 = vrot.slane %v1996, 1
      %v1999 = vor.u32 %v1994, %v1998
      %v2001 = vshll.u32 %v1978, 16
      %v2003 = vrot.slane %v2001, 1
      %v2004 = vsel %vm617, %v1999, %v2003
      %v2006 = vshrl.u32 %v1975, 16
      %v2008 = vshll.u32 %v1975, 16
      %v2010 = vrot.slane %v2008, 1
      %v2011 = vor.u32 %v2006, %v2010
      %v2013 = vshll.u32 %v1979, 16
      %v2015 = vrot.slane %v2013, 1
      %v2016 = vsel %vm617, %v2011, %v2015
      %v2018 = vshrl.u32 %v1976, 16
      %v2020 = vshll.u32 %v1976, 16
      %v2022 = vrot.slane %v2020, 1
      %v2023 = vor.u32 %v2018, %v2022
      %v2025 = vshll.u32 %v1980, 16
      %v2027 = vrot.slane %v2025, 1
      %v2028 = vsel %vm617, %v2023, %v2027
      %v2097 = vunpack.c.l.b16 %v1891
      %v2098 = vunpack.c.h.b16 %v1891
      %v2099 = vunpack.c.l.b16 %v1892
      %v2100 = vunpack.c.h.b16 %v1892
      %v2101 = vunpack.c.l.b16 %v1893
      %v2102 = vunpack.c.h.b16 %v1893
      %v2103 = vunpack.c.l.b16 %v1894
      %v2104 = vunpack.c.h.b16 %v1894
      %v2105 = vunpack.c.l.b16 %v1895
      %v2106 = vunpack.c.h.b16 %v1895
      %v2107 = vunpack.c.l.b16 %v1896
      %v2108 = vunpack.c.h.b16 %v1896
      %v2109 = vunpack.c.l.b16 %v1897
      %v2110 = vunpack.c.h.b16 %v1897
      %v2111 = vunpack.c.l.b16 %v1898
      %v2112 = vunpack.c.h.b16 %v1898
      %v2113 = vunpack.c.l.b16 %v1899
      %v2114 = vunpack.c.h.b16 %v1899
      %v2115 = vunpack.c.l.b16 %v1900
      %v2116 = vunpack.c.h.b16 %v1900
      %v2117 = vunpack.c.l.b16 %v1901
      %v2118 = vunpack.c.h.b16 %v1901
      %v2119 = vunpack.c.l.b16 %v1902
      %v2120 = vunpack.c.h.b16 %v1902
      %v2121 = vunpack.c.l.b16 %v1903
      %v2122 = vunpack.c.h.b16 %v1903
      %v2123 = vunpack.c.l.b16 %v1904
      %v2124 = vunpack.c.h.b16 %v1904
      %v2125 = vunpack.c.l.b16 %v1905
      %v2126 = vunpack.c.h.b16 %v1905
      %v2127 = vunpack.c.l.b16 %v1906
      %v2128 = vunpack.c.h.b16 %v1906
      %v2129 = vunpack.c.l.b16 %v1907
      %v2130 = vunpack.c.h.b16 %v1907
      %v2131 = vunpack.c.l.b16 %v1908
      %v2132 = vunpack.c.h.b16 %v1908
      %v2133 = vunpack.c.l.b16 %v1909
      %v2134 = vunpack.c.h.b16 %v1909
      %v2135 = vunpack.c.l.b16 %v1910
      %v2136 = vunpack.c.h.b16 %v1910
      %v2137 = vunpack.c.l.b16 %v1911
      %v2138 = vunpack.c.h.b16 %v1911
      %v2139 = vunpack.c.l.b16 %v1912
      %v2140 = vunpack.c.h.b16 %v1912
      %v2141 = vunpack.c.l.b16 %v1913
      %v2142 = vunpack.c.h.b16 %v1913
      %v2143 = vunpack.c.l.b16 %v1914
      %v2144 = vunpack.c.h.b16 %v1914
      %v2145 = vunpack.c.l.b16 %v1915
      %v2146 = vunpack.c.h.b16 %v1915
      %v2147 = vunpack.c.l.b16 %v1916
      %v2148 = vunpack.c.h.b16 %v1916
      %v2149 = vunpack.c.l.b16 %v1917
      %v2150 = vunpack.c.h.b16 %v1917
      %v2151 = vunpack.c.l.b16 %v1918
      %v2152 = vunpack.c.h.b16 %v1918
      %v2153 = vunpack.c.l.b16 %v1919
      %v2154 = vunpack.c.h.b16 %v1919
      %v2155 = vunpack.c.l.b16 %v1920
      %v2156 = vunpack.c.h.b16 %v1920
      %v2157 = vunpack.c.l.b16 %v1921
      %v2158 = vunpack.c.h.b16 %v1921
      %v2159 = vunpack.c.l.b16 %v1922
      %v2160 = vunpack.c.h.b16 %v1922
      %v2161 = vunpack.c.l.b16 %v1923
      %v2162 = vunpack.c.h.b16 %v1923
      %v2163 = vunpack.c.l.b16 %v1924
      %v2164 = vunpack.c.h.b16 %v1924
      %v2165 = vunpack.c.l.b16 %v1925
      %v2166 = vunpack.c.h.b16 %v1925
      %v2167 = vunpack.c.l.b16 %v1926
      %v2168 = vunpack.c.h.b16 %v1926
      %v2169 = vunpack.c.l.b16 %v1927
      %v2170 = vunpack.c.h.b16 %v1927
      %v2171 = vunpack.c.l.b16 %v1928
      %v2172 = vunpack.c.h.b16 %v1928
      %v2173 = vunpack.c.l.b16 %v1929
      %v2174 = vunpack.c.h.b16 %v1929
      %v2175 = vunpack.c.l.b16 %v1930
      %v2176 = vunpack.c.h.b16 %v1930
      %v2177 = vunpack.c.l.b16 %v1931
      %v2178 = vunpack.c.h.b16 %v1931
      %v2179 = vunpack.c.l.b16 %v1932
      %v2180 = vunpack.c.h.b16 %v1932
      %v2181 = vunpack.c.l.b16 %v1933
      %v2182 = vunpack.c.h.b16 %v1933
      %v2183 = vunpack.c.l.b16 %v1934
      %v2184 = vunpack.c.h.b16 %v1934
      %v2185 = vunpack.c.l.b16 %v1935
      %v2186 = vunpack.c.h.b16 %v1935
      %v2187 = vunpack.c.l.b16 %v1936
      %v2188 = vunpack.c.h.b16 %v1936
      %v2189 = vunpack.c.l.b16 %v1937
      %v2190 = vunpack.c.h.b16 %v1937
      %v2191 = vunpack.c.l.b16 %v1938
      %v2192 = vunpack.c.h.b16 %v1938
      %v2193 = vunpack.c.l.b16 %v1939
      %v2194 = vunpack.c.h.b16 %v1939
      %v2195 = vunpack.c.l.b16 %v1940
      %v2196 = vunpack.c.h.b16 %v1940
      %v2197 = vunpack.c.l.b16 %v1941
      %v2198 = vunpack.c.h.b16 %v1941
      %v2199 = vunpack.c.l.b16 %v1942
      %v2200 = vunpack.c.h.b16 %v1942
      %v2201 = vunpack.c.l.b16 %v1943
      %v2202 = vunpack.c.h.b16 %v1943
      %v2203 = vunpack.c.l.b16 %v1944
      %v2204 = vunpack.c.h.b16 %v1944
      %v2205 = vunpack.c.l.b16 %v1945
      %v2206 = vunpack.c.h.b16 %v1945
      %v2207 = vunpack.c.l.b16 %v1946
      %v2208 = vunpack.c.h.b16 %v1946
      %v2209 = vunpack.c.l.b16 %v1947
      %v2210 = vunpack.c.h.b16 %v1947
      %v2211 = vunpack.c.l.b16 %v1948
      %v2212 = vunpack.c.h.b16 %v1948
      %v2213 = vunpack.c.l.b16 %v1949
      %v2214 = vunpack.c.h.b16 %v1949
      %v2215 = vunpack.c.l.b16 %v1950
      %v2216 = vunpack.c.h.b16 %v1950
      %v2217 = vunpack.c.l.b16 %v1951
      %v2218 = vunpack.c.h.b16 %v1951
      %v2219 = vunpack.c.l.b16 %v1952
      %v2220 = vunpack.c.h.b16 %v1952
      %v2221 = vunpack.c.l.b16 %v1953
      %v2222 = vunpack.c.h.b16 %v1953
      %v2223 = vunpack.c.l.b16 %v1954
      %v2224 = vunpack.c.h.b16 %v1954
      %v2225 = vpack.c.b16 %v2099, %v2097
      %v2226 = vpack.c.b16 %v2100, %v2098
      %v2227 = vpack.c.b16 %v2103, %v2101
      %v2228 = vpack.c.b16 %v2104, %v2102
      %v2229 = vpack.c.b16 %v2107, %v2105
      %v2230 = vpack.c.b16 %v2108, %v2106
      %v2231 = vpack.c.b16 %v2111, %v2109
      %v2232 = vpack.c.b16 %v2112, %v2110
      %v2233 = vpack.c.b16 %v2115, %v2113
      %v2234 = vpack.c.b16 %v2116, %v2114
      %v2235 = vpack.c.b16 %v2119, %v2117
      %v2236 = vpack.c.b16 %v2120, %v2118
      %v2237 = vpack.c.b16 %v2123, %v2121
      %v2238 = vpack.c.b16 %v2124, %v2122
      %v2239 = vpack.c.b16 %v2127, %v2125
      %v2240 = vpack.c.b16 %v2128, %v2126
      %v2241 = vpack.c.b16 %v2131, %v2129
      %v2242 = vpack.c.b16 %v2132, %v2130
      %v2243 = vpack.c.b16 %v2135, %v2133
      %v2244 = vpack.c.b16 %v2136, %v2134
      %v2245 = vpack.c.b16 %v2139, %v2137
      %v2246 = vpack.c.b16 %v2140, %v2138
      %v2247 = vpack.c.b16 %v2143, %v2141
      %v2248 = vpack.c.b16 %v2144, %v2142
      %v2249 = vpack.c.b16 %v2147, %v2145
      %v2250 = vpack.c.b16 %v2148, %v2146
      %v2251 = vpack.c.b16 %v2151, %v2149
      %v2252 = vpack.c.b16 %v2152, %v2150
      %v2253 = vpack.c.b16 %v2155, %v2153
      %v2254 = vpack.c.b16 %v2156, %v2154
      %v2255 = vpack.c.b16 %v2159, %v2157
      %v2256 = vpack.c.b16 %v2160, %v2158
      %v2257 = vpack.c.b16 %v2163, %v2161
      %v2258 = vpack.c.b16 %v2164, %v2162
      %v2259 = vpack.c.b16 %v2167, %v2165
      %v2260 = vpack.c.b16 %v2168, %v2166
      %v2261 = vpack.c.b16 %v2171, %v2169
      %v2262 = vpack.c.b16 %v2172, %v2170
      %v2263 = vpack.c.b16 %v2175, %v2173
      %v2264 = vpack.c.b16 %v2176, %v2174
      %v2265 = vpack.c.b16 %v2179, %v2177
      %v2266 = vpack.c.b16 %v2180, %v2178
      %v2267 = vpack.c.b16 %v2183, %v2181
      %v2268 = vpack.c.b16 %v2184, %v2182
      %v2269 = vpack.c.b16 %v2187, %v2185
      %v2270 = vpack.c.b16 %v2188, %v2186
      %v2271 = vpack.c.b16 %v2191, %v2189
      %v2272 = vpack.c.b16 %v2192, %v2190
      %v2273 = vpack.c.b16 %v2195, %v2193
      %v2274 = vpack.c.b16 %v2196, %v2194
      %v2275 = vpack.c.b16 %v2199, %v2197
      %v2276 = vpack.c.b16 %v2200, %v2198
      %v2277 = vpack.c.b16 %v2203, %v2201
      %v2278 = vpack.c.b16 %v2204, %v2202
      %v2279 = vpack.c.b16 %v2207, %v2205
      %v2280 = vpack.c.b16 %v2208, %v2206
      %v2281 = vpack.c.b16 %v2211, %v2209
      %v2282 = vpack.c.b16 %v2212, %v2210
      %v2283 = vpack.c.b16 %v2215, %v2213
      %v2284 = vpack.c.b16 %v2216, %v2214
      %v2285 = vpack.c.b16 %v2219, %v2217
      %v2286 = vpack.c.b16 %v2220, %v2218
      %v2287 = vpack.c.b16 %v2223, %v2221
      %v2288 = vpack.c.b16 %v2224, %v2222
      %2353 = vmatprep.subr.bf16.mxu0 %v2226
      %2354 = vmatpush1.bf16.msra.mxu0 %v2225
      %2355 = vmatprep.subr.bf16.mxu0 %v2228
      %2356 = vmatpush1.bf16.msra.mxu0 %v2227
      %2357 = vmatprep.subr.bf16.mxu0 %v2230
      %2358 = vmatpush1.bf16.msra.mxu0 %v2229
      %2359 = vmatprep.subr.bf16.mxu0 %v2232
      %2360 = vmatpush1.bf16.msra.mxu0 %v2231
      %2361 = vmatprep.subr.bf16.mxu0 %v2234
      %2362 = vmatpush1.bf16.msra.mxu0 %v2233
      %2363 = vmatprep.subr.bf16.mxu0 %v2236
      %2364 = vmatpush1.bf16.msra.mxu0 %v2235
      %2365 = vmatprep.subr.bf16.mxu0 %v2238
      %2366 = vmatpush1.bf16.msra.mxu0 %v2237
      %2367 = vmatprep.subr.bf16.mxu0 %v2240
      %2368 = vmatpush1.bf16.msra.mxu0 %v2239
      %2369 = vmatprep.subr.bf16.mxu0 %v2242
      %2370 = vmatpush1.bf16.msra.mxu0 %v2241
      %2371 = vmatprep.subr.bf16.mxu0 %v2244
      %2372 = vmatpush1.bf16.msra.mxu0 %v2243
      %2373 = vmatprep.subr.bf16.mxu0 %v2246
      %2374 = vmatpush1.bf16.msra.mxu0 %v2245
      %2375 = vmatprep.subr.bf16.mxu0 %v2248
      %2376 = vmatpush1.bf16.msra.mxu0 %v2247
      %2377 = vmatprep.subr.bf16.mxu0 %v2250
      %2378 = vmatpush1.bf16.msra.mxu0 %v2249
      %2379 = vmatprep.subr.bf16.mxu0 %v2252
      %2380 = vmatpush1.bf16.msra.mxu0 %v2251
      %2381 = vmatprep.subr.bf16.mxu0 %v2254
      %2382 = vmatpush1.bf16.msra.mxu0 %v2253
      %2383 = vmatprep.subr.bf16.mxu0 %v2256
      %2384 = vmatpush1.bf16.msra.mxu0 %v2255
      %2385 = vmatprep.mubr.bf16.mxu0 %v2004
      %2386 = vmatmul.mubr.bf16.gmra.mrb[0].mxu0 %v1992
      %v2387 = vpop.f32.mrb[0].mxu0
      %v2388 = vadd.f32 0.0, %v2387
      %v2389 = vpop.f32.mrb[0].mxu0
      %v2390 = vadd.f32 0.0, %v2389
      %v2391 = vpop.f32.mrb[0].mxu0
      %v2392 = vadd.f32 0.0, %v2391
      %v2393 = vpop.f32.mrb[0].mxu0
      %v2394 = vadd.f32 0.0, %v2393
      %2395 = vdwg.mxu0
      %2396 = vmatprep.subr.bf16.mxu0 %v2258
      %2397 = vmatpush1.bf16.msra.mxu0 %v2257
      %2398 = vmatprep.subr.bf16.mxu0 %v2260
      %2399 = vmatpush1.bf16.msra.mxu0 %v2259
      %2400 = vmatprep.subr.bf16.mxu0 %v2262
      %2401 = vmatpush1.bf16.msra.mxu0 %v2261
      %2402 = vmatprep.subr.bf16.mxu0 %v2264
      %2403 = vmatpush1.bf16.msra.mxu0 %v2263
      %2404 = vmatprep.subr.bf16.mxu0 %v2266
      %2405 = vmatpush1.bf16.msra.mxu0 %v2265
      %2406 = vmatprep.subr.bf16.mxu0 %v2268
      %2407 = vmatpush1.bf16.msra.mxu0 %v2267
      %2408 = vmatprep.subr.bf16.mxu0 %v2270
      %2409 = vmatpush1.bf16.msra.mxu0 %v2269
      %2410 = vmatprep.subr.bf16.mxu0 %v2272
      %2411 = vmatpush1.bf16.msra.mxu0 %v2271
      %2412 = vmatprep.subr.bf16.mxu0 %v2274
      %2413 = vmatpush1.bf16.msra.mxu0 %v2273
      %2414 = vmatprep.subr.bf16.mxu0 %v2276
      %2415 = vmatpush1.bf16.msra.mxu0 %v2275
      %2416 = vmatprep.subr.bf16.mxu0 %v2278
      %2417 = vmatpush1.bf16.msra.mxu0 %v2277
      %2418 = vmatprep.subr.bf16.mxu0 %v2280
      %2419 = vmatpush1.bf16.msra.mxu0 %v2279
      %2420 = vmatprep.subr.bf16.mxu0 %v2282
      %2421 = vmatpush1.bf16.msra.mxu0 %v2281
      %2422 = vmatprep.subr.bf16.mxu0 %v2284
      %2423 = vmatpush1.bf16.msra.mxu0 %v2283
      %2424 = vmatprep.subr.bf16.mxu0 %v2286
      %2425 = vmatpush1.bf16.msra.mxu0 %v2285
      %2426 = vmatprep.subr.bf16.mxu0 %v2288
      %2427 = vmatpush1.bf16.msra.mxu0 %v2287
      %2428 = vmatprep.mubr.bf16.mxu0 %v2028
      %2429 = vmatmul.mubr.bf16.gmra.mrb[0].mxu0 %v2016
      %v2430 = vpop.f32.mrb[0].mxu0
      %v2431 = vadd.f32 %v2388, %v2430
      %v2432 = vpop.f32.mrb[0].mxu0
      %v2433 = vadd.f32 %v2390, %v2432
      %v2434 = vpop.f32.mrb[0].mxu0
      %v2435 = vadd.f32 %v2392, %v2434
      %v2436 = vpop.f32.mrb[0].mxu0
      %v2437 = vadd.f32 %v2394, %v2436
      %2438 = vdwg.mxu0
      %v2507 = vunpack.c.l.b16 %v1826
      %v2508 = vunpack.c.h.b16 %v1826
      %v2509 = vunpack.c.l.b16 %v1827
      %v2510 = vunpack.c.h.b16 %v1827
      %v2511 = vunpack.c.l.b16 %v1828
      %v2512 = vunpack.c.h.b16 %v1828
      %v2513 = vunpack.c.l.b16 %v1829
      %v2514 = vunpack.c.h.b16 %v1829
      %v2515 = vunpack.c.l.b16 %v1830
      %v2516 = vunpack.c.h.b16 %v1830
      %v2517 = vunpack.c.l.b16 %v1831
      %v2518 = vunpack.c.h.b16 %v1831
      %v2519 = vunpack.c.l.b16 %v1832
      %v2520 = vunpack.c.h.b16 %v1832
      %v2521 = vunpack.c.l.b16 %v1833
      %v2522 = vunpack.c.h.b16 %v1833
      %v2523 = vunpack.c.l.b16 %v1834
      %v2524 = vunpack.c.h.b16 %v1834
      %v2525 = vunpack.c.l.b16 %v1835
      %v2526 = vunpack.c.h.b16 %v1835
      %v2527 = vunpack.c.l.b16 %v1836
      %v2528 = vunpack.c.h.b16 %v1836
      %v2529 = vunpack.c.l.b16 %v1837
      %v2530 = vunpack.c.h.b16 %v1837
      %v2531 = vunpack.c.l.b16 %v1838
      %v2532 = vunpack.c.h.b16 %v1838
      %v2533 = vunpack.c.l.b16 %v1839
      %v2534 = vunpack.c.h.b16 %v1839
      %v2535 = vunpack.c.l.b16 %v1840
      %v2536 = vunpack.c.h.b16 %v1840
      %v2537 = vunpack.c.l.b16 %v1841
      %v2538 = vunpack.c.h.b16 %v1841
      %v2539 = vunpack.c.l.b16 %v1842
      %v2540 = vunpack.c.h.b16 %v1842
      %v2541 = vunpack.c.l.b16 %v1843
      %v2542 = vunpack.c.h.b16 %v1843
      %v2543 = vunpack.c.l.b16 %v1844
      %v2544 = vunpack.c.h.b16 %v1844
      %v2545 = vunpack.c.l.b16 %v1845
      %v2546 = vunpack.c.h.b16 %v1845
      %v2547 = vunpack.c.l.b16 %v1846
      %v2548 = vunpack.c.h.b16 %v1846
      %v2549 = vunpack.c.l.b16 %v1847
      %v2550 = vunpack.c.h.b16 %v1847
      %v2551 = vunpack.c.l.b16 %v1848
      %v2552 = vunpack.c.h.b16 %v1848
      %v2553 = vunpack.c.l.b16 %v1849
      %v2554 = vunpack.c.h.b16 %v1849
      %v2555 = vunpack.c.l.b16 %v1850
      %v2556 = vunpack.c.h.b16 %v1850
      %v2557 = vunpack.c.l.b16 %v1851
      %v2558 = vunpack.c.h.b16 %v1851
      %v2559 = vunpack.c.l.b16 %v1852
      %v2560 = vunpack.c.h.b16 %v1852
      %v2561 = vunpack.c.l.b16 %v1853
      %v2562 = vunpack.c.h.b16 %v1853
      %v2563 = vunpack.c.l.b16 %v1854
      %v2564 = vunpack.c.h.b16 %v1854
      %v2565 = vunpack.c.l.b16 %v1855
      %v2566 = vunpack.c.h.b16 %v1855
      %v2567 = vunpack.c.l.b16 %v1856
      %v2568 = vunpack.c.h.b16 %v1856
      %v2569 = vunpack.c.l.b16 %v1857
      %v2570 = vunpack.c.h.b16 %v1857
      %v2571 = vunpack.c.l.b16 %v1858
      %v2572 = vunpack.c.h.b16 %v1858
      %v2573 = vunpack.c.l.b16 %v1859
      %v2574 = vunpack.c.h.b16 %v1859
      %v2575 = vunpack.c.l.b16 %v1860
      %v2576 = vunpack.c.h.b16 %v1860
      %v2577 = vunpack.c.l.b16 %v1861
      %v2578 = vunpack.c.h.b16 %v1861
      %v2579 = vunpack.c.l.b16 %v1862
      %v2580 = vunpack.c.h.b16 %v1862
      %v2581 = vunpack.c.l.b16 %v1863
      %v2582 = vunpack.c.h.b16 %v1863
      %v2583 = vunpack.c.l.b16 %v1864
      %v2584 = vunpack.c.h.b16 %v1864
      %v2585 = vunpack.c.l.b16 %v1865
      %v2586 = vunpack.c.h.b16 %v1865
      %v2587 = vunpack.c.l.b16 %v1866
      %v2588 = vunpack.c.h.b16 %v1866
      %v2589 = vunpack.c.l.b16 %v1867
      %v2590 = vunpack.c.h.b16 %v1867
      %v2591 = vunpack.c.l.b16 %v1868
      %v2592 = vunpack.c.h.b16 %v1868
      %v2593 = vunpack.c.l.b16 %v1869
      %v2594 = vunpack.c.h.b16 %v1869
      %v2595 = vunpack.c.l.b16 %v1870
      %v2596 = vunpack.c.h.b16 %v1870
      %v2597 = vunpack.c.l.b16 %v1871
      %v2598 = vunpack.c.h.b16 %v1871
      %v2599 = vunpack.c.l.b16 %v1872
      %v2600 = vunpack.c.h.b16 %v1872
      %v2601 = vunpack.c.l.b16 %v1873
      %v2602 = vunpack.c.h.b16 %v1873
      %v2603 = vunpack.c.l.b16 %v1874
      %v2604 = vunpack.c.h.b16 %v1874
      %v2605 = vunpack.c.l.b16 %v1875
      %v2606 = vunpack.c.h.b16 %v1875
      %v2607 = vunpack.c.l.b16 %v1876
      %v2608 = vunpack.c.h.b16 %v1876
      %v2609 = vunpack.c.l.b16 %v1877
      %v2610 = vunpack.c.h.b16 %v1877
      %v2611 = vunpack.c.l.b16 %v1878
      %v2612 = vunpack.c.h.b16 %v1878
      %v2613 = vunpack.c.l.b16 %v1879
      %v2614 = vunpack.c.h.b16 %v1879
      %v2615 = vunpack.c.l.b16 %v1880
      %v2616 = vunpack.c.h.b16 %v1880
      %v2617 = vunpack.c.l.b16 %v1881
      %v2618 = vunpack.c.h.b16 %v1881
      %v2619 = vunpack.c.l.b16 %v1882
      %v2620 = vunpack.c.h.b16 %v1882
      %v2621 = vunpack.c.l.b16 %v1883
      %v2622 = vunpack.c.h.b16 %v1883
      %v2623 = vunpack.c.l.b16 %v1884
      %v2624 = vunpack.c.h.b16 %v1884
      %v2625 = vunpack.c.l.b16 %v1885
      %v2626 = vunpack.c.h.b16 %v1885
      %v2627 = vunpack.c.l.b16 %v1886
      %v2628 = vunpack.c.h.b16 %v1886
      %v2629 = vunpack.c.l.b16 %v1887
      %v2630 = vunpack.c.h.b16 %v1887
      %v2631 = vunpack.c.l.b16 %v1888
      %v2632 = vunpack.c.h.b16 %v1888
      %v2633 = vunpack.c.l.b16 %v1889
      %v2634 = vunpack.c.h.b16 %v1889
      %v2635 = vpack.c.b16 %v2509, %v2507
      %v2636 = vpack.c.b16 %v2510, %v2508
      %v2637 = vpack.c.b16 %v2513, %v2511
      %v2638 = vpack.c.b16 %v2514, %v2512
      %v2639 = vpack.c.b16 %v2517, %v2515
      %v2640 = vpack.c.b16 %v2518, %v2516
      %v2641 = vpack.c.b16 %v2521, %v2519
      %v2642 = vpack.c.b16 %v2522, %v2520
      %v2643 = vpack.c.b16 %v2525, %v2523
      %v2644 = vpack.c.b16 %v2526, %v2524
      %v2645 = vpack.c.b16 %v2529, %v2527
      %v2646 = vpack.c.b16 %v2530, %v2528
      %v2647 = vpack.c.b16 %v2533, %v2531
      %v2648 = vpack.c.b16 %v2534, %v2532
      %v2649 = vpack.c.b16 %v2537, %v2535
      %v2650 = vpack.c.b16 %v2538, %v2536
      %v2651 = vpack.c.b16 %v2541, %v2539
      %v2652 = vpack.c.b16 %v2542, %v2540
      %v2653 = vpack.c.b16 %v2545, %v2543
      %v2654 = vpack.c.b16 %v2546, %v2544
      %v2655 = vpack.c.b16 %v2549, %v2547
      %v2656 = vpack.c.b16 %v2550, %v2548
      %v2657 = vpack.c.b16 %v2553, %v2551
      %v2658 = vpack.c.b16 %v2554, %v2552
      %v2659 = vpack.c.b16 %v2557, %v2555
      %v2660 = vpack.c.b16 %v2558, %v2556
      %v2661 = vpack.c.b16 %v2561, %v2559
      %v2662 = vpack.c.b16 %v2562, %v2560
      %v2663 = vpack.c.b16 %v2565, %v2563
      %v2664 = vpack.c.b16 %v2566, %v2564
      %v2665 = vpack.c.b16 %v2569, %v2567
      %v2666 = vpack.c.b16 %v2570, %v2568
      %v2667 = vpack.c.b16 %v2573, %v2571
      %v2668 = vpack.c.b16 %v2574, %v2572
      %v2669 = vpack.c.b16 %v2577, %v2575
      %v2670 = vpack.c.b16 %v2578, %v2576
      %v2671 = vpack.c.b16 %v2581, %v2579
      %v2672 = vpack.c.b16 %v2582, %v2580
      %v2673 = vpack.c.b16 %v2585, %v2583
      %v2674 = vpack.c.b16 %v2586, %v2584
      %v2675 = vpack.c.b16 %v2589, %v2587
      %v2676 = vpack.c.b16 %v2590, %v2588
      %v2677 = vpack.c.b16 %v2593, %v2591
      %v2678 = vpack.c.b16 %v2594, %v2592
      %v2679 = vpack.c.b16 %v2597, %v2595
      %v2680 = vpack.c.b16 %v2598, %v2596
      %v2681 = vpack.c.b16 %v2601, %v2599
      %v2682 = vpack.c.b16 %v2602, %v2600
      %v2683 = vpack.c.b16 %v2605, %v2603
      %v2684 = vpack.c.b16 %v2606, %v2604
      %v2685 = vpack.c.b16 %v2609, %v2607
      %v2686 = vpack.c.b16 %v2610, %v2608
      %v2687 = vpack.c.b16 %v2613, %v2611
      %v2688 = vpack.c.b16 %v2614, %v2612
      %v2689 = vpack.c.b16 %v2617, %v2615
      %v2690 = vpack.c.b16 %v2618, %v2616
      %v2691 = vpack.c.b16 %v2621, %v2619
      %v2692 = vpack.c.b16 %v2622, %v2620
      %v2693 = vpack.c.b16 %v2625, %v2623
      %v2694 = vpack.c.b16 %v2626, %v2624
      %v2695 = vpack.c.b16 %v2629, %v2627
      %v2696 = vpack.c.b16 %v2630, %v2628
      %v2697 = vpack.c.b16 %v2633, %v2631
      %v2698 = vpack.c.b16 %v2634, %v2632
      %2763 = vmatprep.subr.bf16.mxu0 %v2636
      %2764 = vmatpush1.bf16.msra.mxu0 %v2635
      %2765 = vmatprep.subr.bf16.mxu0 %v2638
      %2766 = vmatpush1.bf16.msra.mxu0 %v2637
      %2767 = vmatprep.subr.bf16.mxu0 %v2640
      %2768 = vmatpush1.bf16.msra.mxu0 %v2639
      %2769 = vmatprep.subr.bf16.mxu0 %v2642
      %2770 = vmatpush1.bf16.msra.mxu0 %v2641
      %2771 = vmatprep.subr.bf16.mxu0 %v2644
      %2772 = vmatpush1.bf16.msra.mxu0 %v2643
      %2773 = vmatprep.subr.bf16.mxu0 %v2646
      %2774 = vmatpush1.bf16.msra.mxu0 %v2645
      %2775 = vmatprep.subr.bf16.mxu0 %v2648
      %2776 = vmatpush1.bf16.msra.mxu0 %v2647
      %2777 = vmatprep.subr.bf16.mxu0 %v2650
      %2778 = vmatpush1.bf16.msra.mxu0 %v2649
      %2779 = vmatprep.subr.bf16.mxu0 %v2652
      %2780 = vmatpush1.bf16.msra.mxu0 %v2651
      %2781 = vmatprep.subr.bf16.mxu0 %v2654
      %2782 = vmatpush1.bf16.msra.mxu0 %v2653
      %2783 = vmatprep.subr.bf16.mxu0 %v2656
      %2784 = vmatpush1.bf16.msra.mxu0 %v2655
      %2785 = vmatprep.subr.bf16.mxu0 %v2658
      %2786 = vmatpush1.bf16.msra.mxu0 %v2657
      %2787 = vmatprep.subr.bf16.mxu0 %v2660
      %2788 = vmatpush1.bf16.msra.mxu0 %v2659
      %2789 = vmatprep.subr.bf16.mxu0 %v2662
      %2790 = vmatpush1.bf16.msra.mxu0 %v2661
      %2791 = vmatprep.subr.bf16.mxu0 %v2664
      %2792 = vmatpush1.bf16.msra.mxu0 %v2663
      %2793 = vmatprep.subr.bf16.mxu0 %v2666
      %2794 = vmatpush1.bf16.msra.mxu0 %v2665
      %2795 = vmatprep.mubr.bf16.mxu0 %v1974
      %2796 = vmatmul.mubr.bf16.gmra.mrb[0].mxu0 %v1973
      %v2797 = vpop.f32.mrb[0].mxu0
      %v2798 = vadd.f32 %v2431, %v2797
      %v2799 = vpop.f32.mrb[0].mxu0
      %v2800 = vadd.f32 %v2433, %v2799
      %v2801 = vpop.f32.mrb[0].mxu0
      %v2802 = vadd.f32 %v2435, %v2801
      %v2803 = vpop.f32.mrb[0].mxu0
      %v2804 = vadd.f32 %v2437, %v2803
      %2805 = vdwg.mxu0
      %2806 = vmatprep.subr.bf16.mxu0 %v2668
      %2807 = vmatpush1.bf16.msra.mxu0 %v2667
      %2808 = vmatprep.subr.bf16.mxu0 %v2670
      %2809 = vmatpush1.bf16.msra.mxu0 %v2669
      %2810 = vmatprep.subr.bf16.mxu0 %v2672
      %2811 = vmatpush1.bf16.msra.mxu0 %v2671
      %2812 = vmatprep.subr.bf16.mxu0 %v2674
      %2813 = vmatpush1.bf16.msra.mxu0 %v2673
      %2814 = vmatprep.subr.bf16.mxu0 %v2676
      %2815 = vmatpush1.bf16.msra.mxu0 %v2675
      %2816 = vmatprep.subr.bf16.mxu0 %v2678
      %2817 = vmatpush1.bf16.msra.mxu0 %v2677
      %2818 = vmatprep.subr.bf16.mxu0 %v2680
      %2819 = vmatpush1.bf16.msra.mxu0 %v2679
      %2820 = vmatprep.subr.bf16.mxu0 %v2682
      %2821 = vmatpush1.bf16.msra.mxu0 %v2681
      %2822 = vmatprep.subr.bf16.mxu0 %v2684
      %2823 = vmatpush1.bf16.msra.mxu0 %v2683
      %2824 = vmatprep.subr.bf16.mxu0 %v2686
      %2825 = vmatpush1.bf16.msra.mxu0 %v2685
      %2826 = vmatprep.subr.bf16.mxu0 %v2688
      %2827 = vmatpush1.bf16.msra.mxu0 %v2687
      %2828 = vmatprep.subr.bf16.mxu0 %v2690
      %2829 = vmatpush1.bf16.msra.mxu0 %v2689
      %2830 = vmatprep.subr.bf16.mxu0 %v2692
      %2831 = vmatpush1.bf16.msra.mxu0 %v2691
      %2832 = vmatprep.subr.bf16.mxu0 %v2694
      %2833 = vmatpush1.bf16.msra.mxu0 %v2693
      %2834 = vmatprep.subr.bf16.mxu0 %v2696
      %2835 = vmatpush1.bf16.msra.mxu0 %v2695
      %2836 = vmatprep.subr.bf16.mxu0 %v2698
      %2837 = vmatpush1.bf16.msra.mxu0 %v2697
      %2838 = vmatprep.mubr.bf16.mxu0 %v1976
      %2839 = vmatmul.mubr.bf16.gmra.mrb[0].mxu0 %v1975
      %v2840 = vpop.f32.mrb[0].mxu0
      %v2841 = vadd.f32 %v2798, %v2840
      %v2842 = vpop.f32.mrb[0].mxu0
      %v2843 = vadd.f32 %v2800, %v2842
      %v2844 = vpop.f32.mrb[0].mxu0
      %v2845 = vadd.f32 %v2802, %v2844
      %v2846 = vpop.f32.mrb[0].mxu0
      %v2847 = vadd.f32 %v2804, %v2846
      %2848 = vdwg.mxu0
      %vm2849 = vcmp.ge.f32.partialorder %v2841, 0.0
      %vm2850 = vcmp.ge.f32.partialorder %v2843, 0.0
      %vm2851 = vcmp.ge.f32.partialorder %v2845, 0.0
      %vm2852 = vcmp.ge.f32.partialorder %v2847, 0.0
      %v2853 = vmul.f32 %v2841, 0.01
      %v2854 = vmul.f32 %v2843, 0.01
      %v2855 = vmul.f32 %v2845, 0.01
      %v2856 = vmul.f32 %v2847, 0.01
      %v2857 = vsel %vm2849, %v2841, %v2853
      %v2858 = vsel %vm2850, %v2843, %v2854
      %v2859 = vsel %vm2851, %v2845, %v2855
      %v2860 = vsel %vm2852, %v2847, %v2856
      %v2861 = vpack.c.bf16 %v2859, %v2857
      %v2862 = vpack.c.bf16 %v2860, %v2858
      %v2865 = vunpack.c.l.b16 %v2861
      %v2866 = vunpack.c.l.b16 %v2862
      %v2867 = vpack.c.b16 %v2866, %v2865
      %v2869 = vld [vmem:[#allocation3 + $0x8] sm:$0x11]
      %v2870 = vsel %vm408, %v2867, %v2869
      %2871 = vst [vmem:[#allocation3 + $0x8] sm:$0x11] %v2870
      %v2872 = vld [vmem:[#allocation3] sm:$0x11]
      %v2873 = vsel %vm1607, %v2867, %v2872
      %2874 = vst [vmem:[#allocation3] sm:$0x11] %v2873
      %v2876 = vshll.u32 %v2867, 16
      %v2878 = vrot.slane %v2876, 5
      %v2879 = vrot.slane %v2878, 4
      %v2881 = vld [vmem:[#allocation3 + $0x8] sm:$0x11]
      %v2882 = vsel %vm1607, %v2879, %v2881
      %2883 = vst [vmem:[#allocation3 + $0x8] sm:$0x11] %v2882
      %v2884 = vshrl.u32 %v2867, 16
      %v2886 = vrot.slane %v2884, 4
      %v2887 = vrot.slane %v2886, 4
      %v2889 = vld [vmem:[#allocation3] sm:$0x22]
      %v2890 = vsel %vm1631, %v2887, %v2889
      %2891 = vst [vmem:[#allocation3] sm:$0x22] %v2890
      %v2892 = vrot.slane %v2867, 5
      %v2893 = vrot.slane %v2892, 4
      %v2895 = vld [vmem:[#allocation3 + $0x8] sm:$0x22]
      %v2896 = vsel %vm1631, %v2893, %v2895
      %2897 = vst [vmem:[#allocation3 + $0x8] sm:$0x22] %v2896
      %v2898 = vld [vmem:[#allocation3] sm:$0x22]
      %v2899 = vsel %vm1645, %v2893, %v2898
      %2900 = vst [vmem:[#allocation3] sm:$0x22] %v2899
      %v2901 = vrot.slane %v2876, 6
      %v2902 = vrot.slane %v2901, 4
      %v2904 = vld [vmem:[#allocation3 + $0x8] sm:$0x22]
      %v2905 = vsel %vm1645, %v2902, %v2904
      %2906 = vst [vmem:[#allocation3 + $0x8] sm:$0x22] %v2905
      %v2907 = vrot.slane %v2884, 5
      %v2908 = vrot.slane %v2907, 4
      %v2910 = vld [vmem:[#allocation3] sm:$0x44]
      %v2911 = vsel %vm1662, %v2908, %v2910
      %2912 = vst [vmem:[#allocation3] sm:$0x44] %v2911
      %v2913 = vunpack.c.h.b16 %v2861
      %v2914 = vunpack.c.h.b16 %v2862
      %v2915 = vpack.c.b16 %v2914, %v2913
      %v2916 = vrot.slane %v2915, 6
      %v2918 = vld [vmem:[#allocation3 + $0x8] sm:$0x44]
      %v2919 = vsel %vm1662, %v2916, %v2918
      %2920 = vst [vmem:[#allocation3 + $0x8] sm:$0x44] %v2919
      %v2921 = vld [vmem:[#allocation3] sm:$0x44]
      %v2922 = vsel %vm1678, %v2916, %v2921
      %2923 = vst [vmem:[#allocation3] sm:$0x44] %v2922
      %v2925 = vshll.u32 %v2915, 16
      %v2927 = vrot.slane %v2925, 7
      %v2929 = vld [vmem:[#allocation3 + $0x8] sm:$0x44]
      %v2930 = vsel %vm1678, %v2927, %v2929
      %2931 = vst [vmem:[#allocation3 + $0x8] sm:$0x44] %v2930
      %v2932 = vshrl.u32 %v2915, 16
      %v2934 = vrot.slane %v2932, 6
      %v2936 = vld [vmem:[#allocation3] sm:$0x88]
      %v2937 = vsel %vm1699, %v2934, %v2936
      %2938 = vst [vmem:[#allocation3] sm:$0x88] %v2937
      %v2939 = vrot.slane %v2915, 7
      %v2941 = vld [vmem:[#allocation3 + $0x8] sm:$0x88]
      %v2942 = vsel %vm1699, %v2939, %v2941
      %2943 = vst [vmem:[#allocation3 + $0x8] sm:$0x88] %v2942
      %v2944 = vld [vmem:[#allocation3] sm:$0x88]
      %v2945 = vsel %vm1712, %v2939, %v2944
      %2946 = vst [vmem:[#allocation3] sm:$0x88] %v2945
      %v2948 = vld [vmem:[#allocation3 + $0x8] sm:$0x88]
      %v2949 = vsel %vm1712, %v2925, %v2948
      %2950 = vst [vmem:[#allocation3 + $0x8] sm:$0x88] %v2949
      %v2951 = vrot.slane %v2932, 7
      %v2952 = vrot.slane %v2951, 4
      %v2954 = vld [vmem:[#allocation3 + $0x10] sm:$0x11]
      %v2955 = vsel %vm408, %v2952, %v2954
      %2956 = vst [vmem:[#allocation3 + $0x10] sm:$0x11] %v2955
      %v2957 = vld [vmem:[#allocation3] sm:$0xff]
      %v2958 = vld [vmem:[#allocation3 + $0x8] sm:$0xff]
      %v2959 = vld [vmem:[#allocation3 + $0x10] sm:$0x11]
      %v2960 = vld [vmem:[#allocation3 + $0x18] sm:$0x11]
      %v2961 = vld [vmem:[%s4] sm:$0xff]
      %v2962 = vld [vmem:[%s4 + $0x8] sm:$0xff]
      %v2963 = vld [vmem:[%s4 + $0x10] sm:$0xff]
      %v2964 = vld [vmem:[%s4 + $0x18] sm:$0xff]
      %v2965 = vld [vmem:[%s4 + $0x20] sm:$0xff]
      %v2966 = vld [vmem:[%s4 + $0x28] sm:$0xff]
      %v2967 = vld [vmem:[%s4 + $0x30] sm:$0xff]
      %v2968 = vld [vmem:[%s4 + $0x38] sm:$0xff]
      %v2969 = vld [vmem:[%s4 + $0x40] sm:$0xff]
      %v2970 = vld [vmem:[%s4 + $0x48] sm:$0xff]
      %v2971 = vld [vmem:[%s4 + $0x50] sm:$0xff]
      %v2972 = vld [vmem:[%s4 + $0x58] sm:$0xff]
      %v2973 = vld [vmem:[%s4 + $0x60] sm:$0xff]
      %v2974 = vld [vmem:[%s4 + $0x68] sm:$0xff]
      %v2975 = vld [vmem:[%s4 + $0x70] sm:$0xff]
      %v2976 = vld [vmem:[%s4 + $0x78] sm:$0xff]
      %v2977 = vld [vmem:[%s4 + $0x80] sm:$0xff]
      %v2978 = vld [vmem:[%s4 + $0x88] sm:$0xff]
      %v2979 = vld [vmem:[%s4 + $0x90] sm:$0xff]
      %v2980 = vld [vmem:[%s4 + $0x98] sm:$0xff]
      %v2981 = vld [vmem:[%s4 + $0xa0] sm:$0xff]
      %v2982 = vld [vmem:[%s4 + $0xa8] sm:$0xff]
      %v2983 = vld [vmem:[%s4 + $0xb0] sm:$0xff]
      %v2984 = vld [vmem:[%s4 + $0xb8] sm:$0xff]
      %v2985 = vld [vmem:[%s4 + $0xc0] sm:$0xff]
      %v2986 = vld [vmem:[%s4 + $0xc8] sm:$0xff]
      %v2987 = vld [vmem:[%s4 + $0xd0] sm:$0xff]
      %v2988 = vld [vmem:[%s4 + $0xd8] sm:$0xff]
      %v2989 = vld [vmem:[%s4 + $0xe0] sm:$0xff]
      %v2990 = vld [vmem:[%s4 + $0xe8] sm:$0xff]
      %v2991 = vld [vmem:[%s4 + $0xf0] sm:$0xff]
      %v2992 = vld [vmem:[%s4 + $0xf8] sm:$0xff]
      %v2993 = vld [vmem:[%s4 + $0x100] sm:$0xff]
      %v2994 = vld [vmem:[%s4 + $0x108] sm:$0xff]
      %v2995 = vld [vmem:[%s4 + $0x110] sm:$0xff]
      %v2996 = vld [vmem:[%s4 + $0x118] sm:$0xff]
      %v2997 = vld [vmem:[%s4 + $0x120] sm:$0xff]
      %v2998 = vld [vmem:[%s4 + $0x128] sm:$0xff]
      %v2999 = vld [vmem:[%s4 + $0x130] sm:$0xff]
      %v3000 = vld [vmem:[%s4 + $0x138] sm:$0xff]
      %v3001 = vld [vmem:[%s4 + $0x140] sm:$0xff]
      %v3002 = vld [vmem:[%s4 + $0x148] sm:$0xff]
      %v3003 = vld [vmem:[%s4 + $0x150] sm:$0xff]
      %v3004 = vld [vmem:[%s4 + $0x158] sm:$0xff]
      %v3005 = vld [vmem:[%s4 + $0x160] sm:$0xff]
      %v3006 = vld [vmem:[%s4 + $0x168] sm:$0xff]
      %v3007 = vld [vmem:[%s4 + $0x170] sm:$0xff]
      %v3008 = vld [vmem:[%s4 + $0x178] sm:$0xff]
      %v3009 = vld [vmem:[%s4 + $0x180] sm:$0xff]
      %v3010 = vld [vmem:[%s4 + $0x188] sm:$0xff]
      %v3011 = vld [vmem:[%s4 + $0x190] sm:$0xff]
      %v3012 = vld [vmem:[%s4 + $0x198] sm:$0xff]
      %v3013 = vld [vmem:[%s4 + $0x1a0] sm:$0xff]
      %v3014 = vld [vmem:[%s4 + $0x1a8] sm:$0xff]
      %v3015 = vld [vmem:[%s4 + $0x1b0] sm:$0xff]
      %v3016 = vld [vmem:[%s4 + $0x1b8] sm:$0xff]
      %v3017 = vld [vmem:[%s4 + $0x1c0] sm:$0xff]
      %v3018 = vld [vmem:[%s4 + $0x1c8] sm:$0xff]
      %v3019 = vld [vmem:[%s4 + $0x1d0] sm:$0xff]
      %v3020 = vld [vmem:[%s4 + $0x1d8] sm:$0xff]
      %v3021 = vld [vmem:[%s4 + $0x1e0] sm:$0xff]
      %v3022 = vld [vmem:[%s4 + $0x1e8] sm:$0xff]
      %v3023 = vld [vmem:[%s4 + $0x1f0] sm:$0xff]
      %v3024 = vld [vmem:[%s4 + $0x1f8] sm:$0xff]
      %s3025 = scalar_lea.vmem %s4, 512
      %v3026 = vld [vmem:[%s3025] sm:$0xff]
      %v3027 = vld [vmem:[%s3025 + $0x8] sm:$0xff]
      %v3028 = vld [vmem:[%s3025 + $0x10] sm:$0xff]
      %v3029 = vld [vmem:[%s3025 + $0x18] sm:$0xff]
      %v3030 = vld [vmem:[%s3025 + $0x20] sm:$0xff]
      %v3031 = vld [vmem:[%s3025 + $0x28] sm:$0xff]
      %v3032 = vld [vmem:[%s3025 + $0x30] sm:$0xff]
      %v3033 = vld [vmem:[%s3025 + $0x38] sm:$0xff]
      %v3034 = vld [vmem:[%s3025 + $0x40] sm:$0xff]
      %v3035 = vld [vmem:[%s3025 + $0x48] sm:$0xff]
      %v3036 = vld [vmem:[%s3025 + $0x50] sm:$0xff]
      %v3037 = vld [vmem:[%s3025 + $0x58] sm:$0xff]
      %v3038 = vld [vmem:[%s3025 + $0x60] sm:$0xff]
      %v3039 = vld [vmem:[%s3025 + $0x68] sm:$0xff]
      %v3040 = vld [vmem:[%s3025 + $0x70] sm:$0xff]
      %v3041 = vld [vmem:[%s3025 + $0x78] sm:$0xff]
      %v3042 = vld [vmem:[%s3025 + $0x80] sm:$0xff]
      %v3043 = vld [vmem:[%s3025 + $0x88] sm:$0xff]
      %v3044 = vld [vmem:[%s3025 + $0x90] sm:$0xff]
      %v3045 = vld [vmem:[%s3025 + $0x98] sm:$0xff]
      %v3046 = vld [vmem:[%s3025 + $0xa0] sm:$0xff]
      %v3047 = vld [vmem:[%s3025 + $0xa8] sm:$0xff]
      %v3048 = vld [vmem:[%s3025 + $0xb0] sm:$0xff]
      %v3049 = vld [vmem:[%s3025 + $0xb8] sm:$0xff]
      %v3050 = vld [vmem:[%s3025 + $0xc0] sm:$0xff]
      %v3051 = vld [vmem:[%s3025 + $0xc8] sm:$0xff]
      %v3052 = vld [vmem:[%s3025 + $0xd0] sm:$0xff]
      %v3053 = vld [vmem:[%s3025 + $0xd8] sm:$0xff]
      %v3054 = vld [vmem:[%s3025 + $0xe0] sm:$0xff]
      %v3055 = vld [vmem:[%s3025 + $0xe8] sm:$0xff]
      %v3056 = vld [vmem:[%s3025 + $0xf0] sm:$0xff]
      %v3057 = vld [vmem:[%s3025 + $0xf8] sm:$0xff]
      %v3058 = vld [vmem:[%s3025 + $0x100] sm:$0xff]
      %v3059 = vld [vmem:[%s3025 + $0x108] sm:$0xff]
      %v3060 = vld [vmem:[%s3025 + $0x110] sm:$0xff]
      %v3061 = vld [vmem:[%s3025 + $0x118] sm:$0xff]
      %v3062 = vld [vmem:[%s3025 + $0x120] sm:$0xff]
      %v3063 = vld [vmem:[%s3025 + $0x128] sm:$0xff]
      %v3064 = vld [vmem:[%s3025 + $0x130] sm:$0xff]
      %v3065 = vld [vmem:[%s3025 + $0x138] sm:$0xff]
      %v3066 = vld [vmem:[%s3025 + $0x140] sm:$0xff]
      %v3067 = vld [vmem:[%s3025 + $0x148] sm:$0xff]
      %v3068 = vld [vmem:[%s3025 + $0x150] sm:$0xff]
      %v3069 = vld [vmem:[%s3025 + $0x158] sm:$0xff]
      %v3070 = vld [vmem:[%s3025 + $0x160] sm:$0xff]
      %v3071 = vld [vmem:[%s3025 + $0x168] sm:$0xff]
      %v3072 = vld [vmem:[%s3025 + $0x170] sm:$0xff]
      %v3073 = vld [vmem:[%s3025 + $0x178] sm:$0xff]
      %v3074 = vld [vmem:[%s3025 + $0x180] sm:$0xff]
      %v3075 = vld [vmem:[%s3025 + $0x188] sm:$0xff]
      %v3076 = vld [vmem:[%s3025 + $0x190] sm:$0xff]
      %v3077 = vld [vmem:[%s3025 + $0x198] sm:$0xff]
      %v3078 = vld [vmem:[%s3025 + $0x1a0] sm:$0xff]
      %v3079 = vld [vmem:[%s3025 + $0x1a8] sm:$0xff]
      %v3080 = vld [vmem:[%s3025 + $0x1b0] sm:$0xff]
      %v3081 = vld [vmem:[%s3025 + $0x1b8] sm:$0xff]
      %v3082 = vld [vmem:[%s3025 + $0x1c0] sm:$0xff]
      %v3083 = vld [vmem:[%s3025 + $0x1c8] sm:$0xff]
      %v3084 = vld [vmem:[%s3025 + $0x1d0] sm:$0xff]
      %v3085 = vld [vmem:[%s3025 + $0x1d8] sm:$0xff]
      %v3086 = vld [vmem:[%s3025 + $0x1e0] sm:$0xff]
      %v3087 = vld [vmem:[%s3025 + $0x1e8] sm:$0xff]
      %v3088 = vld [vmem:[%s3025 + $0x1f0] sm:$0xff]
      %v3089 = vld [vmem:[%s3025 + $0x1f8] sm:$0xff]
      %v3094 = vunpack.c.l.b16 %v2957
      %v3095 = vunpack.c.h.b16 %v2957
      %v3096 = vunpack.c.l.b16 %v2958
      %v3097 = vunpack.c.h.b16 %v2958
      %v3098 = vunpack.c.l.b16 %v2959
      %v3099 = vunpack.c.h.b16 %v2959
      %v3100 = vunpack.c.l.b16 %v2960
      %v3101 = vunpack.c.h.b16 %v2960
      %v3102 = vpack.c.b16 %v3098, %v3094
      %v3103 = vpack.c.b16 %v3099, %v3095
      %v3104 = vpack.c.b16 %v3100, %v3096
      %v3105 = vpack.c.b16 %v3101, %v3097
      %v3107 = vshrl.u32 %v3102, 16
      %v3109 = vshll.u32 %v3102, 16
      %v3111 = vrot.slane %v3109, 1
      %v3112 = vor.u32 %v3107, %v3111
      %v3114 = vshrl.u32 %v3103, 16
      %v3116 = vshll.u32 %v3103, 16
      %v3118 = vrot.slane %v3116, 1
      %v3119 = vor.u32 %v3114, %v3118
      %v3121 = vshrl.u32 %v3104, 16
      %v3123 = vshll.u32 %v3104, 16
      %v3125 = vrot.slane %v3123, 1
      %v3126 = vor.u32 %v3121, %v3125
      %v3128 = vshrl.u32 %v3105, 16
      %v3130 = vshll.u32 %v3105, 16
      %v3132 = vrot.slane %v3130, 1
      %v3133 = vor.u32 %v3128, %v3132
      %v3202 = vunpack.c.l.b16 %v3026
      %v3203 = vunpack.c.h.b16 %v3026
      %v3204 = vunpack.c.l.b16 %v3027
      %v3205 = vunpack.c.h.b16 %v3027
      %v3206 = vunpack.c.l.b16 %v3028
      %v3207 = vunpack.c.h.b16 %v3028
      %v3208 = vunpack.c.l.b16 %v3029
      %v3209 = vunpack.c.h.b16 %v3029
      %v3210 = vunpack.c.l.b16 %v3030
      %v3211 = vunpack.c.h.b16 %v3030
      %v3212 = vunpack.c.l.b16 %v3031
      %v3213 = vunpack.c.h.b16 %v3031
      %v3214 = vunpack.c.l.b16 %v3032
      %v3215 = vunpack.c.h.b16 %v3032
      %v3216 = vunpack.c.l.b16 %v3033
      %v3217 = vunpack.c.h.b16 %v3033
      %v3218 = vunpack.c.l.b16 %v3034
      %v3219 = vunpack.c.h.b16 %v3034
      %v3220 = vunpack.c.l.b16 %v3035
      %v3221 = vunpack.c.h.b16 %v3035
      %v3222 = vunpack.c.l.b16 %v3036
      %v3223 = vunpack.c.h.b16 %v3036
      %v3224 = vunpack.c.l.b16 %v3037
      %v3225 = vunpack.c.h.b16 %v3037
      %v3226 = vunpack.c.l.b16 %v3038
      %v3227 = vunpack.c.h.b16 %v3038
      %v3228 = vunpack.c.l.b16 %v3039
      %v3229 = vunpack.c.h.b16 %v3039
      %v3230 = vunpack.c.l.b16 %v3040
      %v3231 = vunpack.c.h.b16 %v3040
      %v3232 = vunpack.c.l.b16 %v3041
      %v3233 = vunpack.c.h.b16 %v3041
      %v3234 = vunpack.c.l.b16 %v3042
      %v3235 = vunpack.c.h.b16 %v3042
      %v3236 = vunpack.c.l.b16 %v3043
      %v3237 = vunpack.c.h.b16 %v3043
      %v3238 = vunpack.c.l.b16 %v3044
      %v3239 = vunpack.c.h.b16 %v3044
      %v3240 = vunpack.c.l.b16 %v3045
      %v3241 = vunpack.c.h.b16 %v3045
      %v3242 = vunpack.c.l.b16 %v3046
      %v3243 = vunpack.c.h.b16 %v3046
      %v3244 = vunpack.c.l.b16 %v3047
      %v3245 = vunpack.c.h.b16 %v3047
      %v3246 = vunpack.c.l.b16 %v3048
      %v3247 = vunpack.c.h.b16 %v3048
      %v3248 = vunpack.c.l.b16 %v3049
      %v3249 = vunpack.c.h.b16 %v3049
      %v3250 = vunpack.c.l.b16 %v3050
      %v3251 = vunpack.c.h.b16 %v3050
      %v3252 = vunpack.c.l.b16 %v3051
      %v3253 = vunpack.c.h.b16 %v3051
      %v3254 = vunpack.c.l.b16 %v3052
      %v3255 = vunpack.c.h.b16 %v3052
      %v3256 = vunpack.c.l.b16 %v3053
      %v3257 = vunpack.c.h.b16 %v3053
      %v3258 = vunpack.c.l.b16 %v3054
      %v3259 = vunpack.c.h.b16 %v3054
      %v3260 = vunpack.c.l.b16 %v3055
      %v3261 = vunpack.c.h.b16 %v3055
      %v3262 = vunpack.c.l.b16 %v3056
      %v3263 = vunpack.c.h.b16 %v3056
      %v3264 = vunpack.c.l.b16 %v3057
      %v3265 = vunpack.c.h.b16 %v3057
      %v3266 = vunpack.c.l.b16 %v3058
      %v3267 = vunpack.c.h.b16 %v3058
      %v3268 = vunpack.c.l.b16 %v3059
      %v3269 = vunpack.c.h.b16 %v3059
      %v3270 = vunpack.c.l.b16 %v3060
      %v3271 = vunpack.c.h.b16 %v3060
      %v3272 = vunpack.c.l.b16 %v3061
      %v3273 = vunpack.c.h.b16 %v3061
      %v3274 = vunpack.c.l.b16 %v3062
      %v3275 = vunpack.c.h.b16 %v3062
      %v3276 = vunpack.c.l.b16 %v3063
      %v3277 = vunpack.c.h.b16 %v3063
      %v3278 = vunpack.c.l.b16 %v3064
      %v3279 = vunpack.c.h.b16 %v3064
      %v3280 = vunpack.c.l.b16 %v3065
      %v3281 = vunpack.c.h.b16 %v3065
      %v3282 = vunpack.c.l.b16 %v3066
      %v3283 = vunpack.c.h.b16 %v3066
      %v3284 = vunpack.c.l.b16 %v3067
      %v3285 = vunpack.c.h.b16 %v3067
      %v3286 = vunpack.c.l.b16 %v3068
      %v3287 = vunpack.c.h.b16 %v3068
      %v3288 = vunpack.c.l.b16 %v3069
      %v3289 = vunpack.c.h.b16 %v3069
      %v3290 = vunpack.c.l.b16 %v3070
      %v3291 = vunpack.c.h.b16 %v3070
      %v3292 = vunpack.c.l.b16 %v3071
      %v3293 = vunpack.c.h.b16 %v3071
      %v3294 = vunpack.c.l.b16 %v3072
      %v3295 = vunpack.c.h.b16 %v3072
      %v3296 = vunpack.c.l.b16 %v3073
      %v3297 = vunpack.c.h.b16 %v3073
      %v3298 = vunpack.c.l.b16 %v3074
      %v3299 = vunpack.c.h.b16 %v3074
      %v3300 = vunpack.c.l.b16 %v3075
      %v3301 = vunpack.c.h.b16 %v3075
      %v3302 = vunpack.c.l.b16 %v3076
      %v3303 = vunpack.c.h.b16 %v3076
      %v3304 = vunpack.c.l.b16 %v3077
      %v3305 = vunpack.c.h.b16 %v3077
      %v3306 = vunpack.c.l.b16 %v3078
      %v3307 = vunpack.c.h.b16 %v3078
      %v3308 = vunpack.c.l.b16 %v3079
      %v3309 = vunpack.c.h.b16 %v3079
      %v3310 = vunpack.c.l.b16 %v3080
      %v3311 = vunpack.c.h.b16 %v3080
      %v3312 = vunpack.c.l.b16 %v3081
      %v3313 = vunpack.c.h.b16 %v3081
      %v3314 = vunpack.c.l.b16 %v3082
      %v3315 = vunpack.c.h.b16 %v3082
      %v3316 = vunpack.c.l.b16 %v3083
      %v3317 = vunpack.c.h.b16 %v3083
      %v3318 = vunpack.c.l.b16 %v3084
      %v3319 = vunpack.c.h.b16 %v3084
      %v3320 = vunpack.c.l.b16 %v3085
      %v3321 = vunpack.c.h.b16 %v3085
      %v3322 = vunpack.c.l.b16 %v3086
      %v3323 = vunpack.c.h.b16 %v3086
      %v3324 = vunpack.c.l.b16 %v3087
      %v3325 = vunpack.c.h.b16 %v3087
      %v3326 = vunpack.c.l.b16 %v3088
      %v3327 = vunpack.c.h.b16 %v3088
      %v3328 = vunpack.c.l.b16 %v3089
      %v3329 = vunpack.c.h.b16 %v3089
      %v3330 = vpack.c.b16 %v3204, %v3202
      %v3331 = vpack.c.b16 %v3205, %v3203
      %v3332 = vpack.c.b16 %v3208, %v3206
      %v3333 = vpack.c.b16 %v3209, %v3207
      %v3334 = vpack.c.b16 %v3212, %v3210
      %v3335 = vpack.c.b16 %v3213, %v3211
      %v3336 = vpack.c.b16 %v3216, %v3214
      %v3337 = vpack.c.b16 %v3217, %v3215
      %v3338 = vpack.c.b16 %v3220, %v3218
      %v3339 = vpack.c.b16 %v3221, %v3219
      %v3340 = vpack.c.b16 %v3224, %v3222
      %v3341 = vpack.c.b16 %v3225, %v3223
      %v3342 = vpack.c.b16 %v3228, %v3226
      %v3343 = vpack.c.b16 %v3229, %v3227
      %v3344 = vpack.c.b16 %v3232, %v3230
      %v3345 = vpack.c.b16 %v3233, %v3231
      %v3346 = vpack.c.b16 %v3236, %v3234
      %v3347 = vpack.c.b16 %v3237, %v3235
      %v3348 = vpack.c.b16 %v3240, %v3238
      %v3349 = vpack.c.b16 %v3241, %v3239
      %v3350 = vpack.c.b16 %v3244, %v3242
      %v3351 = vpack.c.b16 %v3245, %v3243
      %v3352 = vpack.c.b16 %v3248, %v3246
      %v3353 = vpack.c.b16 %v3249, %v3247
      %v3354 = vpack.c.b16 %v3252, %v3250
      %v3355 = vpack.c.b16 %v3253, %v3251
      %v3356 = vpack.c.b16 %v3256, %v3254
      %v3357 = vpack.c.b16 %v3257, %v3255
      %v3358 = vpack.c.b16 %v3260, %v3258
      %v3359 = vpack.c.b16 %v3261, %v3259
      %v3360 = vpack.c.b16 %v3264, %v3262
      %v3361 = vpack.c.b16 %v3265, %v3263
      %v3362 = vpack.c.b16 %v3268, %v3266
      %v3363 = vpack.c.b16 %v3269, %v3267
      %v3364 = vpack.c.b16 %v3272, %v3270
      %v3365 = vpack.c.b16 %v3273, %v3271
      %v3366 = vpack.c.b16 %v3276, %v3274
      %v3367 = vpack.c.b16 %v3277, %v3275
      %v3368 = vpack.c.b16 %v3280, %v3278
      %v3369 = vpack.c.b16 %v3281, %v3279
      %v3370 = vpack.c.b16 %v3284, %v3282
      %v3371 = vpack.c.b16 %v3285, %v3283
      %v3372 = vpack.c.b16 %v3288, %v3286
      %v3373 = vpack.c.b16 %v3289, %v3287
      %v3374 = vpack.c.b16 %v3292, %v3290
      %v3375 = vpack.c.b16 %v3293, %v3291
      %v3376 = vpack.c.b16 %v3296, %v3294
      %v3377 = vpack.c.b16 %v3297, %v3295
      %v3378 = vpack.c.b16 %v3300, %v3298
      %v3379 = vpack.c.b16 %v3301, %v3299
      %v3380 = vpack.c.b16 %v3304, %v3302
      %v3381 = vpack.c.b16 %v3305, %v3303
      %v3382 = vpack.c.b16 %v3308, %v3306
      %v3383 = vpack.c.b16 %v3309, %v3307
      %v3384 = vpack.c.b16 %v3312, %v3310
      %v3385 = vpack.c.b16 %v3313, %v3311
      %v3386 = vpack.c.b16 %v3316, %v3314
      %v3387 = vpack.c.b16 %v3317, %v3315
      %v3388 = vpack.c.b16 %v3320, %v3318
      %v3389 = vpack.c.b16 %v3321, %v3319
      %v3390 = vpack.c.b16 %v3324, %v3322
      %v3391 = vpack.c.b16 %v3325, %v3323
      %v3392 = vpack.c.b16 %v3328, %v3326
      %v3393 = vpack.c.b16 %v3329, %v3327
      %3458 = vmatprep.subr.bf16.mxu0 %v3331
      %3459 = vmatpush1.bf16.msra.mxu0 %v3330
      %3460 = vmatprep.subr.bf16.mxu0 %v3333
      %3461 = vmatpush1.bf16.msra.mxu0 %v3332
      %3462 = vmatprep.subr.bf16.mxu0 %v3335
      %3463 = vmatpush1.bf16.msra.mxu0 %v3334
      %3464 = vmatprep.subr.bf16.mxu0 %v3337
      %3465 = vmatpush1.bf16.msra.mxu0 %v3336
      %3466 = vmatprep.subr.bf16.mxu0 %v3339
      %3467 = vmatpush1.bf16.msra.mxu0 %v3338
      %3468 = vmatprep.subr.bf16.mxu0 %v3341
      %3469 = vmatpush1.bf16.msra.mxu0 %v3340
      %3470 = vmatprep.subr.bf16.mxu0 %v3343
      %3471 = vmatpush1.bf16.msra.mxu0 %v3342
      %3472 = vmatprep.subr.bf16.mxu0 %v3345
      %3473 = vmatpush1.bf16.msra.mxu0 %v3344
      %3474 = vmatprep.subr.bf16.mxu0 %v3347
      %3475 = vmatpush1.bf16.msra.mxu0 %v3346
      %3476 = vmatprep.subr.bf16.mxu0 %v3349
      %3477 = vmatpush1.bf16.msra.mxu0 %v3348
      %3478 = vmatprep.subr.bf16.mxu0 %v3351
      %3479 = vmatpush1.bf16.msra.mxu0 %v3350
      %3480 = vmatprep.subr.bf16.mxu0 %v3353
      %3481 = vmatpush1.bf16.msra.mxu0 %v3352
      %3482 = vmatprep.subr.bf16.mxu0 %v3355
      %3483 = vmatpush1.bf16.msra.mxu0 %v3354
      %3484 = vmatprep.subr.bf16.mxu0 %v3357
      %3485 = vmatpush1.bf16.msra.mxu0 %v3356
      %3486 = vmatprep.subr.bf16.mxu0 %v3359
      %3487 = vmatpush1.bf16.msra.mxu0 %v3358
      %3488 = vmatprep.subr.bf16.mxu0 %v3361
      %3489 = vmatpush1.bf16.msra.mxu0 %v3360
      %3490 = vmatprep.mubr.bf16.mxu0 %v3119
      %3491 = vmatmul.mubr.bf16.gmra.mrb[0].mxu0 %v3112
      %v3492 = vpop.f32.mrb[0].mxu0
      %v3493 = vadd.f32 0.0, %v3492
      %v3494 = vpop.f32.mrb[0].mxu0
      %v3495 = vadd.f32 0.0, %v3494
      %v3496 = vpop.f32.mrb[0].mxu0
      %v3497 = vpop.f32.mrb[0].mxu0
      %3498 = vdwg.mxu0
      %3499 = vmatprep.subr.bf16.mxu0 %v3363
      %3500 = vmatpush1.bf16.msra.mxu0 %v3362
      %3501 = vmatprep.subr.bf16.mxu0 %v3365
      %3502 = vmatpush1.bf16.msra.mxu0 %v3364
      %3503 = vmatprep.subr.bf16.mxu0 %v3367
      %3504 = vmatpush1.bf16.msra.mxu0 %v3366
      %3505 = vmatprep.subr.bf16.mxu0 %v3369
      %3506 = vmatpush1.bf16.msra.mxu0 %v3368
      %3507 = vmatprep.subr.bf16.mxu0 %v3371
      %3508 = vmatpush1.bf16.msra.mxu0 %v3370
      %3509 = vmatprep.subr.bf16.mxu0 %v3373
      %3510 = vmatpush1.bf16.msra.mxu0 %v3372
      %3511 = vmatprep.subr.bf16.mxu0 %v3375
      %3512 = vmatpush1.bf16.msra.mxu0 %v3374
      %3513 = vmatprep.subr.bf16.mxu0 %v3377
      %3514 = vmatpush1.bf16.msra.mxu0 %v3376
      %3515 = vmatprep.subr.bf16.mxu0 %v3379
      %3516 = vmatpush1.bf16.msra.mxu0 %v3378
      %3517 = vmatprep.subr.bf16.mxu0 %v3381
      %3518 = vmatpush1.bf16.msra.mxu0 %v3380
      %3519 = vmatprep.subr.bf16.mxu0 %v3383
      %3520 = vmatpush1.bf16.msra.mxu0 %v3382
      %3521 = vmatprep.subr.bf16.mxu0 %v3385
      %3522 = vmatpush1.bf16.msra.mxu0 %v3384
      %3523 = vmatprep.subr.bf16.mxu0 %v3387
      %3524 = vmatpush1.bf16.msra.mxu0 %v3386
      %3525 = vmatprep.subr.bf16.mxu0 %v3389
      %3526 = vmatpush1.bf16.msra.mxu0 %v3388
      %3527 = vmatprep.subr.bf16.mxu0 %v3391
      %3528 = vmatpush1.bf16.msra.mxu0 %v3390
      %3529 = vmatprep.subr.bf16.mxu0 %v3393
      %3530 = vmatpush1.bf16.msra.mxu0 %v3392
      %3531 = vmatprep.mubr.bf16.mxu0 %v3133
      %3532 = vmatmul.mubr.bf16.gmra.mrb[0].mxu0 %v3126
      %v3533 = vpop.f32.mrb[0].mxu0
      %v3534 = vadd.f32 %v3493, %v3533
      %v3535 = vpop.f32.mrb[0].mxu0
      %v3536 = vadd.f32 %v3495, %v3535
      %v3537 = vpop.f32.mrb[0].mxu0
      %v3538 = vpop.f32.mrb[0].mxu0
      %3539 = vdwg.mxu0
      %v3540 = vpack.c.b16 %v3094, %v3094
      %v3541 = vpack.c.b16 %v3095, %v3095
      %v3542 = vpack.c.b16 %v3096, %v3096
      %v3543 = vpack.c.b16 %v3097, %v3097
      %v3612 = vunpack.c.l.b16 %v2961
      %v3613 = vunpack.c.h.b16 %v2961
      %v3614 = vunpack.c.l.b16 %v2962
      %v3615 = vunpack.c.h.b16 %v2962
      %v3616 = vunpack.c.l.b16 %v2963
      %v3617 = vunpack.c.h.b16 %v2963
      %v3618 = vunpack.c.l.b16 %v2964
      %v3619 = vunpack.c.h.b16 %v2964
      %v3620 = vunpack.c.l.b16 %v2965
      %v3621 = vunpack.c.h.b16 %v2965
      %v3622 = vunpack.c.l.b16 %v2966
      %v3623 = vunpack.c.h.b16 %v2966
      %v3624 = vunpack.c.l.b16 %v2967
      %v3625 = vunpack.c.h.b16 %v2967
      %v3626 = vunpack.c.l.b16 %v2968
      %v3627 = vunpack.c.h.b16 %v2968
      %v3628 = vunpack.c.l.b16 %v2969
      %v3629 = vunpack.c.h.b16 %v2969
      %v3630 = vunpack.c.l.b16 %v2970
      %v3631 = vunpack.c.h.b16 %v2970
      %v3632 = vunpack.c.l.b16 %v2971
      %v3633 = vunpack.c.h.b16 %v2971
      %v3634 = vunpack.c.l.b16 %v2972
      %v3635 = vunpack.c.h.b16 %v2972
      %v3636 = vunpack.c.l.b16 %v2973
      %v3637 = vunpack.c.h.b16 %v2973
      %v3638 = vunpack.c.l.b16 %v2974
      %v3639 = vunpack.c.h.b16 %v2974
      %v3640 = vunpack.c.l.b16 %v2975
      %v3641 = vunpack.c.h.b16 %v2975
      %v3642 = vunpack.c.l.b16 %v2976
      %v3643 = vunpack.c.h.b16 %v2976
      %v3644 = vunpack.c.l.b16 %v2977
      %v3645 = vunpack.c.h.b16 %v2977
      %v3646 = vunpack.c.l.b16 %v2978
      %v3647 = vunpack.c.h.b16 %v2978
      %v3648 = vunpack.c.l.b16 %v2979
      %v3649 = vunpack.c.h.b16 %v2979
      %v3650 = vunpack.c.l.b16 %v2980
      %v3651 = vunpack.c.h.b16 %v2980
      %v3652 = vunpack.c.l.b16 %v2981
      %v3653 = vunpack.c.h.b16 %v2981
      %v3654 = vunpack.c.l.b16 %v2982
      %v3655 = vunpack.c.h.b16 %v2982
      %v3656 = vunpack.c.l.b16 %v2983
      %v3657 = vunpack.c.h.b16 %v2983
      %v3658 = vunpack.c.l.b16 %v2984
      %v3659 = vunpack.c.h.b16 %v2984
      %v3660 = vunpack.c.l.b16 %v2985
      %v3661 = vunpack.c.h.b16 %v2985
      %v3662 = vunpack.c.l.b16 %v2986
      %v3663 = vunpack.c.h.b16 %v2986
      %v3664 = vunpack.c.l.b16 %v2987
      %v3665 = vunpack.c.h.b16 %v2987
      %v3666 = vunpack.c.l.b16 %v2988
      %v3667 = vunpack.c.h.b16 %v2988
      %v3668 = vunpack.c.l.b16 %v2989
      %v3669 = vunpack.c.h.b16 %v2989
      %v3670 = vunpack.c.l.b16 %v2990
      %v3671 = vunpack.c.h.b16 %v2990
      %v3672 = vunpack.c.l.b16 %v2991
      %v3673 = vunpack.c.h.b16 %v2991
      %v3674 = vunpack.c.l.b16 %v2992
      %v3675 = vunpack.c.h.b16 %v2992
      %v3676 = vunpack.c.l.b16 %v2993
      %v3677 = vunpack.c.h.b16 %v2993
      %v3678 = vunpack.c.l.b16 %v2994
      %v3679 = vunpack.c.h.b16 %v2994
      %v3680 = vunpack.c.l.b16 %v2995
      %v3681 = vunpack.c.h.b16 %v2995
      %v3682 = vunpack.c.l.b16 %v2996
      %v3683 = vunpack.c.h.b16 %v2996
      %v3684 = vunpack.c.l.b16 %v2997
      %v3685 = vunpack.c.h.b16 %v2997
      %v3686 = vunpack.c.l.b16 %v2998
      %v3687 = vunpack.c.h.b16 %v2998
      %v3688 = vunpack.c.l.b16 %v2999
      %v3689 = vunpack.c.h.b16 %v2999
      %v3690 = vunpack.c.l.b16 %v3000
      %v3691 = vunpack.c.h.b16 %v3000
      %v3692 = vunpack.c.l.b16 %v3001
      %v3693 = vunpack.c.h.b16 %v3001
      %v3694 = vunpack.c.l.b16 %v3002
      %v3695 = vunpack.c.h.b16 %v3002
      %v3696 = vunpack.c.l.b16 %v3003
      %v3697 = vunpack.c.h.b16 %v3003
      %v3698 = vunpack.c.l.b16 %v3004
      %v3699 = vunpack.c.h.b16 %v3004
      %v3700 = vunpack.c.l.b16 %v3005
      %v3701 = vunpack.c.h.b16 %v3005
      %v3702 = vunpack.c.l.b16 %v3006
      %v3703 = vunpack.c.h.b16 %v3006
      %v3704 = vunpack.c.l.b16 %v3007
      %v3705 = vunpack.c.h.b16 %v3007
      %v3706 = vunpack.c.l.b16 %v3008
      %v3707 = vunpack.c.h.b16 %v3008
      %v3708 = vunpack.c.l.b16 %v3009
      %v3709 = vunpack.c.h.b16 %v3009
      %v3710 = vunpack.c.l.b16 %v3010
      %v3711 = vunpack.c.h.b16 %v3010
      %v3712 = vunpack.c.l.b16 %v3011
      %v3713 = vunpack.c.h.b16 %v3011
      %v3714 = vunpack.c.l.b16 %v3012
      %v3715 = vunpack.c.h.b16 %v3012
      %v3716 = vunpack.c.l.b16 %v3013
      %v3717 = vunpack.c.h.b16 %v3013
      %v3718 = vunpack.c.l.b16 %v3014
      %v3719 = vunpack.c.h.b16 %v3014
      %v3720 = vunpack.c.l.b16 %v3015
      %v3721 = vunpack.c.h.b16 %v3015
      %v3722 = vunpack.c.l.b16 %v3016
      %v3723 = vunpack.c.h.b16 %v3016
      %v3724 = vunpack.c.l.b16 %v3017
      %v3725 = vunpack.c.h.b16 %v3017
      %v3726 = vunpack.c.l.b16 %v3018
      %v3727 = vunpack.c.h.b16 %v3018
      %v3728 = vunpack.c.l.b16 %v3019
      %v3729 = vunpack.c.h.b16 %v3019
      %v3730 = vunpack.c.l.b16 %v3020
      %v3731 = vunpack.c.h.b16 %v3020
      %v3732 = vunpack.c.l.b16 %v3021
      %v3733 = vunpack.c.h.b16 %v3021
      %v3734 = vunpack.c.l.b16 %v3022
      %v3735 = vunpack.c.h.b16 %v3022
      %v3736 = vunpack.c.l.b16 %v3023
      %v3737 = vunpack.c.h.b16 %v3023
      %v3738 = vunpack.c.l.b16 %v3024
      %v3739 = vunpack.c.h.b16 %v3024
      %v3740 = vpack.c.b16 %v3614, %v3612
      %v3741 = vpack.c.b16 %v3615, %v3613
      %v3742 = vpack.c.b16 %v3618, %v3616
      %v3743 = vpack.c.b16 %v3619, %v3617
      %v3744 = vpack.c.b16 %v3622, %v3620
      %v3745 = vpack.c.b16 %v3623, %v3621
      %v3746 = vpack.c.b16 %v3626, %v3624
      %v3747 = vpack.c.b16 %v3627, %v3625
      %v3748 = vpack.c.b16 %v3630, %v3628
      %v3749 = vpack.c.b16 %v3631, %v3629
      %v3750 = vpack.c.b16 %v3634, %v3632
      %v3751 = vpack.c.b16 %v3635, %v3633
      %v3752 = vpack.c.b16 %v3638, %v3636
      %v3753 = vpack.c.b16 %v3639, %v3637
      %v3754 = vpack.c.b16 %v3642, %v3640
      %v3755 = vpack.c.b16 %v3643, %v3641
      %v3756 = vpack.c.b16 %v3646, %v3644
      %v3757 = vpack.c.b16 %v3647, %v3645
      %v3758 = vpack.c.b16 %v3650, %v3648
      %v3759 = vpack.c.b16 %v3651, %v3649
      %v3760 = vpack.c.b16 %v3654, %v3652
      %v3761 = vpack.c.b16 %v3655, %v3653
      %v3762 = vpack.c.b16 %v3658, %v3656
      %v3763 = vpack.c.b16 %v3659, %v3657
      %v3764 = vpack.c.b16 %v3662, %v3660
      %v3765 = vpack.c.b16 %v3663, %v3661
      %v3766 = vpack.c.b16 %v3666, %v3664
      %v3767 = vpack.c.b16 %v3667, %v3665
      %v3768 = vpack.c.b16 %v3670, %v3668
      %v3769 = vpack.c.b16 %v3671, %v3669
      %v3770 = vpack.c.b16 %v3674, %v3672
      %v3771 = vpack.c.b16 %v3675, %v3673
      %v3772 = vpack.c.b16 %v3678, %v3676
      %v3773 = vpack.c.b16 %v3679, %v3677
      %v3774 = vpack.c.b16 %v3682, %v3680
      %v3775 = vpack.c.b16 %v3683, %v3681
      %v3776 = vpack.c.b16 %v3686, %v3684
      %v3777 = vpack.c.b16 %v3687, %v3685
      %v3778 = vpack.c.b16 %v3690, %v3688
      %v3779 = vpack.c.b16 %v3691, %v3689
      %v3780 = vpack.c.b16 %v3694, %v3692
      %v3781 = vpack.c.b16 %v3695, %v3693
      %v3782 = vpack.c.b16 %v3698, %v3696
      %v3783 = vpack.c.b16 %v3699, %v3697
      %v3784 = vpack.c.b16 %v3702, %v3700
      %v3785 = vpack.c.b16 %v3703, %v3701
      %v3786 = vpack.c.b16 %v3706, %v3704
      %v3787 = vpack.c.b16 %v3707, %v3705
      %v3788 = vpack.c.b16 %v3710, %v3708
      %v3789 = vpack.c.b16 %v3711, %v3709
      %v3790 = vpack.c.b16 %v3714, %v3712
      %v3791 = vpack.c.b16 %v3715, %v3713
      %v3792 = vpack.c.b16 %v3718, %v3716
      %v3793 = vpack.c.b16 %v3719, %v3717
      %v3794 = vpack.c.b16 %v3722, %v3720
      %v3795 = vpack.c.b16 %v3723, %v3721
      %v3796 = vpack.c.b16 %v3726, %v3724
      %v3797 = vpack.c.b16 %v3727, %v3725
      %v3798 = vpack.c.b16 %v3730, %v3728
      %v3799 = vpack.c.b16 %v3731, %v3729
      %v3800 = vpack.c.b16 %v3734, %v3732
      %v3801 = vpack.c.b16 %v3735, %v3733
      %v3802 = vpack.c.b16 %v3738, %v3736
      %v3803 = vpack.c.b16 %v3739, %v3737
      %3868 = vmatprep.subr.bf16.mxu0 %v3741
      %3869 = vmatpush1.bf16.msra.mxu0 %v3740
      %3870 = vmatprep.subr.bf16.mxu0 %v3743
      %3871 = vmatpush1.bf16.msra.mxu0 %v3742
      %3872 = vmatprep.subr.bf16.mxu0 %v3745
      %3873 = vmatpush1.bf16.msra.mxu0 %v3744
      %3874 = vmatprep.subr.bf16.mxu0 %v3747
      %3875 = vmatpush1.bf16.msra.mxu0 %v3746
      %3876 = vmatprep.subr.bf16.mxu0 %v3749
      %3877 = vmatpush1.bf16.msra.mxu0 %v3748
      %3878 = vmatprep.subr.bf16.mxu0 %v3751
      %3879 = vmatpush1.bf16.msra.mxu0 %v3750
      %3880 = vmatprep.subr.bf16.mxu0 %v3753
      %3881 = vmatpush1.bf16.msra.mxu0 %v3752
      %3882 = vmatprep.subr.bf16.mxu0 %v3755
      %3883 = vmatpush1.bf16.msra.mxu0 %v3754
      %3884 = vmatprep.subr.bf16.mxu0 %v3757
      %3885 = vmatpush1.bf16.msra.mxu0 %v3756
      %3886 = vmatprep.subr.bf16.mxu0 %v3759
      %3887 = vmatpush1.bf16.msra.mxu0 %v3758
      %3888 = vmatprep.subr.bf16.mxu0 %v3761
      %3889 = vmatpush1.bf16.msra.mxu0 %v3760
      %3890 = vmatprep.subr.bf16.mxu0 %v3763
      %3891 = vmatpush1.bf16.msra.mxu0 %v3762
      %3892 = vmatprep.subr.bf16.mxu0 %v3765
      %3893 = vmatpush1.bf16.msra.mxu0 %v3764
      %3894 = vmatprep.subr.bf16.mxu0 %v3767
      %3895 = vmatpush1.bf16.msra.mxu0 %v3766
      %3896 = vmatprep.subr.bf16.mxu0 %v3769
      %3897 = vmatpush1.bf16.msra.mxu0 %v3768
      %3898 = vmatprep.subr.bf16.mxu0 %v3771
      %3899 = vmatpush1.bf16.msra.mxu0 %v3770
      %3900 = vmatprep.mubr.bf16.mxu0 %v3541
      %3901 = vmatmul.mubr.bf16.gmra.mrb[0].mxu0 %v3540
      %v3902 = vpop.f32.mrb[0].mxu0
      %v3903 = vadd.f32 %v3534, %v3902
      %v3904 = vpop.f32.mrb[0].mxu0
      %v3905 = vadd.f32 %v3536, %v3904
      %v3906 = vpop.f32.mrb[0].mxu0
      %v3907 = vpop.f32.mrb[0].mxu0
      %3908 = vdwg.mxu0
      %3909 = vmatprep.subr.bf16.mxu0 %v3773
      %3910 = vmatpush1.bf16.msra.mxu0 %v3772
      %3911 = vmatprep.subr.bf16.mxu0 %v3775
      %3912 = vmatpush1.bf16.msra.mxu0 %v3774
      %3913 = vmatprep.subr.bf16.mxu0 %v3777
      %3914 = vmatpush1.bf16.msra.mxu0 %v3776
      %3915 = vmatprep.subr.bf16.mxu0 %v3779
      %3916 = vmatpush1.bf16.msra.mxu0 %v3778
      %3917 = vmatprep.subr.bf16.mxu0 %v3781
      %3918 = vmatpush1.bf16.msra.mxu0 %v3780
      %3919 = vmatprep.subr.bf16.mxu0 %v3783
      %3920 = vmatpush1.bf16.msra.mxu0 %v3782
      %3921 = vmatprep.subr.bf16.mxu0 %v3785
      %3922 = vmatpush1.bf16.msra.mxu0 %v3784
      %3923 = vmatprep.subr.bf16.mxu0 %v3787
      %3924 = vmatpush1.bf16.msra.mxu0 %v3786
      %3925 = vmatprep.subr.bf16.mxu0 %v3789
      %3926 = vmatpush1.bf16.msra.mxu0 %v3788
      %3927 = vmatprep.subr.bf16.mxu0 %v3791
      %3928 = vmatpush1.bf16.msra.mxu0 %v3790
      %3929 = vmatprep.subr.bf16.mxu0 %v3793
      %3930 = vmatpush1.bf16.msra.mxu0 %v3792
      %3931 = vmatprep.subr.bf16.mxu0 %v3795
      %3932 = vmatpush1.bf16.msra.mxu0 %v3794
      %3933 = vmatprep.subr.bf16.mxu0 %v3797
      %3934 = vmatpush1.bf16.msra.mxu0 %v3796
      %3935 = vmatprep.subr.bf16.mxu0 %v3799
      %3936 = vmatpush1.bf16.msra.mxu0 %v3798
      %3937 = vmatprep.subr.bf16.mxu0 %v3801
      %3938 = vmatpush1.bf16.msra.mxu0 %v3800
      %3939 = vmatprep.subr.bf16.mxu0 %v3803
      %3940 = vmatpush1.bf16.msra.mxu0 %v3802
      %3941 = vmatprep.mubr.bf16.mxu0 %v3543
      %3942 = vmatmul.mubr.bf16.gmra.mrb[0].mxu0 %v3542
      %v3943 = vpop.f32.mrb[0].mxu0
      %v3944 = vadd.f32 %v3903, %v3943
      %v3945 = vpop.f32.mrb[0].mxu0
      %v3946 = vadd.f32 %v3905, %v3945
      %v3947 = vpop.f32.mrb[0].mxu0
      %v3948 = vpop.f32.mrb[0].mxu0
      %3949 = vdwg.mxu0
      %vm3950 = vcmp.ge.f32.partialorder %v3944, 0.0
      %vm3951 = vcmp.ge.f32.partialorder %v3946, 0.0
      %v3952 = vmul.f32 %v3944, 0.01
      %v3953 = vmul.f32 %v3946, 0.01
      %v3954 = vsel %vm3950, %v3944, %v3952
      %v3955 = vsel %vm3951, %v3946, %v3953
      %v3956 = vpack.c.bf16 %v3954, %v3954
      %v3957 = vpack.c.bf16 %v3955, %v3955
      %v3960 = vunpack.c.l.b16 %v3956
      %v3961 = vunpack.c.l.b16 %v3957
      %v3962 = vpack.c.b16 %v3961, %v3960
      %v3964 = vld [vmem:[#allocation4 + $0x8] sm:$0x11]
      %v3965 = vsel %vm408, %v3962, %v3964
      %3966 = vst [vmem:[#allocation4 + $0x8] sm:$0x11] %v3965
      %v3967 = vld [vmem:[#allocation4] sm:$0x11]
      %v3968 = vsel %vm1607, %v3962, %v3967
      %3969 = vst [vmem:[#allocation4] sm:$0x11] %v3968
      %v3971 = vshll.u32 %v3962, 16
      %v3973 = vrot.slane %v3971, 5
      %v3974 = vrot.slane %v3973, 4
      %v3976 = vld [vmem:[#allocation4 + $0x8] sm:$0x11]
      %v3977 = vsel %vm1607, %v3974, %v3976
      %3978 = vst [vmem:[#allocation4 + $0x8] sm:$0x11] %v3977
      %v3979 = vshrl.u32 %v3962, 16
      %v3981 = vrot.slane %v3979, 4
      %v3982 = vrot.slane %v3981, 4
      %v3984 = vld [vmem:[#allocation4] sm:$0x22]
      %v3985 = vsel %vm1631, %v3982, %v3984
      %3986 = vst [vmem:[#allocation4] sm:$0x22] %v3985
      %v3987 = vrot.slane %v3962, 5
      %v3988 = vrot.slane %v3987, 4
      %v3990 = vld [vmem:[#allocation4 + $0x8] sm:$0x22]
      %v3991 = vsel %vm1631, %v3988, %v3990
      %3992 = vst [vmem:[#allocation4 + $0x8] sm:$0x22] %v3991
      %v3993 = vld [vmem:[#allocation4] sm:$0x22]
      %v3994 = vsel %vm1645, %v3988, %v3993
      %3995 = vst [vmem:[#allocation4] sm:$0x22] %v3994
      %v3996 = vrot.slane %v3971, 6
      %v3997 = vrot.slane %v3996, 4
      %v3999 = vld [vmem:[#allocation4 + $0x8] sm:$0x22]
      %v4000 = vsel %vm1645, %v3997, %v3999
      %4001 = vst [vmem:[#allocation4 + $0x8] sm:$0x22] %v4000
      %v4002 = vrot.slane %v3979, 5
      %v4003 = vrot.slane %v4002, 4
      %v4005 = vld [vmem:[#allocation4] sm:$0x44]
      %v4006 = vsel %vm1662, %v4003, %v4005
      %4007 = vst [vmem:[#allocation4] sm:$0x44] %v4006
      %v4008 = vld [vmem:[#allocation4] sm:$0x33]
      %v4009 = vld [vmem:[#allocation4 + $0x8] sm:$0x33]
      %v4010 = vld [vmem:[#allocation4] sm:$0x77]
      %v4011 = vld [vmem:[#allocation4 + $0x8] sm:$0x77]
      %v4012 = vld [vmem:[%s5] sm:$0xff]
      %v4013 = vld [vmem:[%s5 + $0x8] sm:$0xff]
      %v4014 = vld [vmem:[%s5 + $0x10] sm:$0xff]
      %v4015 = vld [vmem:[%s5 + $0x18] sm:$0xff]
      %v4016 = vld [vmem:[%s5 + $0x20] sm:$0xff]
      %v4017 = vld [vmem:[%s5 + $0x28] sm:$0xff]
      %v4018 = vld [vmem:[%s5 + $0x30] sm:$0xff]
      %v4019 = vld [vmem:[%s5 + $0x38] sm:$0xff]
      %v4020 = vld [vmem:[%s5 + $0x40] sm:$0xff]
      %v4021 = vld [vmem:[%s5 + $0x48] sm:$0xff]
      %v4022 = vld [vmem:[%s5 + $0x50] sm:$0xff]
      %v4023 = vld [vmem:[%s5 + $0x58] sm:$0xff]
      %v4024 = vld [vmem:[%s5 + $0x60] sm:$0xff]
      %v4025 = vld [vmem:[%s5 + $0x68] sm:$0xff]
      %v4026 = vld [vmem:[%s5 + $0x70] sm:$0xff]
      %v4027 = vld [vmem:[%s5 + $0x78] sm:$0xff]
      %v4028 = vld [vmem:[%s5 + $0x80] sm:$0xff]
      %v4029 = vld [vmem:[%s5 + $0x88] sm:$0xff]
      %v4030 = vld [vmem:[%s5 + $0x90] sm:$0xff]
      %v4031 = vld [vmem:[%s5 + $0x98] sm:$0xff]
      %v4032 = vld [vmem:[%s5 + $0xa0] sm:$0xff]
      %v4033 = vld [vmem:[%s5 + $0xa8] sm:$0xff]
      %v4034 = vld [vmem:[%s5 + $0xb0] sm:$0xff]
      %v4035 = vld [vmem:[%s5 + $0xb8] sm:$0xff]
      %v4036 = vld [vmem:[%s5 + $0xc0] sm:$0xff]
      %v4037 = vld [vmem:[%s5 + $0xc8] sm:$0xff]
      %v4038 = vld [vmem:[%s5 + $0xd0] sm:$0xff]
      %v4039 = vld [vmem:[%s5 + $0xd8] sm:$0xff]
      %v4040 = vld [vmem:[%s5 + $0xe0] sm:$0xff]
      %v4041 = vld [vmem:[%s5 + $0xe8] sm:$0xff]
      %v4042 = vld [vmem:[%s5 + $0xf0] sm:$0xff]
      %v4043 = vld [vmem:[%s5 + $0xf8] sm:$0xff]
      %v4044 = vld [vmem:[%s5 + $0x100] sm:$0xff]
      %v4045 = vld [vmem:[%s5 + $0x108] sm:$0xff]
      %v4046 = vld [vmem:[%s5 + $0x110] sm:$0xff]
      %v4047 = vld [vmem:[%s5 + $0x118] sm:$0xff]
      %v4048 = vld [vmem:[%s5 + $0x120] sm:$0xff]
      %v4049 = vld [vmem:[%s5 + $0x128] sm:$0xff]
      %v4050 = vld [vmem:[%s5 + $0x130] sm:$0xff]
      %v4051 = vld [vmem:[%s5 + $0x138] sm:$0xff]
      %v4052 = vld [vmem:[%s5 + $0x140] sm:$0xff]
      %v4053 = vld [vmem:[%s5 + $0x148] sm:$0xff]
      %v4054 = vld [vmem:[%s5 + $0x150] sm:$0xff]
      %v4055 = vld [vmem:[%s5 + $0x158] sm:$0xff]
      %v4056 = vld [vmem:[%s5 + $0x160] sm:$0xff]
      %v4057 = vld [vmem:[%s5 + $0x168] sm:$0xff]
      %v4058 = vld [vmem:[%s5 + $0x170] sm:$0xff]
      %v4059 = vld [vmem:[%s5 + $0x178] sm:$0xff]
      %v4060 = vld [vmem:[%s5 + $0x180] sm:$0xff]
      %v4061 = vld [vmem:[%s5 + $0x188] sm:$0xff]
      %v4062 = vld [vmem:[%s5 + $0x190] sm:$0xff]
      %v4063 = vld [vmem:[%s5 + $0x198] sm:$0xff]
      %v4064 = vld [vmem:[%s5 + $0x1a0] sm:$0xff]
      %v4065 = vld [vmem:[%s5 + $0x1a8] sm:$0xff]
      %v4066 = vld [vmem:[%s5 + $0x1b0] sm:$0xff]
      %v4067 = vld [vmem:[%s5 + $0x1b8] sm:$0xff]
      %v4068 = vld [vmem:[%s5 + $0x1c0] sm:$0xff]
      %v4069 = vld [vmem:[%s5 + $0x1c8] sm:$0xff]
      %v4070 = vld [vmem:[%s5 + $0x1d0] sm:$0xff]
      %v4071 = vld [vmem:[%s5 + $0x1d8] sm:$0xff]
      %v4072 = vld [vmem:[%s5 + $0x1e0] sm:$0xff]
      %v4073 = vld [vmem:[%s5 + $0x1e8] sm:$0xff]
      %v4074 = vld [vmem:[%s5 + $0x1f0] sm:$0xff]
      %v4075 = vld [vmem:[%s5 + $0x1f8] sm:$0xff]
      %s4076 = scalar_lea.vmem %s5, 512
      %v4077 = vld [vmem:[%s4076] sm:$0xff]
      %v4078 = vld [vmem:[%s4076 + $0x8] sm:$0xff]
      %v4079 = vld [vmem:[%s4076 + $0x10] sm:$0xff]
      %v4080 = vld [vmem:[%s4076 + $0x18] sm:$0xff]
      %v4081 = vld [vmem:[%s4076 + $0x20] sm:$0xff]
      %v4082 = vld [vmem:[%s4076 + $0x28] sm:$0xff]
      %v4083 = vld [vmem:[%s4076 + $0x30] sm:$0xff]
      %v4084 = vld [vmem:[%s4076 + $0x38] sm:$0xff]
      %v4085 = vld [vmem:[%s4076 + $0x40] sm:$0xff]
      %v4086 = vld [vmem:[%s4076 + $0x48] sm:$0xff]
      %v4087 = vld [vmem:[%s4076 + $0x50] sm:$0xff]
      %v4088 = vld [vmem:[%s4076 + $0x58] sm:$0xff]
      %v4089 = vld [vmem:[%s4076 + $0x60] sm:$0xff]
      %v4090 = vld [vmem:[%s4076 + $0x68] sm:$0xff]
      %v4091 = vld [vmem:[%s4076 + $0x70] sm:$0xff]
      %v4092 = vld [vmem:[%s4076 + $0x78] sm:$0xff]
      %v4093 = vld [vmem:[%s4076 + $0x80] sm:$0xff]
      %v4094 = vld [vmem:[%s4076 + $0x88] sm:$0xff]
      %v4095 = vld [vmem:[%s4076 + $0x90] sm:$0xff]
      %v4096 = vld [vmem:[%s4076 + $0x98] sm:$0xff]
      %v4097 = vld [vmem:[%s4076 + $0xa0] sm:$0xff]
      %v4098 = vld [vmem:[%s4076 + $0xa8] sm:$0xff]
      %v4099 = vld [vmem:[%s4076 + $0xb0] sm:$0xff]
      %v4100 = vld [vmem:[%s4076 + $0xb8] sm:$0xff]
      %v4101 = vld [vmem:[%s4076 + $0xc0] sm:$0xff]
      %v4102 = vld [vmem:[%s4076 + $0xc8] sm:$0xff]
      %v4103 = vld [vmem:[%s4076 + $0xd0] sm:$0xff]
      %v4104 = vld [vmem:[%s4076 + $0xd8] sm:$0xff]
      %v4105 = vld [vmem:[%s4076 + $0xe0] sm:$0xff]
      %v4106 = vld [vmem:[%s4076 + $0xe8] sm:$0xff]
      %v4107 = vld [vmem:[%s4076 + $0xf0] sm:$0xff]
      %v4108 = vld [vmem:[%s4076 + $0xf8] sm:$0xff]
      %v4109 = vld [vmem:[%s4076 + $0x100] sm:$0xff]
      %v4110 = vld [vmem:[%s4076 + $0x108] sm:$0xff]
      %v4111 = vld [vmem:[%s4076 + $0x110] sm:$0xff]
      %v4112 = vld [vmem:[%s4076 + $0x118] sm:$0xff]
      %v4113 = vld [vmem:[%s4076 + $0x120] sm:$0xff]
      %v4114 = vld [vmem:[%s4076 + $0x128] sm:$0xff]
      %v4115 = vld [vmem:[%s4076 + $0x130] sm:$0xff]
      %v4116 = vld [vmem:[%s4076 + $0x138] sm:$0xff]
      %v4117 = vld [vmem:[%s4076 + $0x140] sm:$0xff]
      %v4118 = vld [vmem:[%s4076 + $0x148] sm:$0xff]
      %v4119 = vld [vmem:[%s4076 + $0x150] sm:$0xff]
      %v4120 = vld [vmem:[%s4076 + $0x158] sm:$0xff]
      %v4121 = vld [vmem:[%s4076 + $0x160] sm:$0xff]
      %v4122 = vld [vmem:[%s4076 + $0x168] sm:$0xff]
      %v4123 = vld [vmem:[%s4076 + $0x170] sm:$0xff]
      %v4124 = vld [vmem:[%s4076 + $0x178] sm:$0xff]
      %v4125 = vld [vmem:[%s4076 + $0x180] sm:$0xff]
      %v4126 = vld [vmem:[%s4076 + $0x188] sm:$0xff]
      %v4127 = vld [vmem:[%s4076 + $0x190] sm:$0xff]
      %v4128 = vld [vmem:[%s4076 + $0x198] sm:$0xff]
      %v4129 = vld [vmem:[%s4076 + $0x1a0] sm:$0xff]
      %v4130 = vld [vmem:[%s4076 + $0x1a8] sm:$0xff]
      %v4131 = vld [vmem:[%s4076 + $0x1b0] sm:$0xff]
      %v4132 = vld [vmem:[%s4076 + $0x1b8] sm:$0xff]
      %v4133 = vld [vmem:[%s4076 + $0x1c0] sm:$0xff]
      %v4134 = vld [vmem:[%s4076 + $0x1c8] sm:$0xff]
      %v4135 = vld [vmem:[%s4076 + $0x1d0] sm:$0xff]
      %v4136 = vld [vmem:[%s4076 + $0x1d8] sm:$0xff]
      %v4137 = vld [vmem:[%s4076 + $0x1e0] sm:$0xff]
      %v4138 = vld [vmem:[%s4076 + $0x1e8] sm:$0xff]
      %v4139 = vld [vmem:[%s4076 + $0x1f0] sm:$0xff]
      %v4140 = vld [vmem:[%s4076 + $0x1f8] sm:$0xff]
      %v4143 = vunpack.c.l.b16 %v4010
      %v4144 = vunpack.c.h.b16 %v4010
      %v4145 = vunpack.c.l.b16 %v4011
      %v4146 = vunpack.c.h.b16 %v4011
      %v4147 = vpack.c.b16 %v4143, %v4143
      %v4148 = vpack.c.b16 %v4144, %v4144
      %v4149 = vpack.c.b16 %v4145, %v4145
      %v4150 = vpack.c.b16 %v4146, %v4146
      %v4152 = vshrl.u32 %v4147, 16
      %v4154 = vshll.u32 %v4147, 16
      %v4156 = vrot.slane %v4154, 1
      %v4157 = vor.u32 %v4152, %v4156
      %v4159 = vshrl.u32 %v4148, 16
      %v4161 = vshll.u32 %v4148, 16
      %v4163 = vrot.slane %v4161, 1
      %v4164 = vor.u32 %v4159, %v4163
      %v4166 = vshrl.u32 %v4149, 16
      %v4168 = vshll.u32 %v4149, 16
      %v4170 = vrot.slane %v4168, 1
      %v4171 = vor.u32 %v4166, %v4170
      %v4173 = vshrl.u32 %v4150, 16
      %v4175 = vshll.u32 %v4150, 16
      %v4177 = vrot.slane %v4175, 1
      %v4178 = vor.u32 %v4173, %v4177
      %v4247 = vunpack.c.l.b16 %v4077
      %v4248 = vunpack.c.h.b16 %v4077
      %v4249 = vunpack.c.l.b16 %v4078
      %v4250 = vunpack.c.h.b16 %v4078
      %v4251 = vunpack.c.l.b16 %v4079
      %v4252 = vunpack.c.h.b16 %v4079
      %v4253 = vunpack.c.l.b16 %v4080
      %v4254 = vunpack.c.h.b16 %v4080
      %v4255 = vunpack.c.l.b16 %v4081
      %v4256 = vunpack.c.h.b16 %v4081
      %v4257 = vunpack.c.l.b16 %v4082
      %v4258 = vunpack.c.h.b16 %v4082
      %v4259 = vunpack.c.l.b16 %v4083
      %v4260 = vunpack.c.h.b16 %v4083
      %v4261 = vunpack.c.l.b16 %v4084
      %v4262 = vunpack.c.h.b16 %v4084
      %v4263 = vunpack.c.l.b16 %v4085
      %v4264 = vunpack.c.h.b16 %v4085
      %v4265 = vunpack.c.l.b16 %v4086
      %v4266 = vunpack.c.h.b16 %v4086
      %v4267 = vunpack.c.l.b16 %v4087
      %v4268 = vunpack.c.h.b16 %v4087
      %v4269 = vunpack.c.l.b16 %v4088
      %v4270 = vunpack.c.h.b16 %v4088
      %v4271 = vunpack.c.l.b16 %v4089
      %v4272 = vunpack.c.h.b16 %v4089
      %v4273 = vunpack.c.l.b16 %v4090
      %v4274 = vunpack.c.h.b16 %v4090
      %v4275 = vunpack.c.l.b16 %v4091
      %v4276 = vunpack.c.h.b16 %v4091
      %v4277 = vunpack.c.l.b16 %v4092
      %v4278 = vunpack.c.h.b16 %v4092
      %v4279 = vunpack.c.l.b16 %v4093
      %v4280 = vunpack.c.h.b16 %v4093
      %v4281 = vunpack.c.l.b16 %v4094
      %v4282 = vunpack.c.h.b16 %v4094
      %v4283 = vunpack.c.l.b16 %v4095
      %v4284 = vunpack.c.h.b16 %v4095
      %v4285 = vunpack.c.l.b16 %v4096
      %v4286 = vunpack.c.h.b16 %v4096
      %v4287 = vunpack.c.l.b16 %v4097
      %v4288 = vunpack.c.h.b16 %v4097
      %v4289 = vunpack.c.l.b16 %v4098
      %v4290 = vunpack.c.h.b16 %v4098
      %v4291 = vunpack.c.l.b16 %v4099
      %v4292 = vunpack.c.h.b16 %v4099
      %v4293 = vunpack.c.l.b16 %v4100
      %v4294 = vunpack.c.h.b16 %v4100
      %v4295 = vunpack.c.l.b16 %v4101
      %v4296 = vunpack.c.h.b16 %v4101
      %v4297 = vunpack.c.l.b16 %v4102
      %v4298 = vunpack.c.h.b16 %v4102
      %v4299 = vunpack.c.l.b16 %v4103
      %v4300 = vunpack.c.h.b16 %v4103
      %v4301 = vunpack.c.l.b16 %v4104
      %v4302 = vunpack.c.h.b16 %v4104
      %v4303 = vunpack.c.l.b16 %v4105
      %v4304 = vunpack.c.h.b16 %v4105
      %v4305 = vunpack.c.l.b16 %v4106
      %v4306 = vunpack.c.h.b16 %v4106
      %v4307 = vunpack.c.l.b16 %v4107
      %v4308 = vunpack.c.h.b16 %v4107
      %v4309 = vunpack.c.l.b16 %v4108
      %v4310 = vunpack.c.h.b16 %v4108
      %v4311 = vunpack.c.l.b16 %v4109
      %v4312 = vunpack.c.h.b16 %v4109
      %v4313 = vunpack.c.l.b16 %v4110
      %v4314 = vunpack.c.h.b16 %v4110
      %v4315 = vunpack.c.l.b16 %v4111
      %v4316 = vunpack.c.h.b16 %v4111
      %v4317 = vunpack.c.l.b16 %v4112
      %v4318 = vunpack.c.h.b16 %v4112
      %v4319 = vunpack.c.l.b16 %v4113
      %v4320 = vunpack.c.h.b16 %v4113
      %v4321 = vunpack.c.l.b16 %v4114
      %v4322 = vunpack.c.h.b16 %v4114
      %v4323 = vunpack.c.l.b16 %v4115
      %v4324 = vunpack.c.h.b16 %v4115
      %v4325 = vunpack.c.l.b16 %v4116
      %v4326 = vunpack.c.h.b16 %v4116
      %v4327 = vunpack.c.l.b16 %v4117
      %v4328 = vunpack.c.h.b16 %v4117
      %v4329 = vunpack.c.l.b16 %v4118
      %v4330 = vunpack.c.h.b16 %v4118
      %v4331 = vunpack.c.l.b16 %v4119
      %v4332 = vunpack.c.h.b16 %v4119
      %v4333 = vunpack.c.l.b16 %v4120
      %v4334 = vunpack.c.h.b16 %v4120
      %v4335 = vunpack.c.l.b16 %v4121
      %v4336 = vunpack.c.h.b16 %v4121
      %v4337 = vunpack.c.l.b16 %v4122
      %v4338 = vunpack.c.h.b16 %v4122
      %v4339 = vunpack.c.l.b16 %v4123
      %v4340 = vunpack.c.h.b16 %v4123
      %v4341 = vunpack.c.l.b16 %v4124
      %v4342 = vunpack.c.h.b16 %v4124
      %v4343 = vunpack.c.l.b16 %v4125
      %v4344 = vunpack.c.h.b16 %v4125
      %v4345 = vunpack.c.l.b16 %v4126
      %v4346 = vunpack.c.h.b16 %v4126
      %v4347 = vunpack.c.l.b16 %v4127
      %v4348 = vunpack.c.h.b16 %v4127
      %v4349 = vunpack.c.l.b16 %v4128
      %v4350 = vunpack.c.h.b16 %v4128
      %v4351 = vunpack.c.l.b16 %v4129
      %v4352 = vunpack.c.h.b16 %v4129
      %v4353 = vunpack.c.l.b16 %v4130
      %v4354 = vunpack.c.h.b16 %v4130
      %v4355 = vunpack.c.l.b16 %v4131
      %v4356 = vunpack.c.h.b16 %v4131
      %v4357 = vunpack.c.l.b16 %v4132
      %v4358 = vunpack.c.h.b16 %v4132
      %v4359 = vunpack.c.l.b16 %v4133
      %v4360 = vunpack.c.h.b16 %v4133
      %v4361 = vunpack.c.l.b16 %v4134
      %v4362 = vunpack.c.h.b16 %v4134
      %v4363 = vunpack.c.l.b16 %v4135
      %v4364 = vunpack.c.h.b16 %v4135
      %v4365 = vunpack.c.l.b16 %v4136
      %v4366 = vunpack.c.h.b16 %v4136
      %v4367 = vunpack.c.l.b16 %v4137
      %v4368 = vunpack.c.h.b16 %v4137
      %v4369 = vunpack.c.l.b16 %v4138
      %v4370 = vunpack.c.h.b16 %v4138
      %v4371 = vunpack.c.l.b16 %v4139
      %v4372 = vunpack.c.h.b16 %v4139
      %v4373 = vunpack.c.l.b16 %v4140
      %v4374 = vunpack.c.h.b16 %v4140
      %v4375 = vpack.c.b16 %v4249, %v4247
      %v4376 = vpack.c.b16 %v4250, %v4248
      %v4377 = vpack.c.b16 %v4253, %v4251
      %v4378 = vpack.c.b16 %v4254, %v4252
      %v4379 = vpack.c.b16 %v4257, %v4255
      %v4380 = vpack.c.b16 %v4258, %v4256
      %v4381 = vpack.c.b16 %v4261, %v4259
      %v4382 = vpack.c.b16 %v4262, %v4260
      %v4383 = vpack.c.b16 %v4265, %v4263
      %v4384 = vpack.c.b16 %v4266, %v4264
      %v4385 = vpack.c.b16 %v4269, %v4267
      %v4386 = vpack.c.b16 %v4270, %v4268
      %v4387 = vpack.c.b16 %v4273, %v4271
      %v4388 = vpack.c.b16 %v4274, %v4272
      %v4389 = vpack.c.b16 %v4277, %v4275
      %v4390 = vpack.c.b16 %v4278, %v4276
      %v4391 = vpack.c.b16 %v4281, %v4279
      %v4392 = vpack.c.b16 %v4282, %v4280
      %v4393 = vpack.c.b16 %v4285, %v4283
      %v4394 = vpack.c.b16 %v4286, %v4284
      %v4395 = vpack.c.b16 %v4289, %v4287
      %v4396 = vpack.c.b16 %v4290, %v4288
      %v4397 = vpack.c.b16 %v4293, %v4291
      %v4398 = vpack.c.b16 %v4294, %v4292
      %v4399 = vpack.c.b16 %v4297, %v4295
      %v4400 = vpack.c.b16 %v4298, %v4296
      %v4401 = vpack.c.b16 %v4301, %v4299
      %v4402 = vpack.c.b16 %v4302, %v4300
      %v4403 = vpack.c.b16 %v4305, %v4303
      %v4404 = vpack.c.b16 %v4306, %v4304
      %v4405 = vpack.c.b16 %v4309, %v4307
      %v4406 = vpack.c.b16 %v4310, %v4308
      %v4407 = vpack.c.b16 %v4313, %v4311
      %v4408 = vpack.c.b16 %v4314, %v4312
      %v4409 = vpack.c.b16 %v4317, %v4315
      %v4410 = vpack.c.b16 %v4318, %v4316
      %v4411 = vpack.c.b16 %v4321, %v4319
      %v4412 = vpack.c.b16 %v4322, %v4320
      %v4413 = vpack.c.b16 %v4325, %v4323
      %v4414 = vpack.c.b16 %v4326, %v4324
      %v4415 = vpack.c.b16 %v4329, %v4327
      %v4416 = vpack.c.b16 %v4330, %v4328
      %v4417 = vpack.c.b16 %v4333, %v4331
      %v4418 = vpack.c.b16 %v4334, %v4332
      %v4419 = vpack.c.b16 %v4337, %v4335
      %v4420 = vpack.c.b16 %v4338, %v4336
      %v4421 = vpack.c.b16 %v4341, %v4339
      %v4422 = vpack.c.b16 %v4342, %v4340
      %v4423 = vpack.c.b16 %v4345, %v4343
      %v4424 = vpack.c.b16 %v4346, %v4344
      %v4425 = vpack.c.b16 %v4349, %v4347
      %v4426 = vpack.c.b16 %v4350, %v4348
      %v4427 = vpack.c.b16 %v4353, %v4351
      %v4428 = vpack.c.b16 %v4354, %v4352
      %v4429 = vpack.c.b16 %v4357, %v4355
      %v4430 = vpack.c.b16 %v4358, %v4356
      %v4431 = vpack.c.b16 %v4361, %v4359
      %v4432 = vpack.c.b16 %v4362, %v4360
      %v4433 = vpack.c.b16 %v4365, %v4363
      %v4434 = vpack.c.b16 %v4366, %v4364
      %v4435 = vpack.c.b16 %v4369, %v4367
      %v4436 = vpack.c.b16 %v4370, %v4368
      %v4437 = vpack.c.b16 %v4373, %v4371
      %v4438 = vpack.c.b16 %v4374, %v4372
      %4503 = vmatprep.subr.bf16.mxu0 %v4376
      %4504 = vmatpush1.bf16.msra.mxu0 %v4375
      %4505 = vmatprep.subr.bf16.mxu0 %v4378
      %4506 = vmatpush1.bf16.msra.mxu0 %v4377
      %4507 = vmatprep.subr.bf16.mxu0 %v4380
      %4508 = vmatpush1.bf16.msra.mxu0 %v4379
      %4509 = vmatprep.subr.bf16.mxu0 %v4382
      %4510 = vmatpush1.bf16.msra.mxu0 %v4381
      %4511 = vmatprep.subr.bf16.mxu0 %v4384
      %4512 = vmatpush1.bf16.msra.mxu0 %v4383
      %4513 = vmatprep.subr.bf16.mxu0 %v4386
      %4514 = vmatpush1.bf16.msra.mxu0 %v4385
      %4515 = vmatprep.subr.bf16.mxu0 %v4388
      %4516 = vmatpush1.bf16.msra.mxu0 %v4387
      %4517 = vmatprep.subr.bf16.mxu0 %v4390
      %4518 = vmatpush1.bf16.msra.mxu0 %v4389
      %4519 = vmatprep.subr.bf16.mxu0 %v4392
      %4520 = vmatpush1.bf16.msra.mxu0 %v4391
      %4521 = vmatprep.subr.bf16.mxu0 %v4394
      %4522 = vmatpush1.bf16.msra.mxu0 %v4393
      %4523 = vmatprep.subr.bf16.mxu0 %v4396
      %4524 = vmatpush1.bf16.msra.mxu0 %v4395
      %4525 = vmatprep.subr.bf16.mxu0 %v4398
      %4526 = vmatpush1.bf16.msra.mxu0 %v4397
      %4527 = vmatprep.subr.bf16.mxu0 %v4400
      %4528 = vmatpush1.bf16.msra.mxu0 %v4399
      %4529 = vmatprep.subr.bf16.mxu0 %v4402
      %4530 = vmatpush1.bf16.msra.mxu0 %v4401
      %4531 = vmatprep.subr.bf16.mxu0 %v4404
      %4532 = vmatpush1.bf16.msra.mxu0 %v4403
      %4533 = vmatprep.subr.bf16.mxu0 %v4406
      %4534 = vmatpush1.bf16.msra.mxu0 %v4405
      %4535 = vmatprep.mubr.bf16.mxu0 %v4164
      %4536 = vmatmul.mubr.bf16.gmra.mrb[0].mxu0 %v4157
      %v4537 = vpop.f32.mrb[0].mxu0
      %v4538 = vadd.f32 0.0, %v4537
      %v4539 = vpop.f32.mrb[0].mxu0
      %v4540 = vadd.f32 0.0, %v4539
      %v4541 = vpop.f32.mrb[0].mxu0
      %v4542 = vpop.f32.mrb[0].mxu0
      %4543 = vdwg.mxu0
      %4544 = vmatprep.subr.bf16.mxu0 %v4408
      %4545 = vmatpush1.bf16.msra.mxu0 %v4407
      %4546 = vmatprep.subr.bf16.mxu0 %v4410
      %4547 = vmatpush1.bf16.msra.mxu0 %v4409
      %4548 = vmatprep.subr.bf16.mxu0 %v4412
      %4549 = vmatpush1.bf16.msra.mxu0 %v4411
      %4550 = vmatprep.subr.bf16.mxu0 %v4414
      %4551 = vmatpush1.bf16.msra.mxu0 %v4413
      %4552 = vmatprep.subr.bf16.mxu0 %v4416
      %4553 = vmatpush1.bf16.msra.mxu0 %v4415
      %4554 = vmatprep.subr.bf16.mxu0 %v4418
      %4555 = vmatpush1.bf16.msra.mxu0 %v4417
      %4556 = vmatprep.subr.bf16.mxu0 %v4420
      %4557 = vmatpush1.bf16.msra.mxu0 %v4419
      %4558 = vmatprep.subr.bf16.mxu0 %v4422
      %4559 = vmatpush1.bf16.msra.mxu0 %v4421
      %4560 = vmatprep.subr.bf16.mxu0 %v4424
      %4561 = vmatpush1.bf16.msra.mxu0 %v4423
      %4562 = vmatprep.subr.bf16.mxu0 %v4426
      %4563 = vmatpush1.bf16.msra.mxu0 %v4425
      %4564 = vmatprep.subr.bf16.mxu0 %v4428
      %4565 = vmatpush1.bf16.msra.mxu0 %v4427
      %4566 = vmatprep.subr.bf16.mxu0 %v4430
      %4567 = vmatpush1.bf16.msra.mxu0 %v4429
      %4568 = vmatprep.subr.bf16.mxu0 %v4432
      %4569 = vmatpush1.bf16.msra.mxu0 %v4431
      %4570 = vmatprep.subr.bf16.mxu0 %v4434
      %4571 = vmatpush1.bf16.msra.mxu0 %v4433
      %4572 = vmatprep.subr.bf16.mxu0 %v4436
      %4573 = vmatpush1.bf16.msra.mxu0 %v4435
      %4574 = vmatprep.subr.bf16.mxu0 %v4438
      %4575 = vmatpush1.bf16.msra.mxu0 %v4437
      %4576 = vmatprep.mubr.bf16.mxu0 %v4178
      %4577 = vmatmul.mubr.bf16.gmra.mrb[0].mxu0 %v4171
      %v4578 = vpop.f32.mrb[0].mxu0
      %v4579 = vadd.f32 %v4538, %v4578
      %v4580 = vpop.f32.mrb[0].mxu0
      %v4581 = vadd.f32 %v4540, %v4580
      %v4582 = vpop.f32.mrb[0].mxu0
      %v4583 = vpop.f32.mrb[0].mxu0
      %4584 = vdwg.mxu0
      %v4587 = vunpack.c.l.b16 %v4008
      %v4588 = vunpack.c.h.b16 %v4008
      %v4589 = vunpack.c.l.b16 %v4009
      %v4590 = vunpack.c.h.b16 %v4009
      %v4591 = vpack.c.b16 %v4587, %v4587
      %v4592 = vpack.c.b16 %v4588, %v4588
      %v4593 = vpack.c.b16 %v4589, %v4589
      %v4594 = vpack.c.b16 %v4590, %v4590
      %v4663 = vunpack.c.l.b16 %v4012
      %v4664 = vunpack.c.h.b16 %v4012
      %v4665 = vunpack.c.l.b16 %v4013
      %v4666 = vunpack.c.h.b16 %v4013
      %v4667 = vunpack.c.l.b16 %v4014
      %v4668 = vunpack.c.h.b16 %v4014
      %v4669 = vunpack.c.l.b16 %v4015
      %v4670 = vunpack.c.h.b16 %v4015
      %v4671 = vunpack.c.l.b16 %v4016
      %v4672 = vunpack.c.h.b16 %v4016
      %v4673 = vunpack.c.l.b16 %v4017
      %v4674 = vunpack.c.h.b16 %v4017
      %v4675 = vunpack.c.l.b16 %v4018
      %v4676 = vunpack.c.h.b16 %v4018
      %v4677 = vunpack.c.l.b16 %v4019
      %v4678 = vunpack.c.h.b16 %v4019
      %v4679 = vunpack.c.l.b16 %v4020
      %v4680 = vunpack.c.h.b16 %v4020
      %v4681 = vunpack.c.l.b16 %v4021
      %v4682 = vunpack.c.h.b16 %v4021
      %v4683 = vunpack.c.l.b16 %v4022
      %v4684 = vunpack.c.h.b16 %v4022
      %v4685 = vunpack.c.l.b16 %v4023
      %v4686 = vunpack.c.h.b16 %v4023
      %v4687 = vunpack.c.l.b16 %v4024
      %v4688 = vunpack.c.h.b16 %v4024
      %v4689 = vunpack.c.l.b16 %v4025
      %v4690 = vunpack.c.h.b16 %v4025
      %v4691 = vunpack.c.l.b16 %v4026
      %v4692 = vunpack.c.h.b16 %v4026
      %v4693 = vunpack.c.l.b16 %v4027
      %v4694 = vunpack.c.h.b16 %v4027
      %v4695 = vunpack.c.l.b16 %v4028
      %v4696 = vunpack.c.h.b16 %v4028
      %v4697 = vunpack.c.l.b16 %v4029
      %v4698 = vunpack.c.h.b16 %v4029
      %v4699 = vunpack.c.l.b16 %v4030
      %v4700 = vunpack.c.h.b16 %v4030
      %v4701 = vunpack.c.l.b16 %v4031
      %v4702 = vunpack.c.h.b16 %v4031
      %v4703 = vunpack.c.l.b16 %v4032
      %v4704 = vunpack.c.h.b16 %v4032
      %v4705 = vunpack.c.l.b16 %v4033
      %v4706 = vunpack.c.h.b16 %v4033
      %v4707 = vunpack.c.l.b16 %v4034
      %v4708 = vunpack.c.h.b16 %v4034
      %v4709 = vunpack.c.l.b16 %v4035
      %v4710 = vunpack.c.h.b16 %v4035
      %v4711 = vunpack.c.l.b16 %v4036
      %v4712 = vunpack.c.h.b16 %v4036
      %v4713 = vunpack.c.l.b16 %v4037
      %v4714 = vunpack.c.h.b16 %v4037
      %v4715 = vunpack.c.l.b16 %v4038
      %v4716 = vunpack.c.h.b16 %v4038
      %v4717 = vunpack.c.l.b16 %v4039
      %v4718 = vunpack.c.h.b16 %v4039
      %v4719 = vunpack.c.l.b16 %v4040
      %v4720 = vunpack.c.h.b16 %v4040
      %v4721 = vunpack.c.l.b16 %v4041
      %v4722 = vunpack.c.h.b16 %v4041
      %v4723 = vunpack.c.l.b16 %v4042
      %v4724 = vunpack.c.h.b16 %v4042
      %v4725 = vunpack.c.l.b16 %v4043
      %v4726 = vunpack.c.h.b16 %v4043
      %v4727 = vunpack.c.l.b16 %v4044
      %v4728 = vunpack.c.h.b16 %v4044
      %v4729 = vunpack.c.l.b16 %v4045
      %v4730 = vunpack.c.h.b16 %v4045
      %v4731 = vunpack.c.l.b16 %v4046
      %v4732 = vunpack.c.h.b16 %v4046
      %v4733 = vunpack.c.l.b16 %v4047
      %v4734 = vunpack.c.h.b16 %v4047
      %v4735 = vunpack.c.l.b16 %v4048
      %v4736 = vunpack.c.h.b16 %v4048
      %v4737 = vunpack.c.l.b16 %v4049
      %v4738 = vunpack.c.h.b16 %v4049
      %v4739 = vunpack.c.l.b16 %v4050
      %v4740 = vunpack.c.h.b16 %v4050
      %v4741 = vunpack.c.l.b16 %v4051
      %v4742 = vunpack.c.h.b16 %v4051
      %v4743 = vunpack.c.l.b16 %v4052
      %v4744 = vunpack.c.h.b16 %v4052
      %v4745 = vunpack.c.l.b16 %v4053
      %v4746 = vunpack.c.h.b16 %v4053
      %v4747 = vunpack.c.l.b16 %v4054
      %v4748 = vunpack.c.h.b16 %v4054
      %v4749 = vunpack.c.l.b16 %v4055
      %v4750 = vunpack.c.h.b16 %v4055
      %v4751 = vunpack.c.l.b16 %v4056
      %v4752 = vunpack.c.h.b16 %v4056
      %v4753 = vunpack.c.l.b16 %v4057
      %v4754 = vunpack.c.h.b16 %v4057
      %v4755 = vunpack.c.l.b16 %v4058
      %v4756 = vunpack.c.h.b16 %v4058
      %v4757 = vunpack.c.l.b16 %v4059
      %v4758 = vunpack.c.h.b16 %v4059
      %v4759 = vunpack.c.l.b16 %v4060
      %v4760 = vunpack.c.h.b16 %v4060
      %v4761 = vunpack.c.l.b16 %v4061
      %v4762 = vunpack.c.h.b16 %v4061
      %v4763 = vunpack.c.l.b16 %v4062
      %v4764 = vunpack.c.h.b16 %v4062
      %v4765 = vunpack.c.l.b16 %v4063
      %v4766 = vunpack.c.h.b16 %v4063
      %v4767 = vunpack.c.l.b16 %v4064
      %v4768 = vunpack.c.h.b16 %v4064
      %v4769 = vunpack.c.l.b16 %v4065
      %v4770 = vunpack.c.h.b16 %v4065
      %v4771 = vunpack.c.l.b16 %v4066
      %v4772 = vunpack.c.h.b16 %v4066
      %v4773 = vunpack.c.l.b16 %v4067
      %v4774 = vunpack.c.h.b16 %v4067
      %v4775 = vunpack.c.l.b16 %v4068
      %v4776 = vunpack.c.h.b16 %v4068
      %v4777 = vunpack.c.l.b16 %v4069
      %v4778 = vunpack.c.h.b16 %v4069
      %v4779 = vunpack.c.l.b16 %v4070
      %v4780 = vunpack.c.h.b16 %v4070
      %v4781 = vunpack.c.l.b16 %v4071
      %v4782 = vunpack.c.h.b16 %v4071
      %v4783 = vunpack.c.l.b16 %v4072
      %v4784 = vunpack.c.h.b16 %v4072
      %v4785 = vunpack.c.l.b16 %v4073
      %v4786 = vunpack.c.h.b16 %v4073
      %v4787 = vunpack.c.l.b16 %v4074
      %v4788 = vunpack.c.h.b16 %v4074
      %v4789 = vunpack.c.l.b16 %v4075
      %v4790 = vunpack.c.h.b16 %v4075
      %v4791 = vpack.c.b16 %v4665, %v4663
      %v4792 = vpack.c.b16 %v4666, %v4664
      %v4793 = vpack.c.b16 %v4669, %v4667
      %v4794 = vpack.c.b16 %v4670, %v4668
      %v4795 = vpack.c.b16 %v4673, %v4671
      %v4796 = vpack.c.b16 %v4674, %v4672
      %v4797 = vpack.c.b16 %v4677, %v4675
      %v4798 = vpack.c.b16 %v4678, %v4676
      %v4799 = vpack.c.b16 %v4681, %v4679
      %v4800 = vpack.c.b16 %v4682, %v4680
      %v4801 = vpack.c.b16 %v4685, %v4683
      %v4802 = vpack.c.b16 %v4686, %v4684
      %v4803 = vpack.c.b16 %v4689, %v4687
      %v4804 = vpack.c.b16 %v4690, %v4688
      %v4805 = vpack.c.b16 %v4693, %v4691
      %v4806 = vpack.c.b16 %v4694, %v4692
      %v4807 = vpack.c.b16 %v4697, %v4695
      %v4808 = vpack.c.b16 %v4698, %v4696
      %v4809 = vpack.c.b16 %v4701, %v4699
      %v4810 = vpack.c.b16 %v4702, %v4700
      %v4811 = vpack.c.b16 %v4705, %v4703
      %v4812 = vpack.c.b16 %v4706, %v4704
      %v4813 = vpack.c.b16 %v4709, %v4707
      %v4814 = vpack.c.b16 %v4710, %v4708
      %v4815 = vpack.c.b16 %v4713, %v4711
      %v4816 = vpack.c.b16 %v4714, %v4712
      %v4817 = vpack.c.b16 %v4717, %v4715
      %v4818 = vpack.c.b16 %v4718, %v4716
      %v4819 = vpack.c.b16 %v4721, %v4719
      %v4820 = vpack.c.b16 %v4722, %v4720
      %v4821 = vpack.c.b16 %v4725, %v4723
      %v4822 = vpack.c.b16 %v4726, %v4724
      %v4823 = vpack.c.b16 %v4729, %v4727
      %v4824 = vpack.c.b16 %v4730, %v4728
      %v4825 = vpack.c.b16 %v4733, %v4731
      %v4826 = vpack.c.b16 %v4734, %v4732
      %v4827 = vpack.c.b16 %v4737, %v4735
      %v4828 = vpack.c.b16 %v4738, %v4736
      %v4829 = vpack.c.b16 %v4741, %v4739
      %v4830 = vpack.c.b16 %v4742, %v4740
      %v4831 = vpack.c.b16 %v4745, %v4743
      %v4832 = vpack.c.b16 %v4746, %v4744
      %v4833 = vpack.c.b16 %v4749, %v4747
      %v4834 = vpack.c.b16 %v4750, %v4748
      %v4835 = vpack.c.b16 %v4753, %v4751
      %v4836 = vpack.c.b16 %v4754, %v4752
      %v4837 = vpack.c.b16 %v4757, %v4755
      %v4838 = vpack.c.b16 %v4758, %v4756
      %v4839 = vpack.c.b16 %v4761, %v4759
      %v4840 = vpack.c.b16 %v4762, %v4760
      %v4841 = vpack.c.b16 %v4765, %v4763
      %v4842 = vpack.c.b16 %v4766, %v4764
      %v4843 = vpack.c.b16 %v4769, %v4767
      %v4844 = vpack.c.b16 %v4770, %v4768
      %v4845 = vpack.c.b16 %v4773, %v4771
      %v4846 = vpack.c.b16 %v4774, %v4772
      %v4847 = vpack.c.b16 %v4777, %v4775
      %v4848 = vpack.c.b16 %v4778, %v4776
      %v4849 = vpack.c.b16 %v4781, %v4779
      %v4850 = vpack.c.b16 %v4782, %v4780
      %v4851 = vpack.c.b16 %v4785, %v4783
      %v4852 = vpack.c.b16 %v4786, %v4784
      %v4853 = vpack.c.b16 %v4789, %v4787
      %v4854 = vpack.c.b16 %v4790, %v4788
      %4919 = vmatprep.subr.bf16.mxu0 %v4792
      %4920 = vmatpush1.bf16.msra.mxu0 %v4791
      %4921 = vmatprep.subr.bf16.mxu0 %v4794
      %4922 = vmatpush1.bf16.msra.mxu0 %v4793
      %4923 = vmatprep.subr.bf16.mxu0 %v4796
      %4924 = vmatpush1.bf16.msra.mxu0 %v4795
      %4925 = vmatprep.subr.bf16.mxu0 %v4798
      %4926 = vmatpush1.bf16.msra.mxu0 %v4797
      %4927 = vmatprep.subr.bf16.mxu0 %v4800
      %4928 = vmatpush1.bf16.msra.mxu0 %v4799
      %4929 = vmatprep.subr.bf16.mxu0 %v4802
      %4930 = vmatpush1.bf16.msra.mxu0 %v4801
      %4931 = vmatprep.subr.bf16.mxu0 %v4804
      %4932 = vmatpush1.bf16.msra.mxu0 %v4803
      %4933 = vmatprep.subr.bf16.mxu0 %v4806
      %4934 = vmatpush1.bf16.msra.mxu0 %v4805
      %4935 = vmatprep.subr.bf16.mxu0 %v4808
      %4936 = vmatpush1.bf16.msra.mxu0 %v4807
      %4937 = vmatprep.subr.bf16.mxu0 %v4810
      %4938 = vmatpush1.bf16.msra.mxu0 %v4809
      %4939 = vmatprep.subr.bf16.mxu0 %v4812
      %4940 = vmatpush1.bf16.msra.mxu0 %v4811
      %4941 = vmatprep.subr.bf16.mxu0 %v4814
      %4942 = vmatpush1.bf16.msra.mxu0 %v4813
      %4943 = vmatprep.subr.bf16.mxu0 %v4816
      %4944 = vmatpush1.bf16.msra.mxu0 %v4815
      %4945 = vmatprep.subr.bf16.mxu0 %v4818
      %4946 = vmatpush1.bf16.msra.mxu0 %v4817
      %4947 = vmatprep.subr.bf16.mxu0 %v4820
      %4948 = vmatpush1.bf16.msra.mxu0 %v4819
      %4949 = vmatprep.subr.bf16.mxu0 %v4822
      %4950 = vmatpush1.bf16.msra.mxu0 %v4821
      %4951 = vmatprep.mubr.bf16.mxu0 %v4592
      %4952 = vmatmul.mubr.bf16.gmra.mrb[0].mxu0 %v4591
      %v4953 = vpop.f32.mrb[0].mxu0
      %v4954 = vadd.f32 %v4579, %v4953
      %v4955 = vpop.f32.mrb[0].mxu0
      %v4956 = vadd.f32 %v4581, %v4955
      %v4957 = vpop.f32.mrb[0].mxu0
      %v4958 = vpop.f32.mrb[0].mxu0
      %4959 = vdwg.mxu0
      %4960 = vmatprep.subr.bf16.mxu0 %v4824
      %4961 = vmatpush1.bf16.msra.mxu0 %v4823
      %4962 = vmatprep.subr.bf16.mxu0 %v4826
      %4963 = vmatpush1.bf16.msra.mxu0 %v4825
      %4964 = vmatprep.subr.bf16.mxu0 %v4828
      %4965 = vmatpush1.bf16.msra.mxu0 %v4827
      %4966 = vmatprep.subr.bf16.mxu0 %v4830
      %4967 = vmatpush1.bf16.msra.mxu0 %v4829
      %4968 = vmatprep.subr.bf16.mxu0 %v4832
      %4969 = vmatpush1.bf16.msra.mxu0 %v4831
      %4970 = vmatprep.subr.bf16.mxu0 %v4834
      %4971 = vmatpush1.bf16.msra.mxu0 %v4833
      %4972 = vmatprep.subr.bf16.mxu0 %v4836
      %4973 = vmatpush1.bf16.msra.mxu0 %v4835
      %4974 = vmatprep.subr.bf16.mxu0 %v4838
      %4975 = vmatpush1.bf16.msra.mxu0 %v4837
      %4976 = vmatprep.subr.bf16.mxu0 %v4840
      %4977 = vmatpush1.bf16.msra.mxu0 %v4839
      %4978 = vmatprep.subr.bf16.mxu0 %v4842
      %4979 = vmatpush1.bf16.msra.mxu0 %v4841
      %4980 = vmatprep.subr.bf16.mxu0 %v4844
      %4981 = vmatpush1.bf16.msra.mxu0 %v4843
      %4982 = vmatprep.subr.bf16.mxu0 %v4846
      %4983 = vmatpush1.bf16.msra.mxu0 %v4845
      %4984 = vmatprep.subr.bf16.mxu0 %v4848
      %4985 = vmatpush1.bf16.msra.mxu0 %v4847
      %4986 = vmatprep.subr.bf16.mxu0 %v4850
      %4987 = vmatpush1.bf16.msra.mxu0 %v4849
      %4988 = vmatprep.subr.bf16.mxu0 %v4852
      %4989 = vmatpush1.bf16.msra.mxu0 %v4851
      %4990 = vmatprep.subr.bf16.mxu0 %v4854
      %4991 = vmatpush1.bf16.msra.mxu0 %v4853
      %4992 = vmatprep.mubr.bf16.mxu0 %v4594
      %4993 = vmatmul.mubr.bf16.gmra.mrb[0].mxu0 %v4593
      %v4994 = vpop.f32.mrb[0].mxu0
      %v4995 = vadd.f32 %v4954, %v4994
      %v4996 = vpop.f32.mrb[0].mxu0
      %v4997 = vadd.f32 %v4956, %v4996
      %v4998 = vpop.f32.mrb[0].mxu0
      %v4999 = vpop.f32.mrb[0].mxu0
      %5000 = vdwg.mxu0
      %vm5001 = vcmp.ge.f32.partialorder %v4995, 0.0
      %vm5002 = vcmp.ge.f32.partialorder %v4997, 0.0
      %v5003 = vmul.f32 %v4995, 0.01
      %v5004 = vmul.f32 %v4997, 0.01
      %v5005 = vsel %vm5001, %v4995, %v5003
      %v5006 = vsel %vm5002, %v4997, %v5004
      %v5007 = vld [vmem:[%s393] sm:$0x1]
      %v5008 = vpack.c.bf16 %v5007, %v5007
      %v5009 = vld [vmem:[%s6] sm:$0xf]
      %v5010 = vld [vmem:[%s7] sm:$0x1]
      %vm5011 = vcmask 64512
      %v5013 = vsel %vm5011, %v5008, 0
      %vm5015 = vcmask 1043456
      %v5017 = vsel %vm5015, %v5009, 0
      %5019 = vmatprep.subr.bf16.mxu0 0
      %5020 = vmatpush1.bf16.msra.mxu0 %v5017
      %5021 = vmatprep.subr.bf16.mxu0 0
      %5022 = vmatpush1.bf16.msra.mxu0 0
      %5023 = vmatprep.subr.bf16.mxu0 0
      %5024 = vmatpush1.bf16.msra.mxu0 0
      %5025 = vmatprep.subr.bf16.mxu0 0
      %5026 = vmatpush1.bf16.msra.mxu0 0
      %5027 = vmatprep.subr.bf16.mxu0 0
      %5028 = vmatpush1.bf16.msra.mxu0 0
      %5029 = vmatprep.subr.bf16.mxu0 0
      %5030 = vmatpush1.bf16.msra.mxu0 0
      %5031 = vmatprep.subr.bf16.mxu0 0
      %5032 = vmatpush1.bf16.msra.mxu0 0
      %5033 = vmatprep.subr.bf16.mxu0 0
      %5034 = vmatpush1.bf16.msra.mxu0 0
      %5035 = vmatprep.subr.bf16.mxu0 0
      %5036 = vmatpush1.bf16.msra.mxu0 0
      %5037 = vmatprep.subr.bf16.mxu0 0
      %5038 = vmatpush1.bf16.msra.mxu0 0
      %5039 = vmatprep.subr.bf16.mxu0 0
      %5040 = vmatpush1.bf16.msra.mxu0 0
      %5041 = vmatprep.subr.bf16.mxu0 0
      %5042 = vmatpush1.bf16.msra.mxu0 0
      %5043 = vmatprep.subr.bf16.mxu0 0
      %5044 = vmatpush1.bf16.msra.mxu0 0
      %5045 = vmatprep.subr.bf16.mxu0 0
      %5046 = vmatpush1.bf16.msra.mxu0 0
      %5047 = vmatprep.subr.bf16.mxu0 0
      %5048 = vmatpush1.bf16.msra.mxu0 0
      %5049 = vmatprep.subr.bf16.mxu0 0
      %5050 = vmatpush1.bf16.msra.mxu0 0
      %5051 = vmatprep.mubr.bf16.mxu0 0
      %5052 = vmatmul.mubr.bf16.gmra.mrb[0].mxu0 %v5013
      %v5053 = vpop.f32.mrb[0].mxu0
      %v5054 = vadd.f32 %v5010, %v5053
      %v5055 = vpop.f32.mrb[0].mxu0
      %v5056 = vpop.f32.mrb[0].mxu0
      %v5057 = vpop.f32.mrb[0].mxu0
      %5058 = vdwg.mxu0
      %vm5059 = vcmp.ge.f32.partialorder %v5054, 0.0
      %v5060 = vmul.f32 %v5054, 0.01
      %v5061 = vsel %vm5059, %v5054, %v5060
      %v5062 = vpack.c.bf16 %v5061, %v5061
      %v5063 = vld [vmem:[%s8] sm:$0xf]
      %v5064 = vld [vmem:[%s8 + $0x4] sm:$0xf]
      %v5065 = vld [vmem:[%s8 + $0x8] sm:$0xf]
      %v5066 = vld [vmem:[%s8 + $0xc] sm:$0xf]
      %v5071 = vunpack.c.l.b16 %v5063
      %v5072 = vunpack.c.l.b16 %v5064
      %v5073 = vunpack.c.l.b16 %v5065
      %v5074 = vunpack.c.l.b16 %v5066
      %v5075 = vpack.c.b16 %v5072, %v5071
      %v5076 = vpack.c.b16 %v5074, %v5073
      %vm5079 = vcmask 261120
      %v5081 = vsel %vm5079, %v5062, 0
      %5083 = vmatprep.subr.bf16.mxu0 0
      %5084 = vmatpush1.bf16.msra.mxu0 %v5075
      %5085 = vmatprep.subr.bf16.mxu0 0
      %5086 = vmatpush1.bf16.msra.mxu0 %v5076
      %5087 = vmatprep.subr.bf16.mxu0 0
      %5088 = vmatpush1.bf16.msra.mxu0 0
      %5089 = vmatprep.subr.bf16.mxu0 0
      %5090 = vmatpush1.bf16.msra.mxu0 0
      %5091 = vmatprep.subr.bf16.mxu0 0
      %5092 = vmatpush1.bf16.msra.mxu0 0
      %5093 = vmatprep.subr.bf16.mxu0 0
      %5094 = vmatpush1.bf16.msra.mxu0 0
      %5095 = vmatprep.subr.bf16.mxu0 0
      %5096 = vmatpush1.bf16.msra.mxu0 0
      %5097 = vmatprep.subr.bf16.mxu0 0
      %5098 = vmatpush1.bf16.msra.mxu0 0
      %5099 = vmatprep.subr.bf16.mxu0 0
      %5100 = vmatpush1.bf16.msra.mxu0 0
      %5101 = vmatprep.subr.bf16.mxu0 0
      %5102 = vmatpush1.bf16.msra.mxu0 0
      %5103 = vmatprep.subr.bf16.mxu0 0
      %5104 = vmatpush1.bf16.msra.mxu0 0
      %5105 = vmatprep.subr.bf16.mxu0 0
      %5106 = vmatpush1.bf16.msra.mxu0 0
      %5107 = vmatprep.subr.bf16.mxu0 0
      %5108 = vmatpush1.bf16.msra.mxu0 0
      %5109 = vmatprep.subr.bf16.mxu0 0
      %5110 = vmatpush1.bf16.msra.mxu0 0
      %5111 = vmatprep.subr.bf16.mxu0 0
      %5112 = vmatpush1.bf16.msra.mxu0 0
      %5113 = vmatprep.subr.bf16.mxu0 0
      %5114 = vmatpush1.bf16.msra.mxu0 0
      %5115 = vmatprep.mubr.bf16.mxu0 0
      %5116 = vmatmul.mubr.bf16.gmra.mrb[0].mxu0 %v5081
      %v5117 = vpop.f32.mrb[0].mxu0
      %v5118 = vadd.f32 0.0, %v5117
      %v5119 = vpop.f32.mrb[0].mxu0
      %v5120 = vpop.f32.mrb[0].mxu0
      %v5121 = vpop.f32.mrb[0].mxu0
      %5122 = vdwg.mxu0
      %5124 = vrot.lane.b32.xlu0 %v5118, 64
      %v5125 = vpop.permute.xlu0 %5124
      %vm5127 = vcmask 523264
      %v5128 = vsel %vm5127, %v5118, %v5125
      %v5129 = vpack.c.bf16 %v5005, %v5005
      %v5130 = vpack.c.bf16 %v5006, %v5006
      %v5131 = vld [vmem:[%s9] sm:$0xff]
      %v5132 = vld [vmem:[%s9 + $0x8] sm:$0xff]
      %v5133 = vld [vmem:[%s9 + $0x10] sm:$0xff]
      %v5134 = vld [vmem:[%s9 + $0x18] sm:$0xff]
      %v5135 = vld [vmem:[%s9 + $0x20] sm:$0xff]
      %v5136 = vld [vmem:[%s9 + $0x28] sm:$0xff]
      %v5137 = vld [vmem:[%s9 + $0x30] sm:$0xff]
      %v5138 = vld [vmem:[%s9 + $0x38] sm:$0xff]
      %v5139 = vld [vmem:[%s9 + $0x40] sm:$0xff]
      %v5140 = vld [vmem:[%s9 + $0x48] sm:$0xff]
      %v5141 = vld [vmem:[%s9 + $0x50] sm:$0xff]
      %v5142 = vld [vmem:[%s9 + $0x58] sm:$0xff]
      %v5143 = vld [vmem:[%s9 + $0x60] sm:$0xff]
      %v5144 = vld [vmem:[%s9 + $0x68] sm:$0xff]
      %v5145 = vld [vmem:[%s9 + $0x70] sm:$0xff]
      %v5146 = vld [vmem:[%s9 + $0x78] sm:$0xff]
      %v5147 = vld [vmem:[%s9 + $0x80] sm:$0xff]
      %v5148 = vld [vmem:[%s9 + $0x88] sm:$0xff]
      %v5149 = vld [vmem:[%s9 + $0x90] sm:$0xff]
      %v5150 = vld [vmem:[%s9 + $0x98] sm:$0xff]
      %v5151 = vld [vmem:[%s9 + $0xa0] sm:$0xff]
      %v5152 = vld [vmem:[%s9 + $0xa8] sm:$0xff]
      %v5153 = vld [vmem:[%s9 + $0xb0] sm:$0xff]
      %v5154 = vld [vmem:[%s9 + $0xb8] sm:$0xff]
      %v5155 = vld [vmem:[%s9 + $0xc0] sm:$0xff]
      %v5156 = vld [vmem:[%s9 + $0xc8] sm:$0xff]
      %v5157 = vld [vmem:[%s9 + $0xd0] sm:$0xff]
      %v5158 = vld [vmem:[%s9 + $0xd8] sm:$0xff]
      %v5159 = vld [vmem:[%s9 + $0xe0] sm:$0xff]
      %v5160 = vld [vmem:[%s9 + $0xe8] sm:$0xff]
      %v5161 = vld [vmem:[%s9 + $0xf0] sm:$0xff]
      %v5162 = vld [vmem:[%s9 + $0xf8] sm:$0xff]
      %v5163 = vlaneseq
      %v5164 = vshrl.u32 %v5163, 7
      %v5165 = vsub.s32 0, %v5164
      %v5166 = vrot.slane %v5128, %v5165
      %v5199 = vunpack.c.l.b16 %v5131
      %v5200 = vunpack.c.h.b16 %v5131
      %v5201 = vunpack.c.l.b16 %v5132
      %v5202 = vunpack.c.h.b16 %v5132
      %v5203 = vunpack.c.l.b16 %v5133
      %v5204 = vunpack.c.h.b16 %v5133
      %v5205 = vunpack.c.l.b16 %v5134
      %v5206 = vunpack.c.h.b16 %v5134
      %v5207 = vunpack.c.l.b16 %v5135
      %v5208 = vunpack.c.h.b16 %v5135
      %v5209 = vunpack.c.l.b16 %v5136
      %v5210 = vunpack.c.h.b16 %v5136
      %v5211 = vunpack.c.l.b16 %v5137
      %v5212 = vunpack.c.h.b16 %v5137
      %v5213 = vunpack.c.l.b16 %v5138
      %v5214 = vunpack.c.h.b16 %v5138
      %v5215 = vunpack.c.l.b16 %v5139
      %v5216 = vunpack.c.h.b16 %v5139
      %v5217 = vunpack.c.l.b16 %v5140
      %v5218 = vunpack.c.h.b16 %v5140
      %v5219 = vunpack.c.l.b16 %v5141
      %v5220 = vunpack.c.h.b16 %v5141
      %v5221 = vunpack.c.l.b16 %v5142
      %v5222 = vunpack.c.h.b16 %v5142
      %v5223 = vunpack.c.l.b16 %v5143
      %v5224 = vunpack.c.h.b16 %v5143
      %v5225 = vunpack.c.l.b16 %v5144
      %v5226 = vunpack.c.h.b16 %v5144
      %v5227 = vunpack.c.l.b16 %v5145
      %v5228 = vunpack.c.h.b16 %v5145
      %v5229 = vunpack.c.l.b16 %v5146
      %v5230 = vunpack.c.h.b16 %v5146
      %v5231 = vunpack.c.l.b16 %v5147
      %v5232 = vunpack.c.h.b16 %v5147
      %v5233 = vunpack.c.l.b16 %v5148
      %v5234 = vunpack.c.h.b16 %v5148
      %v5235 = vunpack.c.l.b16 %v5149
      %v5236 = vunpack.c.h.b16 %v5149
      %v5237 = vunpack.c.l.b16 %v5150
      %v5238 = vunpack.c.h.b16 %v5150
      %v5239 = vunpack.c.l.b16 %v5151
      %v5240 = vunpack.c.h.b16 %v5151
      %v5241 = vunpack.c.l.b16 %v5152
      %v5242 = vunpack.c.h.b16 %v5152
      %v5243 = vunpack.c.l.b16 %v5153
      %v5244 = vunpack.c.h.b16 %v5153
      %v5245 = vunpack.c.l.b16 %v5154
      %v5246 = vunpack.c.h.b16 %v5154
      %v5247 = vunpack.c.l.b16 %v5155
      %v5248 = vunpack.c.h.b16 %v5155
      %v5249 = vunpack.c.l.b16 %v5156
      %v5250 = vunpack.c.h.b16 %v5156
      %v5251 = vunpack.c.l.b16 %v5157
      %v5252 = vunpack.c.h.b16 %v5157
      %v5253 = vunpack.c.l.b16 %v5158
      %v5254 = vunpack.c.h.b16 %v5158
      %v5255 = vunpack.c.l.b16 %v5159
      %v5256 = vunpack.c.h.b16 %v5159
      %v5257 = vunpack.c.l.b16 %v5160
      %v5258 = vunpack.c.h.b16 %v5160
      %v5259 = vunpack.c.l.b16 %v5161
      %v5260 = vunpack.c.h.b16 %v5161
      %v5261 = vunpack.c.l.b16 %v5162
      %v5262 = vunpack.c.h.b16 %v5162
      %v5263 = vpack.c.b16 %v5201, %v5199
      %v5264 = vpack.c.b16 %v5202, %v5200
      %v5265 = vpack.c.b16 %v5205, %v5203
      %v5266 = vpack.c.b16 %v5206, %v5204
      %v5267 = vpack.c.b16 %v5209, %v5207
      %v5268 = vpack.c.b16 %v5210, %v5208
      %v5269 = vpack.c.b16 %v5213, %v5211
      %v5270 = vpack.c.b16 %v5214, %v5212
      %v5271 = vpack.c.b16 %v5217, %v5215
      %v5272 = vpack.c.b16 %v5218, %v5216
      %v5273 = vpack.c.b16 %v5221, %v5219
      %v5274 = vpack.c.b16 %v5222, %v5220
      %v5275 = vpack.c.b16 %v5225, %v5223
      %v5276 = vpack.c.b16 %v5226, %v5224
      %v5277 = vpack.c.b16 %v5229, %v5227
      %v5278 = vpack.c.b16 %v5230, %v5228
      %v5279 = vpack.c.b16 %v5233, %v5231
      %v5280 = vpack.c.b16 %v5234, %v5232
      %v5281 = vpack.c.b16 %v5237, %v5235
      %v5282 = vpack.c.b16 %v5238, %v5236
      %v5283 = vpack.c.b16 %v5241, %v5239
      %v5284 = vpack.c.b16 %v5242, %v5240
      %v5285 = vpack.c.b16 %v5245, %v5243
      %v5286 = vpack.c.b16 %v5246, %v5244
      %v5287 = vpack.c.b16 %v5249, %v5247
      %v5288 = vpack.c.b16 %v5250, %v5248
      %v5289 = vpack.c.b16 %v5253, %v5251
      %v5290 = vpack.c.b16 %v5254, %v5252
      %v5291 = vpack.c.b16 %v5257, %v5255
      %v5292 = vpack.c.b16 %v5258, %v5256
      %v5293 = vpack.c.b16 %v5261, %v5259
      %v5294 = vpack.c.b16 %v5262, %v5260
      %5327 = vmatprep.subr.bf16.mxu0 %v5264
      %5328 = vmatpush1.bf16.msra.mxu0 %v5263
      %5329 = vmatprep.subr.bf16.mxu0 %v5266
      %5330 = vmatpush1.bf16.msra.mxu0 %v5265
      %5331 = vmatprep.subr.bf16.mxu0 %v5268
      %5332 = vmatpush1.bf16.msra.mxu0 %v5267
      %5333 = vmatprep.subr.bf16.mxu0 %v5270
      %5334 = vmatpush1.bf16.msra.mxu0 %v5269
      %5335 = vmatprep.subr.bf16.mxu0 %v5272
      %5336 = vmatpush1.bf16.msra.mxu0 %v5271
      %5337 = vmatprep.subr.bf16.mxu0 %v5274
      %5338 = vmatpush1.bf16.msra.mxu0 %v5273
      %5339 = vmatprep.subr.bf16.mxu0 %v5276
      %5340 = vmatpush1.bf16.msra.mxu0 %v5275
      %5341 = vmatprep.subr.bf16.mxu0 %v5278
      %5342 = vmatpush1.bf16.msra.mxu0 %v5277
      %5343 = vmatprep.subr.bf16.mxu0 %v5280
      %5344 = vmatpush1.bf16.msra.mxu0 %v5279
      %5345 = vmatprep.subr.bf16.mxu0 %v5282
      %5346 = vmatpush1.bf16.msra.mxu0 %v5281
      %5347 = vmatprep.subr.bf16.mxu0 %v5284
      %5348 = vmatpush1.bf16.msra.mxu0 %v5283
      %5349 = vmatprep.subr.bf16.mxu0 %v5286
      %5350 = vmatpush1.bf16.msra.mxu0 %v5285
      %5351 = vmatprep.subr.bf16.mxu0 %v5288
      %5352 = vmatpush1.bf16.msra.mxu0 %v5287
      %5353 = vmatprep.subr.bf16.mxu0 %v5290
      %5354 = vmatpush1.bf16.msra.mxu0 %v5289
      %5355 = vmatprep.subr.bf16.mxu0 %v5292
      %5356 = vmatpush1.bf16.msra.mxu0 %v5291
      %5357 = vmatprep.subr.bf16.mxu0 %v5294
      %5358 = vmatpush1.bf16.msra.mxu0 %v5293
      %5359 = vmatprep.mubr.bf16.mxu0 %v5130
      %5360 = vmatmul.mubr.bf16.gmra.mrb[0].mxu0 %v5129
      %v5361 = vpop.f32.mrb[0].mxu0
      %v5362 = vadd.f32 %v5166, %v5361
      %v5363 = vpop.f32.mrb[0].mxu0
      %v5364 = vadd.f32 %v5166, %v5363
      %v5365 = vpop.f32.mrb[0].mxu0
      %v5366 = vpop.f32.mrb[0].mxu0
      %5367 = vdwg.mxu0
      %vm5368 = vcmp.ge.f32.partialorder %v5362, 0.0
      %vm5369 = vcmp.ge.f32.partialorder %v5364, 0.0
      %v5370 = vmul.f32 %v5362, 0.01
      %v5371 = vmul.f32 %v5364, 0.01
      %v5372 = vsel %vm5368, %v5362, %v5370
      %v5373 = vsel %vm5369, %v5364, %v5371
      %v5374 = vld [vmem:[%s10] sm:$0xff]
      %v5376 = vcombine.high %v5374, %v5374
      %v5378 = vmul.f32 %v5372, %v5374
      %v5379 = vmul.f32 %v5373, %v5376
      %v5380 = vsel %vm5015, %v5378, 0.0
      %v5381 = vsel %vm5015, %v5379, 0.0
      %v5382 = vadd.f32 %v5380, %v5381
      %5383 = vadd.xlane.f32.xlu0 %v5382
      %v5384 = vpop.xlane.xlu0 %5383
      %v5385 = vrot.slane %v5384, 4
      %v5386 = vadd.f32 %v5384, %v5385
      %v5387 = vrot.slane %v5386, 2
      %v5388 = vadd.f32 %v5386, %v5387
      %v5389 = vrot.slane %v5388, 1
      %v5390 = vadd.f32 %v5388, %v5389
      %s5391 = vtos %v5390
      %v5392 = vstv %s5391
      %vm5393 = vcmask 0
      %5394 = vst.msk [vmem:[%s396] sm:$0x1] %vm5393, %v5392
      %p5395 = scmp.lt.s32.totalorder %s22, 1
      %s5396 = scalar_select %p5395, %s22, 1
      %s5397 = scalar_lea.vmem %s11, %s5396
      // Predicated region
      $region65: #{netd_forward.1} parent=63 // pred_check
        %p5398 = pneg %p281
      $region66: #{netd_forward.1} parent=63 // pred_check_branch
        %5400 = sbr.rel (%p5398) target = $region68
      $region67: #{netd_forward.1} parent=63 // pred_region
        _
      $region68: #{netd_forward.1} parent=63 // pred_fallthru
        _
    $region64: #{netd_forward.1} parent=5 // pred_fallthru
      _
    %p5401 = scmp.le.s32.totalorder 2, %s17
    // Predicated region
    $region69: #{netd_forward.1} parent=5 // pred_check
      %p5402 = pneg %p5401
    $region70: #{netd_forward.1} parent=5 // pred_check_branch
      %5404 = sbr.rel (%p5402) target = $region72
    $region71: #{netd_forward.1} parent=5 // pred_region
      %s5405 = ssub.s32 %s17, 2
      // Predicated region
      $region73: #{netd_forward.1} parent=71 // pred_check
        %p5406 = pneg %p287
      $region74: #{netd_forward.1} parent=71 // pred_check_branch
        %5408 = sbr.rel (%p5406) target = $region76
      $region75: #{netd_forward.1} parent=71 // pred_region
        %p5409 = scmp.lt.s32.totalorder %s23, 1
        %s5410 = scalar_select %p5409, %s23, 1
        %s5411 = scalar_lea.vmem %s11, %s5410
      $region76: #{netd_forward.1} parent=71 // pred_fallthru
        _
    $region72: #{netd_forward.1} parent=5 // pred_fallthru
      _
  $region6: #{netd_forward.1} parent=0 // loop_footer
    %s21 = sadd.s32 1, %s17
  $region7: #{netd_forward.1} parent=0 // loop_footer_branch
    %16 = sbr.rel target = $region3
  $region8: #{netd_forward.1} parent=0 // loop_exit
    _

</llo_original>
